<compile_context>
chip_gen: v6e
topology: v6e:2x2x1
jax: 0.10.0
libtpu: 0.0.40
codegen_flags: <defaults>
</compile_context>

<pallas_src>
import jax
import jax.numpy as jnp
from jax.experimental import pallas as pl
from jax.experimental.pallas import tpu as pltpu


# ---------------------------------------------------------------------------
# Kernel 1: fused (upsample-folded) 3x3 conv + per-batch BN partial statistics.
# Grid = (N, H // TH); the r (row-tile) axis accumulates the stats outputs.
# ---------------------------------------------------------------------------
def _conv_up_kernel(xp_ref, w_ref, o_ref, sum_ref, sq_ref):
    # xp_ref : (1, H+2, W+2, Cin)   bf16, padded ORIGINAL-resolution input
    # w_ref  : (9*Cin, 4*Cout)      bf16, parity-folded weights
    # o_ref  : (1, TH, W, 4*Cout)   bf16, row tile of the conv output
    # sum_ref: (1, 1, 4*Cout)       f32, per-batch sum   (accumulated over r)
    # sq_ref : (1, 1, 4*Cout)       f32, per-batch sum of squares
    r = pl.program_id(1)
    th = o_ref.shape[1]
    wd = o_ref.shape[2]
    cin = xp_ref.shape[3]
    c4 = o_ref.shape[3]

    row0 = r * th
    if th % 8 == 0:
        row0 = pl.multiple_of(row0, 8)

    # im2col: 9 shifted (TH, W, Cin) taps concatenated along the channel axis.
    taps = []
    for sy in range(3):
        for sx in range(3):
            taps.append(xp_ref[0, pl.ds(row0 + sy, th), sx:sx + wd, :])
    patch = jnp.concatenate(taps, axis=-1).reshape(th * wd, 9 * cin)  # bf16

    # Single MXU matmul (K = 9*Cin), f32 accumulation.
    acc = jnp.dot(patch, w_ref[...], preferred_element_type=jnp.float32)

    o_ref[0] = acc.reshape(th, wd, c4).astype(o_ref.dtype)

    @pl.when(r == 0)
    def _():
        sum_ref[...] = jnp.zeros_like(sum_ref)
        sq_ref[...] = jnp.zeros_like(sq_ref)

    sum_ref[...] += jnp.sum(acc, axis=0)[None, None, :]
    sq_ref[...] += jnp.sum(acc * acc, axis=0)[None, None, :]


# ---------------------------------------------------------------------------
# Kernel 2: apply batch-norm (precomputed per-channel scale/shift) + ReLU.
# Writes in place over the conv buffer (input_output_aliases).
# ---------------------------------------------------------------------------
def _bn_relu_kernel(y_ref, scale_ref, shift_ref, o_ref):
    y = y_ref[0].astype(jnp.float32)
    s = scale_ref[...].reshape(1, 1, -1)
    t = shift_ref[...].reshape(1, 1, -1)
    o_ref[0] = jnp.maximum(y * s + t, 0.0).astype(o_ref.dtype)


def _pick_row_tile(h, w, cin, c4, budget_bytes=8 << 20):
    """Pick the largest row tile dividing h whose streamed blocks fit a budget."""
    # Rough per-row bytes: conv-out tile (bf16, double-buffered) + f32 acc
    # + im2col patch (bf16) + f32 temporaries.
    per_row = w * (c4 * (2 * 2 + 4) + 9 * cin * (2 + 4))
    max_rows = int(max(1, min(h, budget_bytes // max(per_row, 1))))
    t = max_rows
    while h % t:
        t -= 1
    return t
    # TODO(synk): for very large W*Cin also halo-tile the input rows/cols
    # (pl.Element / manual DMA) instead of keeping (H+2, W+2, Cin) resident.


# ---------------------------------------------------------------------------
# Wrapper: full up_conv forward pass.
# ---------------------------------------------------------------------------
@jax.jit
def up_conv_forward(x_nchw, w_oihw, bias, gamma, beta, eps=1e-5):
    del bias  # per-channel constant cancels exactly in training-mode BatchNorm
    n, cin, h, w = x_nchw.shape
    cout = w_oihw.shape[0]
    c4 = 4 * cout
    h2, w2 = 2 * h, 2 * w

    # NHWC, zero-pad by 1 at ORIGINAL resolution, bf16 for the MXU.
    x = jnp.transpose(x_nchw, (0, 2, 3, 1)).astype(jnp.bfloat16)
    xp = jnp.pad(x, ((0, 0), (1, 1), (1, 1), (0, 0)))

    # ---- fold the nearest-x2 upsample into the weights (tiny math) ---------
    # Row parity a=0 reads padded-original rows {i, i+1} with row kernels
    # {w[0], w[1]+w[2]}; a=1 reads {i+1, i+2} with {w[0]+w[1], w[2]} (same for
    # columns).  Scatter into 3x3 "padded-input" taps: sy = a+dy, sx = b+dx.
    w_hwio = jnp.transpose(w_oihw, (2, 3, 1, 0)).astype(jnp.float32)  # (3,3,Ci,Co)
    m = jnp.array([[[1., 0., 0.], [0., 1., 1.]],      # parity 0
                   [[1., 1., 0.], [0., 0., 1.]]],     # parity 1
                  dtype=jnp.float32)                  # (parity, tap, k)
    w_eff = jnp.einsum('adk,bel,klio->abdeio', m, m, w_hwio)  # (2,2,2,2,Ci,Co)
    w9 = jnp.zeros((3, 3, cin, 2, 2, cout), dtype=jnp.float32)
    for a in range(2):
        for b in range(2):
            for dy in range(2):
                for dx in range(2):
                    w9 = w9.at[a + dy, b + dx, :, a, b, :].set(w_eff[a, b, dy, dx])
    w_mat = w9.reshape(9 * cin, c4).astype(jnp.bfloat16)

    th = _pick_row_tile(h, w, cin, c4)
    rt = h // th

    # ---- Pallas kernel 1: conv (+ fused per-batch BN partial stats) --------
    conv, ssum, ssq = pl.pallas_call(
        _conv_up_kernel,
        out_shape=(jax.ShapeDtypeStruct((n, h, w, c4), jnp.bfloat16),
                   jax.ShapeDtypeStruct((n, 1, c4), jnp.float32),
                   jax.ShapeDtypeStruct((n, 1, c4), jnp.float32)),
        grid=(n, rt),
        in_specs=[
            pl.BlockSpec((1, h + 2, w + 2, cin), lambda i, r: (i, 0, 0, 0)),
            pl.BlockSpec((9 * cin, c4), lambda i, r: (0, 0)),
        ],
        out_specs=(
            pl.BlockSpec((1, th, w, c4), lambda i, r: (i, r, 0, 0)),
            pl.BlockSpec((1, 1, c4), lambda i, r: (i, 0, 0)),
            pl.BlockSpec((1, 1, c4), lambda i, r: (i, 0, 0)),
        ),
        compiler_params=pltpu.CompilerParams(
            dimension_semantics=("parallel", "arbitrary"),
            vmem_limit_bytes=32 * 1024 * 1024),
    )(xp, w_mat)

    # ---- tiny (N, 4*Cout) partials -> per-channel batch stats in plain XLA --
    count = float(n * h2 * w2)
    s1 = jnp.sum(ssum.reshape(n, 4, cout), axis=(0, 1))
    s2 = jnp.sum(ssq.reshape(n, 4, cout), axis=(0, 1))
    mean = s1 / count
    var = s2 / count - mean * mean   # biased variance (training-mode BN)
    # TODO(synk): for very large N*H*W use a compensated/shifted variance to
    # avoid E[x^2] - mean^2 cancellation.
    scale = gamma.astype(jnp.float32) / jnp.sqrt(var + eps)
    shift = beta.astype(jnp.float32) - mean * scale
    scale4 = jnp.tile(scale, 4).reshape(1, c4)   # channel layout is (a, b, co)
    shift4 = jnp.tile(shift, 4).reshape(1, c4)

    # ---- Pallas kernel 2: normalize + ReLU (in place over the conv buffer) --
    y = pl.pallas_call(
        _bn_relu_kernel,
        out_shape=jax.ShapeDtypeStruct((n, h, w, c4), jnp.bfloat16),
        grid=(n, rt),
        in_specs=[
            pl.BlockSpec((1, th, w, c4), lambda i, r: (i, r, 0, 0)),
            pl.BlockSpec((1, c4), lambda i, r: (0, 0)),
            pl.BlockSpec((1, c4), lambda i, r: (0, 0)),
        ],
        out_specs=pl.BlockSpec((1, th, w, c4), lambda i, r: (i, r, 0, 0)),
        input_output_aliases={0: 0},
        compiler_params=pltpu.CompilerParams(
            dimension_semantics=("parallel", "parallel"),
            vmem_limit_bytes=32 * 1024 * 1024),
    )(conv, scale4, shift4)

    # (N, i, j, a, b, Cout) -> NCHW (N, Cout, 2H, 2W).  This single transpose
    # replaces the NHWC->NCHW transpose a non-fused version pays anyway.
    y = y.reshape(n, h, w, 2, 2, cout)
    out = jnp.transpose(y, (0, 5, 1, 3, 2, 4)).reshape(n, cout, h2, w2)
    return out.astype(jnp.float32)


# ---------------------------------------------------------------------------
# Pure-JAX reference (for a correctness sanity check).
# ---------------------------------------------------------------------------
def up_conv_reference(x_nchw, w_oihw, bias, gamma, beta, eps=1e-5):
    x = jnp.repeat(jnp.repeat(x_nchw, 2, axis=2), 2, axis=3)
    y = jax.lax.conv_general_dilated(
        x, w_oihw, window_strides=(1, 1), padding=((1, 1), (1, 1)),
        dimension_numbers=("NCHW", "OIHW", "NCHW"),
        precision=jax.lax.Precision.HIGHEST,
    ) + bias.reshape(1, -1, 1, 1)
    mean = jnp.mean(y, axis=(0, 2, 3), keepdims=True)
    var = jnp.mean((y - mean) ** 2, axis=(0, 2, 3), keepdims=True)
    yn = (y - mean) / jnp.sqrt(var + eps)
    yn = yn * gamma.reshape(1, -1, 1, 1) + beta.reshape(1, -1, 1, 1)
    return jnp.maximum(yn, 0.0)


if __name__ == "__main__":
    key = jax.random.PRNGKey(0)
    k_x, k_w, k_b = jax.random.split(key, 3)

    N, ch_in, H, W = 2, 4, 16, 16
    ch_out = 8

    x = jax.random.normal(k_x, (N, ch_in, H, W), dtype=jnp.float32)
    # Deterministic synthetic parameters (shapes match nn.Conv2d / nn.BatchNorm2d)
    w = 0.1 * jax.random.normal(k_w, (ch_out, ch_in, 3, 3), dtype=jnp.float32)
    b = 0.1 * jax.random.normal(k_b, (ch_out,), dtype=jnp.float32)
    gamma = jnp.ones((ch_out,), dtype=jnp.float32)   # BatchNorm2d weight init
    beta = jnp.zeros((ch_out,), dtype=jnp.float32)   # BatchNorm2d bias init

    out = up_conv_forward(x, w, b, gamma, beta)
    out = jax.block_until_ready(out)

    ref = up_conv_reference(x, w, b, gamma, beta)
    assert out.shape == (N, ch_out, 2 * H, 2 * W)
    # bf16 MXU inputs + bf16 HBM storage -> compare at bf16-level tolerance.
    err = float(jnp.max(jnp.abs(out - ref)))
    assert jnp.allclose(out, ref, atol=5e-2, rtol=5e-2), err

    print("KERNEL_OK")
</pallas_src>

<mosaic_0001>
module attributes {stable_mosaic.version = 11 : i64} {
  func.func @_conv_up_kernel(%arg0: i32, %arg1: i32, %arg2: memref<1x18x18x4xbf16, #tpu.memory_space<vmem>>, %arg3: memref<36x32xbf16, #tpu.memory_space<vmem>>, %arg4: memref<1x16x16x32xbf16, #tpu.memory_space<vmem>>, %arg5: memref<1x1x32xf32, #tpu.memory_space<vmem>>, %arg6: memref<1x1x32xf32, #tpu.memory_space<vmem>>) attributes {dimension_semantics = [#tpu.dimension_semantics<parallel>, #tpu.dimension_semantics<arbitrary>], iteration_bounds = array<i64: 2, 1>, scalar_prefetch = 0 : i64, scratch_operands = 0 : i64, tpu.core_type = #tpu.core_type<tc>, window_params = [{transform_indices = @transform_0, window_bounds = array<i64: 1, 18, 18, 4>}, {pipeline_mode = #tpu.pipeline_mode<synchronous>, transform_indices = @transform_1, window_bounds = array<i64: 36, 32>}, {transform_indices = @transform_2, window_bounds = array<i64: 1, 16, 16, 32>}, {transform_indices = @transform_3, window_bounds = array<i64: 1, 1, 32>}, {transform_indices = @transform_4, window_bounds = array<i64: 1, 1, 32>}]} {
    %c16_i32 = arith.constant 16 : i32
    %0 = arith.muli %arg1, %c16_i32 : i32
    %1 = tpu.assume_multiple %0, 8 : i32
    %c0_i32 = arith.constant 0 : i32
    %2 = arith.addi %1, %c0_i32 : i32
    %c0 = arith.constant 0 : index
    %3 = arith.index_cast %2 : i32 to index
    %c0_0 = arith.constant 0 : index
    %c0_1 = arith.constant 0 : index
    %4 = vector.load %arg2[%c0, %3, %c0_0, %c0_1] : memref<1x18x18x4xbf16, #tpu.memory_space<vmem>>, vector<1x16x16x4xbf16>
    %5 = vector.shape_cast %4 : vector<1x16x16x4xbf16> to vector<16x16x4xbf16>
    %c0_i32_2 = arith.constant 0 : i32
    %6 = arith.addi %1, %c0_i32_2 : i32
    %c0_3 = arith.constant 0 : index
    %7 = arith.index_cast %6 : i32 to index
    %c1 = arith.constant 1 : index
    %c0_4 = arith.constant 0 : index
    %8 = vector.load %arg2[%c0_3, %7, %c1, %c0_4] : memref<1x18x18x4xbf16, #tpu.memory_space<vmem>>, vector<1x16x16x4xbf16>
    %9 = vector.shape_cast %8 : vector<1x16x16x4xbf16> to vector<16x16x4xbf16>
    %c0_i32_5 = arith.constant 0 : i32
    %10 = arith.addi %1, %c0_i32_5 : i32
    %c0_6 = arith.constant 0 : index
    %11 = arith.index_cast %10 : i32 to index
    %c2 = arith.constant 2 : index
    %c0_7 = arith.constant 0 : index
    %12 = vector.load %arg2[%c0_6, %11, %c2, %c0_7] : memref<1x18x18x4xbf16, #tpu.memory_space<vmem>>, vector<1x16x16x4xbf16>
    %13 = vector.shape_cast %12 : vector<1x16x16x4xbf16> to vector<16x16x4xbf16>
    %c1_i32 = arith.constant 1 : i32
    %14 = arith.addi %1, %c1_i32 : i32
    %c0_8 = arith.constant 0 : index
    %15 = arith.index_cast %14 : i32 to index
    %c0_9 = arith.constant 0 : index
    %c0_10 = arith.constant 0 : index
    %16 = vector.load %arg2[%c0_8, %15, %c0_9, %c0_10] : memref<1x18x18x4xbf16, #tpu.memory_space<vmem>>, vector<1x16x16x4xbf16>
    %17 = vector.shape_cast %16 : vector<1x16x16x4xbf16> to vector<16x16x4xbf16>
    %c1_i32_11 = arith.constant 1 : i32
    %18 = arith.addi %1, %c1_i32_11 : i32
    %c0_12 = arith.constant 0 : index
    %19 = arith.index_cast %18 : i32 to index
    %c1_13 = arith.constant 1 : index
    %c0_14 = arith.constant 0 : index
    %20 = vector.load %arg2[%c0_12, %19, %c1_13, %c0_14] : memref<1x18x18x4xbf16, #tpu.memory_space<vmem>>, vector<1x16x16x4xbf16>
    %21 = vector.shape_cast %20 : vector<1x16x16x4xbf16> to vector<16x16x4xbf16>
    %c1_i32_15 = arith.constant 1 : i32
    %22 = arith.addi %1, %c1_i32_15 : i32
    %c0_16 = arith.constant 0 : index
    %23 = arith.index_cast %22 : i32 to index
    %c2_17 = arith.constant 2 : index
    %c0_18 = arith.constant 0 : index
    %24 = vector.load %arg2[%c0_16, %23, %c2_17, %c0_18] : memref<1x18x18x4xbf16, #tpu.memory_space<vmem>>, vector<1x16x16x4xbf16>
    %25 = vector.shape_cast %24 : vector<1x16x16x4xbf16> to vector<16x16x4xbf16>
    %c2_i32 = arith.constant 2 : i32
    %26 = arith.addi %1, %c2_i32 : i32
    %c0_19 = arith.constant 0 : index
    %27 = arith.index_cast %26 : i32 to index
    %c0_20 = arith.constant 0 : index
    %c0_21 = arith.constant 0 : index
    %28 = vector.load %arg2[%c0_19, %27, %c0_20, %c0_21] : memref<1x18x18x4xbf16, #tpu.memory_space<vmem>>, vector<1x16x16x4xbf16>
    %29 = vector.shape_cast %28 : vector<1x16x16x4xbf16> to vector<16x16x4xbf16>
    %c2_i32_22 = arith.constant 2 : i32
    %30 = arith.addi %1, %c2_i32_22 : i32
    %c0_23 = arith.constant 0 : index
    %31 = arith.index_cast %30 : i32 to index
    %c1_24 = arith.constant 1 : index
    %c0_25 = arith.constant 0 : index
    %32 = vector.load %arg2[%c0_23, %31, %c1_24, %c0_25] : memref<1x18x18x4xbf16, #tpu.memory_space<vmem>>, vector<1x16x16x4xbf16>
    %33 = vector.shape_cast %32 : vector<1x16x16x4xbf16> to vector<16x16x4xbf16>
    %c2_i32_26 = arith.constant 2 : i32
    %34 = arith.addi %1, %c2_i32_26 : i32
    %c0_27 = arith.constant 0 : index
    %35 = arith.index_cast %34 : i32 to index
    %c2_28 = arith.constant 2 : index
    %c0_29 = arith.constant 0 : index
    %36 = vector.load %arg2[%c0_27, %35, %c2_28, %c0_29] : memref<1x18x18x4xbf16, #tpu.memory_space<vmem>>, vector<1x16x16x4xbf16>
    %37 = vector.shape_cast %36 : vector<1x16x16x4xbf16> to vector<16x16x4xbf16>
    %38 = tpu.concatenate %5, %9, %13, %17, %21, %25, %29, %33, %37 in 2 : vector<16x16x4xbf16>, vector<16x16x4xbf16>, vector<16x16x4xbf16>, vector<16x16x4xbf16>, vector<16x16x4xbf16>, vector<16x16x4xbf16>, vector<16x16x4xbf16>, vector<16x16x4xbf16>, vector<16x16x4xbf16> -> vector<16x16x36xbf16>
    %39 = vector.shape_cast %38 : vector<16x16x36xbf16> to vector<256x36xbf16>
    %c0_30 = arith.constant 0 : index
    %c0_31 = arith.constant 0 : index
    %40 = vector.load %arg3[%c0_30, %c0_31] : memref<36x32xbf16, #tpu.memory_space<vmem>>, vector<36x32xbf16>
    %cst = arith.constant dense<0.000000e+00> : vector<256x32xf32>
    %41 = tpu.matmul %39, %40, %cst {dimension_numbers = #tpu.dot_dimension_numbers<[1], [0], [0], [1], [0, 0, 1, 1], [], []>} : vector<256x36xbf16>, vector<36x32xbf16>, vector<256x32xf32> -> vector<256x32xf32>
    %42 = vector.shape_cast %41 : vector<256x32xf32> to vector<16x16x32xf32>
    %43 = arith.truncf %42 : vector<16x16x32xf32> to vector<16x16x32xbf16>
    %c0_32 = arith.constant 0 : index
    %c0_33 = arith.constant 0 : index
    %c0_34 = arith.constant 0 : index
    %c0_35 = arith.constant 0 : index
    %44 = vector.load %arg4[%c0_32, %c0_33, %c0_34, %c0_35] : memref<1x16x16x32xbf16, #tpu.memory_space<vmem>>, vector<1x16x16x32xbf16>
    %45 = vector.shape_cast %44 : vector<1x16x16x32xbf16> to vector<16x16x32xbf16>
    %46 = vector.shape_cast %43 : vector<16x16x32xbf16> to vector<1x16x16x32xbf16>
    tpu.vector_store %arg4[%c0_32, %c0_33, %c0_34, %c0_35], %46 {strides = array<i32>} : memref<1x16x16x32xbf16, #tpu.memory_space<vmem>>, vector<1x16x16x32xbf16>,
    %c0_i32_36 = arith.constant 0 : i32
    %47 = arith.cmpi eq, %arg1, %c0_i32_36 : i32
    %48 = arith.extui %47 : i1 to i32
    %c0_i32_37 = arith.constant 0 : i32
    %49 = arith.cmpi ne, %48, %c0_i32_37 : i32
    scf.if %49 {
      %cst_52 = arith.constant 0.000000e+00 : f32
      %61 = vector.broadcast %cst_52 : f32 to vector<1x1x32xf32>
      %c0_53 = arith.constant 0 : index
      %c0_54 = arith.constant 0 : index
      %c0_55 = arith.constant 0 : index
      %62 = vector.load %arg5[%c0_53, %c0_54, %c0_55] : memref<1x1x32xf32, #tpu.memory_space<vmem>>, vector<1x1x32xf32>
      tpu.vector_store %arg5[%c0_53, %c0_54, %c0_55], %61 {strides = array<i32>} : memref<1x1x32xf32, #tpu.memory_space<vmem>>, vector<1x1x32xf32>,
      %cst_56 = arith.constant 0.000000e+00 : f32
      %63 = vector.broadcast %cst_56 : f32 to vector<1x1x32xf32>
      %c0_57 = arith.constant 0 : index
      %c0_58 = arith.constant 0 : index
      %c0_59 = arith.constant 0 : index
      %64 = vector.load %arg6[%c0_57, %c0_58, %c0_59] : memref<1x1x32xf32, #tpu.memory_space<vmem>>, vector<1x1x32xf32>
      tpu.vector_store %arg6[%c0_57, %c0_58, %c0_59], %63 {strides = array<i32>} : memref<1x1x32xf32, #tpu.memory_space<vmem>>, vector<1x1x32xf32>,
    } else {
    }
    %c0_38 = arith.constant 0 : index
    %c0_39 = arith.constant 0 : index
    %c0_40 = arith.constant 0 : index
    %50 = vector.load %arg5[%c0_38, %c0_39, %c0_40] : memref<1x1x32xf32, #tpu.memory_space<vmem>>, vector<1x1x32xf32>
    %cst_41 = arith.constant dense<0.000000e+00> : vector<32xf32>
    %51 = vector.multi_reduction <add>, %41, %cst_41 [0] : vector<256x32xf32> to vector<32xf32>
    %52 = vector.shape_cast %51 : vector<32xf32> to vector<1x1x32xf32>
    %53 = arith.addf %50, %52 : vector<1x1x32xf32>
    %c0_42 = arith.constant 0 : index
    %c0_43 = arith.constant 0 : index
    %c0_44 = arith.constant 0 : index
    %54 = vector.load %arg5[%c0_42, %c0_43, %c0_44] : memref<1x1x32xf32, #tpu.memory_space<vmem>>, vector<1x1x32xf32>
    tpu.vector_store %arg5[%c0_42, %c0_43, %c0_44], %53 {strides = array<i32>} : memref<1x1x32xf32, #tpu.memory_space<vmem>>, vector<1x1x32xf32>,
    %c0_45 = arith.constant 0 : index
    %c0_46 = arith.constant 0 : index
    %c0_47 = arith.constant 0 : index
    %55 = vector.load %arg6[%c0_45, %c0_46, %c0_47] : memref<1x1x32xf32, #tpu.memory_space<vmem>>, vector<1x1x32xf32>
    %56 = arith.mulf %41, %41 : vector<256x32xf32>
    %cst_48 = arith.constant dense<0.000000e+00> : vector<32xf32>
    %57 = vector.multi_reduction <add>, %56, %cst_48 [0] : vector<256x32xf32> to vector<32xf32>
    %58 = vector.shape_cast %57 : vector<32xf32> to vector<1x1x32xf32>
    %59 = arith.addf %55, %58 : vector<1x1x32xf32>
    %c0_49 = arith.constant 0 : index
    %c0_50 = arith.constant 0 : index
    %c0_51 = arith.constant 0 : index
    %60 = vector.load %arg6[%c0_49, %c0_50, %c0_51] : memref<1x1x32xf32, #tpu.memory_space<vmem>>, vector<1x1x32xf32>
    tpu.vector_store %arg6[%c0_49, %c0_50, %c0_51], %59 {strides = array<i32>} : memref<1x1x32xf32, #tpu.memory_space<vmem>>, vector<1x1x32xf32>,
    return
  }
  func.func @transform_0(%arg0: i32, %arg1: i32) -> (i32, i32, i32, i32) {
    %c0_i32 = arith.constant 0 : i32
    %c0_i32_0 = arith.constant 0 : i32
    %c0_i32_1 = arith.constant 0 : i32
    %c0_i32_2 = arith.constant 0 : i32
    return %arg0, %c0_i32, %c0_i32_0, %c0_i32_1 : i32, i32, i32, i32
  }
  func.func @transform_1(%arg0: i32, %arg1: i32) -> (i32, i32) {
    %c0_i32 = arith.constant 0 : i32
    %c0_i32_0 = arith.constant 0 : i32
    %c0_i32_1 = arith.constant 0 : i32
    return %c0_i32, %c0_i32_0 : i32, i32
  }
  func.func @transform_2(%arg0: i32, %arg1: i32) -> (i32, i32, i32, i32) {
    %c0_i32 = arith.constant 0 : i32
    %c0_i32_0 = arith.constant 0 : i32
    %c0_i32_1 = arith.constant 0 : i32
    return %arg0, %arg1, %c0_i32, %c0_i32_0 : i32, i32, i32, i32
  }
  func.func @transform_3(%arg0: i32, %arg1: i32) -> (i32, i32, i32) {
    %c0_i32 = arith.constant 0 : i32
    %c0_i32_0 = arith.constant 0 : i32
    %c0_i32_1 = arith.constant 0 : i32
    return %arg0, %c0_i32, %c0_i32_0 : i32, i32, i32
  }
  func.func @transform_4(%arg0: i32, %arg1: i32) -> (i32, i32, i32) {
    %c0_i32 = arith.constant 0 : i32
    %c0_i32_0 = arith.constant 0 : i32
    %c0_i32_1 = arith.constant 0 : i32
    return %arg0, %c0_i32, %c0_i32_0 : i32, i32, i32
  }
}

module attributes {stable_mosaic.version = 11 : i64} {
  func.func @_bn_relu_kernel(%arg0: i32, %arg1: i32, %arg2: memref<1x16x16x32xbf16, #tpu.memory_space<vmem>>, %arg3: memref<1x32xf32, #tpu.memory_space<vmem>>, %arg4: memref<1x32xf32, #tpu.memory_space<vmem>>, %arg5: memref<1x16x16x32xbf16, #tpu.memory_space<vmem>>) attributes {dimension_semantics = [#tpu.dimension_semantics<parallel>, #tpu.dimension_semantics<parallel>], iteration_bounds = array<i64: 2, 1>, scalar_prefetch = 0 : i64, scratch_operands = 0 : i64, tpu.core_type = #tpu.core_type<tc>, window_params = [{transform_indices = @transform_0, window_bounds = array<i64: 1, 16, 16, 32>}, {pipeline_mode = #tpu.pipeline_mode<synchronous>, transform_indices = @transform_1, window_bounds = array<i64: 1, 32>}, {pipeline_mode = #tpu.pipeline_mode<synchronous>, transform_indices = @transform_2, window_bounds = array<i64: 1, 32>}, {transform_indices = @transform_3, window_bounds = array<i64: 1, 16, 16, 32>}]} {
    %c0 = arith.constant 0 : index
    %c0_0 = arith.constant 0 : index
    %c0_1 = arith.constant 0 : index
    %c0_2 = arith.constant 0 : index
    %0 = vector.load %arg2[%c0, %c0_0, %c0_1, %c0_2] : memref<1x16x16x32xbf16, #tpu.memory_space<vmem>>, vector<1x16x16x32xbf16>
    %1 = vector.shape_cast %0 : vector<1x16x16x32xbf16> to vector<16x16x32xbf16>
    %2 = arith.extf %1 : vector<16x16x32xbf16> to vector<16x16x32xf32>
    %c0_3 = arith.constant 0 : index
    %c0_4 = arith.constant 0 : index
    %3 = vector.load %arg3[%c0_3, %c0_4] : memref<1x32xf32, #tpu.memory_space<vmem>>, vector<1x32xf32>
    %4 = vector.shape_cast %3 : vector<1x32xf32> to vector<1x1x32xf32>
    %c0_5 = arith.constant 0 : index
    %c0_6 = arith.constant 0 : index
    %5 = vector.load %arg4[%c0_5, %c0_6] : memref<1x32xf32, #tpu.memory_space<vmem>>, vector<1x32xf32>
    %6 = vector.shape_cast %5 : vector<1x32xf32> to vector<1x1x32xf32>
    %7 = vector.broadcast %4 : vector<1x1x32xf32> to vector<16x16x32xf32>
    %8 = arith.mulf %2, %7 : vector<16x16x32xf32>
    %9 = vector.broadcast %6 : vector<1x1x32xf32> to vector<16x16x32xf32>
    %10 = arith.addf %8, %9 : vector<16x16x32xf32>
    %cst = arith.constant 0.000000e+00 : f32
    %11 = vector.broadcast %cst : f32 to vector<16x16x32xf32>
    %12 = arith.maximumf %10, %11 : vector<16x16x32xf32>
    %13 = arith.truncf %12 : vector<16x16x32xf32> to vector<16x16x32xbf16>
    %c0_7 = arith.constant 0 : index
    %c0_8 = arith.constant 0 : index
    %c0_9 = arith.constant 0 : index
    %c0_10 = arith.constant 0 : index
    %14 = vector.load %arg5[%c0_7, %c0_8, %c0_9, %c0_10] : memref<1x16x16x32xbf16, #tpu.memory_space<vmem>>, vector<1x16x16x32xbf16>
    %15 = vector.shape_cast %14 : vector<1x16x16x32xbf16> to vector<16x16x32xbf16>
    %16 = vector.shape_cast %13 : vector<16x16x32xbf16> to vector<1x16x16x32xbf16>
    tpu.vector_store %arg5[%c0_7, %c0_8, %c0_9, %c0_10], %16 {strides = array<i32>} : memref<1x16x16x32xbf16, #tpu.memory_space<vmem>>, vector<1x16x16x32xbf16>,
    return
  }
  func.func @transform_0(%arg0: i32, %arg1: i32) -> (i32, i32, i32, i32) {
    %c0_i32 = arith.constant 0 : i32
    %c0_i32_0 = arith.constant 0 : i32
    %c0_i32_1 = arith.constant 0 : i32
    return %arg0, %arg1, %c0_i32, %c0_i32_0 : i32, i32, i32, i32
  }
  func.func @transform_1(%arg0: i32, %arg1: i32) -> (i32, i32) {
    %c0_i32 = arith.constant 0 : i32
    %c0_i32_0 = arith.constant 0 : i32
    %c0_i32_1 = arith.constant 0 : i32
    return %c0_i32, %c0_i32_0 : i32, i32
  }
  func.func @transform_2(%arg0: i32, %arg1: i32) -> (i32, i32) {
    %c0_i32 = arith.constant 0 : i32
    %c0_i32_0 = arith.constant 0 : i32
    %c0_i32_1 = arith.constant 0 : i32
    return %c0_i32, %c0_i32_0 : i32, i32
  }
  func.func @transform_3(%arg0: i32, %arg1: i32) -> (i32, i32, i32, i32) {
    %c0_i32 = arith.constant 0 : i32
    %c0_i32_0 = arith.constant 0 : i32
    %c0_i32_1 = arith.constant 0 : i32
    return %arg0, %arg1, %c0_i32, %c0_i32_0 : i32, i32, i32, i32
  }
}

</mosaic_0001>

<llo_original>
// kernel: tile.18
$region0: #{tile.18}
  #allocation0 [shape = 's32[1]{0}', space=sflag, size = 0x4, scoped, tag = 'scoped memory for tile.18']
  %s0 = inlined_call_operand.vmem [shape: f32[8], index: 0, kind: input, shape index: {}]
  %s1 = inlined_call_operand.vmem [shape: f32[4,8], index: 1, kind: output, shape index: {}]
  // Predicated region
  $region2: #{tile.18} parent=0 // pred_check
    _
  $region3: #{tile.18} parent=0 // pred_check_branch
    %3 = sbr.rel (0) target = $region5
  $region4: #{tile.18} parent=0 // pred_region
    _
  $region5: #{tile.18} parent=0 // pred_fallthru
    _
  %v4 = vld [vmem:[%s0] ss:$0 sm:$0xff]
  %5 = vst [vmem:[%s1] sm:$0xf] %v4

// kernel: tile.19
$region0: #{tile.19}
  %s0 = inlined_call_operand.vmem [shape: f32[4,8], index: 0, kind: input, shape index: {}]
  %s1 = inlined_call_operand.vmem [shape: f32[1,32], index: 1, kind: output, shape index: {}]
  $region1: #{tile.19} parent=0
    #allocation0 [shape = 'u8[4096]{0}', space=vmem, size = 0x1000, scoped, tag = 'scoped mem for output reshape']
    #allocation1 [shape = 'u8[4096]{0}', space=vmem, size = 0x1000, scoped, tag = 'scoped mem for input reshape']
    %s3 = sshll.u32 1, 4
    %s4 = ssub.s32 %s3, 1
    %v5 = vld [vmem:[%s0] sm:%s4]
    %6 = vst [vmem:[#allocation1] sm:%s4] %v5
    %v7 = vld [vmem:[#allocation1] sm:$0x1]
    %vm8 = vcmask 64512
    %9 = vst.msk [vmem:[#allocation0] sm:$0x1] %vm8, %v7
    %s10 = scalar_lea.vmem [#allocation1], 3
    %v11 = vld [vmem:[%s10] sm:$0x1]
    %12 = vrot.lane.b32.xlu0 %v11, 24
    %v13 = vpop.permute.xlu0 %12
    %vm14 = vcmask 261312
    %15 = vst.msk [vmem:[#allocation0] sm:$0x1] %vm14, %v13
    %s16 = scalar_lea.vmem [#allocation1], 2
    %v17 = vld [vmem:[%s16] sm:$0x1]
    %18 = vrot.lane.b32.xlu0 %v17, 16
    %v19 = vpop.permute.xlu0 %18
    %vm20 = vcmask 195712
    %21 = vst.msk [vmem:[#allocation0] sm:$0x1] %vm20, %v19
    %s22 = scalar_lea.vmem [#allocation1], 1
    %v23 = vld [vmem:[%s22] sm:$0x1]
    %24 = vrot.lane.b32.xlu0 %v23, 8
    %v25 = vpop.permute.xlu0 %24
    %vm26 = vcmask 130112
    %27 = vst.msk [vmem:[#allocation0] sm:$0x1] %vm26, %v25
    %s29 = sshll.u32 1, 1
    %s30 = ssub.s32 %s29, 1
    %v32 = vld [vmem:[#allocation0] sm:%s30]
    %s33 = sshll.u32 1, 1
    %s34 = ssub.s32 %s33, 1
    %35 = vst [vmem:[%s1] sm:%s34] %v32

// kernel: up_conv_forward.3
$region0: #{up_conv_forward.3}
  #allocation0 [shape = 'u32[]', space=smem, size = 0x4, offset = 0x4, fixed_abs, tag = 'smem constant byte address 0x4 - core index']
  #allocation1 [shape = 'u32[144,128]{1,0:T(1,128)}', space=vmem, size = 0x12000, scoped, tag = 'internal scratch']
  %s0 = inlined_call_operand.vmem [shape: bf16[2,16,16,32], index: 0, kind: input, shape index: {}, may-alias: {0,3}]
  %s1 = inlined_call_operand.vmem [shape: f32[1,32], index: 1, kind: input, shape index: {}]
  %s2 = inlined_call_operand.vmem [shape: f32[1,32], index: 2, kind: input, shape index: {}]
  %s3 = inlined_call_operand.vmem [shape: bf16[2,16,16,32], index: 3, kind: output, shape index: {}, may-alias: {0,3}]
  %s4 = sld [smem:[#allocation0]]
  $region45: #{up_conv_forward.3} parent=0
    _
  %s6 = ssub.s32 1, %s4
  %s7 = scalar_select 0, %s6, %s4
  loop: start=0, step=1, limit=4
  $region2: #{up_conv_forward.3} parent=0 // loop_pre_header
    _
  $region3: #{up_conv_forward.3} parent=0 // loop_header
    %s9 = sphi 0, %s13
    %p10 = scmp.ge.s32.totalorder %s9, 4
    %s16 = sphi 0, %s28
    %s17 = sphi 0, %s24
    %s18 = sphi 0, %s16
    %s19 = sphi 0, %s17
    %s20 = sphi 0, %s18
    %s21 = sphi 0, %s19
    %s33 = sphi 0, %s35
    %s36 = sphi 0, %s33
    %s37 = sphi 0, %s36
    %s53 = sphi 0, %s37
    %s57 = sphi 0, %s57
    %s59 = sphi 0, %s57
    %s60 = sphi 0, %s59
    %s74 = sphi 0, %s60
    %s78 = sphi 0, %s78
    %s80 = sphi 0, %s78
    %s81 = sphi 0, %s80
    %s95 = sphi 0, %s81
    %s103 = sphi 0, %s105
    %s106 = sphi 0, %s103
    %s107 = sphi 0, %s106
    %s123 = sphi 0, %s107
  $region4: #{up_conv_forward.3} parent=0 // loop_header_branch
    %12 = sbr.rel (%p10) target = $region8
  $region5: #{up_conv_forward.3} parent=0 // loop_body
    %s14 = ssub.s32 %s9, 1
    %s15 = ssub.s32 %s9, 2
    %s22 = sadd.s32 1, %s17
    %p23 = scmp.ge.s32.totalorder %s22, 1
    %s24 = scalar_select %p23, 0, %s22
    %s25 = sadd.s32 1, %s16
    %s26 = scalar_select %p23, %s25, %s16
    %p27 = scmp.ge.s32.totalorder %s26, 2
    %s28 = scalar_select %p27, 0, %s26
    %s29 = ssub.s32 %s16, %s28
    %s30 = ssub.s32 %s17, %s24
    %s31 = sor.u32 %s29, %s30
    %p32 = scmp.eq.s32.totalorder %s31, 0
    %s34 = sadd.s32 %s33, 1
    %s35 = scalar_select %p32, %s33, %s34
    %p38 = pneg %p32
    %p39 = scmp.eq.s32.totalorder %s9, 1
    %p40 = por %p38, %p39
    %p41 = scmp.ne.s32.totalorder %s33, %s36
    %p42 = scmp.eq.s32.totalorder %s9, 0
    %p43 = por %p41, %p42
    %p44 = scmp.ne.s32.totalorder %s33, %s36
    %p45 = scmp.eq.s32.totalorder %s14, 1
    %p46 = por %p44, %p45
    %p47 = scmp.ne.s32.totalorder %s36, %s37
    %p48 = scmp.eq.s32.totalorder %s14, 0
    %p49 = por %p47, %p48
    %p50 = scmp.ne.s32.totalorder %s36, %s37
    %p51 = scmp.eq.s32.totalorder %s15, 1
    %p52 = por %p50, %p51
    %p54 = scmp.ne.s32.totalorder %s37, %s53
    %p55 = scmp.eq.s32.totalorder %s15, 0
    %p56 = por %p54, %p55
    %s58 = sadd.s32 %s57, 1
    %p61 = scmp.eq.s32.totalorder %s9, 1
    %p62 = scmp.ne.s32.totalorder %s57, %s59
    %p63 = scmp.eq.s32.totalorder %s9, 0
    %p64 = por %p62, %p63
    %p65 = scmp.ne.s32.totalorder %s57, %s59
    %p66 = scmp.eq.s32.totalorder %s14, 1
    %p67 = por %p65, %p66
    %p68 = scmp.ne.s32.totalorder %s59, %s60
    %p69 = scmp.eq.s32.totalorder %s14, 0
    %p70 = por %p68, %p69
    %p71 = scmp.ne.s32.totalorder %s59, %s60
    %p72 = scmp.eq.s32.totalorder %s15, 1
    %p73 = por %p71, %p72
    %p75 = scmp.ne.s32.totalorder %s60, %s74
    %p76 = scmp.eq.s32.totalorder %s15, 0
    %p77 = por %p75, %p76
    %s79 = sadd.s32 %s78, 1
    %p82 = scmp.eq.s32.totalorder %s9, 1
    %p83 = scmp.ne.s32.totalorder %s78, %s80
    %p84 = scmp.eq.s32.totalorder %s9, 0
    %p85 = por %p83, %p84
    %p86 = scmp.ne.s32.totalorder %s78, %s80
    %p87 = scmp.eq.s32.totalorder %s14, 1
    %p88 = por %p86, %p87
    %p89 = scmp.ne.s32.totalorder %s80, %s81
    %p90 = scmp.eq.s32.totalorder %s14, 0
    %p91 = por %p89, %p90
    %p92 = scmp.ne.s32.totalorder %s80, %s81
    %p93 = scmp.eq.s32.totalorder %s15, 1
    %p94 = por %p92, %p93
    %p96 = scmp.ne.s32.totalorder %s81, %s95
    %p97 = scmp.eq.s32.totalorder %s15, 0
    %p98 = por %p96, %p97
    %s99 = ssub.s32 %s16, %s28
    %s100 = ssub.s32 %s17, %s24
    %s101 = sor.u32 %s99, %s100
    %p102 = scmp.eq.s32.totalorder %s101, 0
    %s104 = sadd.s32 %s103, 1
    %s105 = scalar_select %p102, %s103, %s104
    %p108 = pneg %p102
    %p109 = scmp.eq.s32.totalorder %s9, 1
    %p110 = por %p108, %p109
    %p111 = scmp.ne.s32.totalorder %s103, %s106
    %p112 = scmp.eq.s32.totalorder %s9, 0
    %p113 = por %p111, %p112
    %p114 = scmp.ne.s32.totalorder %s103, %s106
    %p115 = scmp.eq.s32.totalorder %s14, 1
    %p116 = por %p114, %p115
    %p117 = scmp.ne.s32.totalorder %s106, %s107
    %p118 = scmp.eq.s32.totalorder %s14, 0
    %p119 = por %p117, %p118
    %p120 = scmp.ne.s32.totalorder %s106, %s107
    %p121 = scmp.eq.s32.totalorder %s15, 1
    %p122 = por %p120, %p121
    %p124 = scmp.ne.s32.totalorder %s107, %s123
    %p125 = scmp.eq.s32.totalorder %s15, 0
    %p126 = por %p124, %p125
    %p127 = scmp.le.s32.totalorder 1, %s9
    %p128 = scmp.lt.s32.totalorder %s9, 3
    %p129 = pnand %p127, %p128
    %p130 = pneg %p129
    // Predicated region
    $region9: #{up_conv_forward.3} parent=5 // pred_check
      _
    $region10: #{up_conv_forward.3} parent=5 // pred_check_branch
      %132 = sbr.rel (%p129) target = $region12
    $region11: #{up_conv_forward.3} parent=5 // pred_region
      %s133 = ssub.s32 %s9, 1
      // Predicated region
      $region13: #{up_conv_forward.3} parent=11 // pred_check
        %p134 = pneg %p70
      $region14: #{up_conv_forward.3} parent=11 // pred_check_branch
        %136 = sbr.rel (%p134) target = $region16
      $region15: #{up_conv_forward.3} parent=11 // pred_region
        _
      $region16: #{up_conv_forward.3} parent=11 // pred_fallthru
        _
      // Predicated region
      $region17: #{up_conv_forward.3} parent=11 // pred_check
        %p137 = pneg %p91
      $region18: #{up_conv_forward.3} parent=11 // pred_check_branch
        %139 = sbr.rel (%p137) target = $region20
      $region19: #{up_conv_forward.3} parent=11 // pred_region
        _
      $region20: #{up_conv_forward.3} parent=11 // pred_fallthru
        _
    $region12: #{up_conv_forward.3} parent=5 // pred_fallthru
      _
    %p140 = scmp.lt.s32.totalorder %s9, 2
    // Predicated region
    $region21: #{up_conv_forward.3} parent=5 // pred_check
      %p141 = pneg %p140
    $region22: #{up_conv_forward.3} parent=5 // pred_check_branch
      %143 = sbr.rel (%p141) target = $region24
    $region23: #{up_conv_forward.3} parent=5 // pred_region
      // Predicated region
      $region25: #{up_conv_forward.3} parent=23 // pred_check
        %p144 = pneg %p43
      $region26: #{up_conv_forward.3} parent=23 // pred_check_branch
        %146 = sbr.rel (%p144) target = $region28
      $region27: #{up_conv_forward.3} parent=23 // pred_region
        %s147 = smul.u32 16, %s17
        %p148 = scmp.lt.s32.totalorder %s16, 1
        %s149 = scalar_select %p148, %s16, 1
        %p150 = scmp.lt.s32.totalorder %s147, 15
        %s151 = scalar_select %p150, %s147, 15
        %s152 = smul.addr %s151, 2
        %s153 = smul.addr %s149, 32
        %s154 = sadd.s32 %s152, %s153
        %s155 = smul.addr %s154, 4
        %s156 = scalar_lea.vmem %s0, %s155
        %s157 = smul.u32 16, %s17
      $region28: #{up_conv_forward.3} parent=23 // pred_fallthru
        _
    $region24: #{up_conv_forward.3} parent=5 // pred_fallthru
      _
    %p158 = scmp.le.s32.totalorder 1, %s9
    %p159 = scmp.lt.s32.totalorder %s9, 3
    %p160 = pnand %p158, %p159
    %p161 = pneg %p160
    // Predicated region
    $region29: #{up_conv_forward.3} parent=5 // pred_check
      _
    $region30: #{up_conv_forward.3} parent=5 // pred_check_branch
      %163 = sbr.rel (%p160) target = $region32
    $region31: #{up_conv_forward.3} parent=5 // pred_region
      %s164 = ssub.s32 %s9, 1
      %s165 = smul.u32 16, %s19
      %p166 = scmp.lt.s32.totalorder %s18, 1
      %s167 = scalar_select %p166, %s18, 1
      %p168 = scmp.lt.s32.totalorder %s165, 15
      %s169 = scalar_select %p168, %s165, 15
      %s170 = smul.addr %s169, 2
      %s171 = smul.addr %s167, 32
      %s172 = sadd.s32 %s170, %s171
      %s173 = smul.addr %s172, 4
      %s174 = scalar_lea.vmem %s0, %s173
      %p175 = pneg %p49
      %p176 = pneg %p46
      %p177 = pneg %p70
      %p178 = pneg %p67
      %p179 = pneg %p91
      %p180 = pneg %p88
      %p181 = pneg %p119
      %p182 = pneg %p116
      %s183 = smul.u32 16, %s19
      %p184 = scmp.lt.s32.totalorder %s18, 1
      %s185 = scalar_select %p184, %s18, 1
      %p186 = scmp.lt.s32.totalorder %s183, 15
      %s187 = scalar_select %p186, %s183, 15
      %s188 = smul.addr %s187, 2
      %s189 = smul.addr %s185, 32
      %s190 = sadd.s32 %s188, %s189
      %s191 = smul.addr %s190, 4
      %s192 = scalar_lea.vmem %s3, %s191
      %s193 = smul.u32 16, %s19
      %p194 = scmp.lt.s32.totalorder %s18, 1
      %s195 = scalar_select %p194, %s18, 1
      %p196 = scmp.lt.s32.totalorder %s193, 15
      %s197 = scalar_select %p196, %s193, 15
      %s198 = smul.addr %s197, 2
      %s199 = smul.addr %s195, 32
      %s200 = sadd.s32 %s198, %s199
      %s201 = smul.addr %s200, 4
      %s202 = scalar_lea.vmem %s0, %s201
      %s203 = smul.u32 16, %s19
      %s204 = smul.u32 16, %s19
      %p205 = scmp.lt.s32.totalorder %s18, 1
      %s206 = scalar_select %p205, %s18, 1
      %p207 = scmp.lt.s32.totalorder %s204, 15
      %s208 = scalar_select %p207, %s204, 15
      %s209 = smul.addr %s208, 2
      %s210 = smul.addr %s206, 32
      %s211 = sadd.s32 %s209, %s210
      %s212 = smul.addr %s211, 4
      %s213 = scalar_lea.vmem %s3, %s212
      %s214 = smul.u32 16, %s19
      %v215 = vld [vmem:[%s202] sm:$0xf]
      %v216 = vld [vmem:[%s202 + $0x4] sm:$0xf]
      %v217 = vld [vmem:[%s202 + $0x8] sm:$0xf]
      %v218 = vld [vmem:[%s202 + $0xc] sm:$0xf]
      %v219 = vld [vmem:[%s202 + $0x10] sm:$0xf]
      %v220 = vld [vmem:[%s202 + $0x14] sm:$0xf]
      %v221 = vld [vmem:[%s202 + $0x18] sm:$0xf]
      %v222 = vld [vmem:[%s202 + $0x1c] sm:$0xf]
      %v223 = vld [vmem:[%s202 + $0x20] sm:$0xf]
      %v224 = vld [vmem:[%s202 + $0x24] sm:$0xf]
      %v225 = vld [vmem:[%s202 + $0x28] sm:$0xf]
      %v226 = vld [vmem:[%s202 + $0x2c] sm:$0xf]
      %v227 = vld [vmem:[%s202 + $0x30] sm:$0xf]
      %v228 = vld [vmem:[%s202 + $0x34] sm:$0xf]
      %v229 = vld [vmem:[%s202 + $0x38] sm:$0xf]
      %v230 = vld [vmem:[%s202 + $0x3c] sm:$0xf]
      %v231 = vld [vmem:[%s202 + $0x40] sm:$0xf]
      %v232 = vld [vmem:[%s202 + $0x44] sm:$0xf]
      %v233 = vld [vmem:[%s202 + $0x48] sm:$0xf]
      %v234 = vld [vmem:[%s202 + $0x4c] sm:$0xf]
      %v235 = vld [vmem:[%s202 + $0x50] sm:$0xf]
      %v236 = vld [vmem:[%s202 + $0x54] sm:$0xf]
      %v237 = vld [vmem:[%s202 + $0x58] sm:$0xf]
      %v238 = vld [vmem:[%s202 + $0x5c] sm:$0xf]
      %v239 = vld [vmem:[%s202 + $0x60] sm:$0xf]
      %v240 = vld [vmem:[%s202 + $0x64] sm:$0xf]
      %v241 = vld [vmem:[%s202 + $0x68] sm:$0xf]
      %v242 = vld [vmem:[%s202 + $0x6c] sm:$0xf]
      %v243 = vld [vmem:[%s202 + $0x70] sm:$0xf]
      %v244 = vld [vmem:[%s202 + $0x74] sm:$0xf]
      %v245 = vld [vmem:[%s202 + $0x78] sm:$0xf]
      %v246 = vld [vmem:[%s202 + $0x7c] sm:$0xf]
      %v247 = vunpack.c.l.bf16 %v215
      %v248 = vunpack.c.l.bf16 %v216
      %v249 = vunpack.c.l.bf16 %v217
      %v250 = vunpack.c.l.bf16 %v218
      %v251 = vunpack.c.l.bf16 %v219
      %v252 = vunpack.c.l.bf16 %v220
      %v253 = vunpack.c.l.bf16 %v221
      %v254 = vunpack.c.l.bf16 %v222
      %v255 = vunpack.c.l.bf16 %v223
      %v256 = vunpack.c.l.bf16 %v224
      %v257 = vunpack.c.l.bf16 %v225
      %v258 = vunpack.c.l.bf16 %v226
      %v259 = vunpack.c.l.bf16 %v227
      %v260 = vunpack.c.l.bf16 %v228
      %v261 = vunpack.c.l.bf16 %v229
      %v262 = vunpack.c.l.bf16 %v230
      %v263 = vunpack.c.l.bf16 %v231
      %v264 = vunpack.c.l.bf16 %v232
      %v265 = vunpack.c.l.bf16 %v233
      %v266 = vunpack.c.l.bf16 %v234
      %v267 = vunpack.c.l.bf16 %v235
      %v268 = vunpack.c.l.bf16 %v236
      %v269 = vunpack.c.l.bf16 %v237
      %v270 = vunpack.c.l.bf16 %v238
      %v271 = vunpack.c.l.bf16 %v239
      %v272 = vunpack.c.l.bf16 %v240
      %v273 = vunpack.c.l.bf16 %v241
      %v274 = vunpack.c.l.bf16 %v242
      %v275 = vunpack.c.l.bf16 %v243
      %v276 = vunpack.c.l.bf16 %v244
      %v277 = vunpack.c.l.bf16 %v245
      %v278 = vunpack.c.l.bf16 %v246
      %v279 = vld [vmem:[%s1] sm:$0x1]
      %v280 = vld [vmem:[%s2] sm:$0x1]
      %v282 = vlaneseq
      %v283 = vshrl.u32 %v282, 7
      %v284 = vsub.s32 0, %v283
      %v285 = vrot.slane %v279, %v284
      %v287 = vmul.f32 %v247, %v285
      %v288 = vmul.f32 %v248, %v285
      %v289 = vmul.f32 %v249, %v285
      %v290 = vmul.f32 %v250, %v285
      %v291 = vmul.f32 %v251, %v285
      %v292 = vmul.f32 %v252, %v285
      %v293 = vmul.f32 %v253, %v285
      %v294 = vmul.f32 %v254, %v285
      %v295 = vmul.f32 %v255, %v285
      %v296 = vmul.f32 %v256, %v285
      %v297 = vmul.f32 %v257, %v285
      %v298 = vmul.f32 %v258, %v285
      %v299 = vmul.f32 %v259, %v285
      %v300 = vmul.f32 %v260, %v285
      %v301 = vmul.f32 %v261, %v285
      %v302 = vmul.f32 %v262, %v285
      %v303 = vmul.f32 %v263, %v285
      %v304 = vmul.f32 %v264, %v285
      %v305 = vmul.f32 %v265, %v285
      %v306 = vmul.f32 %v266, %v285
      %v307 = vmul.f32 %v267, %v285
      %v308 = vmul.f32 %v268, %v285
      %v309 = vmul.f32 %v269, %v285
      %v310 = vmul.f32 %v270, %v285
      %v311 = vmul.f32 %v271, %v285
      %v312 = vmul.f32 %v272, %v285
      %v313 = vmul.f32 %v273, %v285
      %v314 = vmul.f32 %v274, %v285
      %v315 = vmul.f32 %v275, %v285
      %v316 = vmul.f32 %v276, %v285
      %v317 = vmul.f32 %v277, %v285
      %v318 = vmul.f32 %v278, %v285
      %v320 = vlaneseq
      %v321 = vshrl.u32 %v320, 7
      %v322 = vsub.s32 0, %v321
      %v323 = vrot.slane %v280, %v322
      %v325 = vadd.f32 %v287, %v323
      %v326 = vadd.f32 %v288, %v323
      %v327 = vadd.f32 %v289, %v323
      %v328 = vadd.f32 %v290, %v323
      %v329 = vadd.f32 %v291, %v323
      %v330 = vadd.f32 %v292, %v323
      %v331 = vadd.f32 %v293, %v323
      %v332 = vadd.f32 %v294, %v323
      %v333 = vadd.f32 %v295, %v323
      %v334 = vadd.f32 %v296, %v323
      %v335 = vadd.f32 %v297, %v323
      %v336 = vadd.f32 %v298, %v323
      %v337 = vadd.f32 %v299, %v323
      %v338 = vadd.f32 %v300, %v323
      %v339 = vadd.f32 %v301, %v323
      %v340 = vadd.f32 %v302, %v323
      %v341 = vadd.f32 %v303, %v323
      %v342 = vadd.f32 %v304, %v323
      %v343 = vadd.f32 %v305, %v323
      %v344 = vadd.f32 %v306, %v323
      %v345 = vadd.f32 %v307, %v323
      %v346 = vadd.f32 %v308, %v323
      %v347 = vadd.f32 %v309, %v323
      %v348 = vadd.f32 %v310, %v323
      %v349 = vadd.f32 %v311, %v323
      %v350 = vadd.f32 %v312, %v323
      %v351 = vadd.f32 %v313, %v323
      %v352 = vadd.f32 %v314, %v323
      %v353 = vadd.f32 %v315, %v323
      %v354 = vadd.f32 %v316, %v323
      %v355 = vadd.f32 %v317, %v323
      %v356 = vadd.f32 %v318, %v323
      %v357 = vmax.f32 %v325, 0.0
      %v358 = vmax.f32 %v326, 0.0
      %v359 = vmax.f32 %v327, 0.0
      %v360 = vmax.f32 %v328, 0.0
      %v361 = vmax.f32 %v329, 0.0
      %v362 = vmax.f32 %v330, 0.0
      %v363 = vmax.f32 %v331, 0.0
      %v364 = vmax.f32 %v332, 0.0
      %v365 = vmax.f32 %v333, 0.0
      %v366 = vmax.f32 %v334, 0.0
      %v367 = vmax.f32 %v335, 0.0
      %v368 = vmax.f32 %v336, 0.0
      %v369 = vmax.f32 %v337, 0.0
      %v370 = vmax.f32 %v338, 0.0
      %v371 = vmax.f32 %v339, 0.0
      %v372 = vmax.f32 %v340, 0.0
      %v373 = vmax.f32 %v341, 0.0
      %v374 = vmax.f32 %v342, 0.0
      %v375 = vmax.f32 %v343, 0.0
      %v376 = vmax.f32 %v344, 0.0
      %v377 = vmax.f32 %v345, 0.0
      %v378 = vmax.f32 %v346, 0.0
      %v379 = vmax.f32 %v347, 0.0
      %v380 = vmax.f32 %v348, 0.0
      %v381 = vmax.f32 %v349, 0.0
      %v382 = vmax.f32 %v350, 0.0
      %v383 = vmax.f32 %v351, 0.0
      %v384 = vmax.f32 %v352, 0.0
      %v385 = vmax.f32 %v353, 0.0
      %v386 = vmax.f32 %v354, 0.0
      %v387 = vmax.f32 %v355, 0.0
      %v388 = vmax.f32 %v356, 0.0
      %v389 = vpack.c.bf16 %v358, %v357
      %v390 = vpack.c.bf16 %v360, %v359
      %v391 = vpack.c.bf16 %v362, %v361
      %v392 = vpack.c.bf16 %v364, %v363
      %v393 = vpack.c.bf16 %v366, %v365
      %v394 = vpack.c.bf16 %v368, %v367
      %v395 = vpack.c.bf16 %v370, %v369
      %v396 = vpack.c.bf16 %v372, %v371
      %v397 = vpack.c.bf16 %v374, %v373
      %v398 = vpack.c.bf16 %v376, %v375
      %v399 = vpack.c.bf16 %v378, %v377
      %v400 = vpack.c.bf16 %v380, %v379
      %v401 = vpack.c.bf16 %v382, %v381
      %v402 = vpack.c.bf16 %v384, %v383
      %v403 = vpack.c.bf16 %v386, %v385
      %v404 = vpack.c.bf16 %v388, %v387
      %v421 = vunpack.c.l.b16 %v389
      %v422 = vunpack.c.h.b16 %v389
      %v423 = vunpack.c.l.b16 %v390
      %v424 = vunpack.c.h.b16 %v390
      %v425 = vunpack.c.l.b16 %v391
      %v426 = vunpack.c.h.b16 %v391
      %v427 = vunpack.c.l.b16 %v392
      %v428 = vunpack.c.h.b16 %v392
      %v429 = vunpack.c.l.b16 %v393
      %v430 = vunpack.c.h.b16 %v393
      %v431 = vunpack.c.l.b16 %v394
      %v432 = vunpack.c.h.b16 %v394
      %v433 = vunpack.c.l.b16 %v395
      %v434 = vunpack.c.h.b16 %v395
      %v435 = vunpack.c.l.b16 %v396
      %v436 = vunpack.c.h.b16 %v396
      %v437 = vunpack.c.l.b16 %v397
      %v438 = vunpack.c.h.b16 %v397
      %v439 = vunpack.c.l.b16 %v398
      %v440 = vunpack.c.h.b16 %v398
      %v441 = vunpack.c.l.b16 %v399
      %v442 = vunpack.c.h.b16 %v399
      %v443 = vunpack.c.l.b16 %v400
      %v444 = vunpack.c.h.b16 %v400
      %v445 = vunpack.c.l.b16 %v401
      %v446 = vunpack.c.h.b16 %v401
      %v447 = vunpack.c.l.b16 %v402
      %v448 = vunpack.c.h.b16 %v402
      %v449 = vunpack.c.l.b16 %v403
      %v450 = vunpack.c.h.b16 %v403
      %v451 = vunpack.c.l.b16 %v404
      %v452 = vunpack.c.h.b16 %v404
      %v453 = vpack.c.b16 %v421, %v421
      %v454 = vpack.c.b16 %v422, %v422
      %v455 = vpack.c.b16 %v423, %v423
      %v456 = vpack.c.b16 %v424, %v424
      %v457 = vpack.c.b16 %v425, %v425
      %v458 = vpack.c.b16 %v426, %v426
      %v459 = vpack.c.b16 %v427, %v427
      %v460 = vpack.c.b16 %v428, %v428
      %v461 = vpack.c.b16 %v429, %v429
      %v462 = vpack.c.b16 %v430, %v430
      %v463 = vpack.c.b16 %v431, %v431
      %v464 = vpack.c.b16 %v432, %v432
      %v465 = vpack.c.b16 %v433, %v433
      %v466 = vpack.c.b16 %v434, %v434
      %v467 = vpack.c.b16 %v435, %v435
      %v468 = vpack.c.b16 %v436, %v436
      %v469 = vpack.c.b16 %v437, %v437
      %v470 = vpack.c.b16 %v438, %v438
      %v471 = vpack.c.b16 %v439, %v439
      %v472 = vpack.c.b16 %v440, %v440
      %v473 = vpack.c.b16 %v441, %v441
      %v474 = vpack.c.b16 %v442, %v442
      %v475 = vpack.c.b16 %v443, %v443
      %v476 = vpack.c.b16 %v444, %v444
      %v477 = vpack.c.b16 %v445, %v445
      %v478 = vpack.c.b16 %v446, %v446
      %v479 = vpack.c.b16 %v447, %v447
      %v480 = vpack.c.b16 %v448, %v448
      %v481 = vpack.c.b16 %v449, %v449
      %v482 = vpack.c.b16 %v450, %v450
      %v483 = vpack.c.b16 %v451, %v451
      %v484 = vpack.c.b16 %v452, %v452
      %vm517 = vcmask 257024
      %518 = vst.msk [vmem:[%s213] sm:$0xf] %vm517, %v453
      %519 = vst.msk [vmem:[%s213 + $0x4] sm:$0xf] %vm517, %v454
      %520 = vst.msk [vmem:[%s213 + $0x8] sm:$0xf] %vm517, %v455
      %521 = vst.msk [vmem:[%s213 + $0xc] sm:$0xf] %vm517, %v456
      %522 = vst.msk [vmem:[%s213 + $0x10] sm:$0xf] %vm517, %v457
      %523 = vst.msk [vmem:[%s213 + $0x14] sm:$0xf] %vm517, %v458
      %524 = vst.msk [vmem:[%s213 + $0x18] sm:$0xf] %vm517, %v459
      %525 = vst.msk [vmem:[%s213 + $0x1c] sm:$0xf] %vm517, %v460
      %526 = vst.msk [vmem:[%s213 + $0x20] sm:$0xf] %vm517, %v461
      %527 = vst.msk [vmem:[%s213 + $0x24] sm:$0xf] %vm517, %v462
      %528 = vst.msk [vmem:[%s213 + $0x28] sm:$0xf] %vm517, %v463
      %529 = vst.msk [vmem:[%s213 + $0x2c] sm:$0xf] %vm517, %v464
      %530 = vst.msk [vmem:[%s213 + $0x30] sm:$0xf] %vm517, %v465
      %531 = vst.msk [vmem:[%s213 + $0x34] sm:$0xf] %vm517, %v466
      %532 = vst.msk [vmem:[%s213 + $0x38] sm:$0xf] %vm517, %v467
      %533 = vst.msk [vmem:[%s213 + $0x3c] sm:$0xf] %vm517, %v468
      %534 = vst.msk [vmem:[%s213 + $0x40] sm:$0xf] %vm517, %v469
      %535 = vst.msk [vmem:[%s213 + $0x44] sm:$0xf] %vm517, %v470
      %536 = vst.msk [vmem:[%s213 + $0x48] sm:$0xf] %vm517, %v471
      %537 = vst.msk [vmem:[%s213 + $0x4c] sm:$0xf] %vm517, %v472
      %538 = vst.msk [vmem:[%s213 + $0x50] sm:$0xf] %vm517, %v473
      %539 = vst.msk [vmem:[%s213 + $0x54] sm:$0xf] %vm517, %v474
      %540 = vst.msk [vmem:[%s213 + $0x58] sm:$0xf] %vm517, %v475
      %541 = vst.msk [vmem:[%s213 + $0x5c] sm:$0xf] %vm517, %v476
      %542 = vst.msk [vmem:[%s213 + $0x60] sm:$0xf] %vm517, %v477
      %543 = vst.msk [vmem:[%s213 + $0x64] sm:$0xf] %vm517, %v478
      %544 = vst.msk [vmem:[%s213 + $0x68] sm:$0xf] %vm517, %v479
      %545 = vst.msk [vmem:[%s213 + $0x6c] sm:$0xf] %vm517, %v480
      %546 = vst.msk [vmem:[%s213 + $0x70] sm:$0xf] %vm517, %v481
      %547 = vst.msk [vmem:[%s213 + $0x74] sm:$0xf] %vm517, %v482
      %548 = vst.msk [vmem:[%s213 + $0x78] sm:$0xf] %vm517, %v483
      %549 = vst.msk [vmem:[%s213 + $0x7c] sm:$0xf] %vm517, %v484
      %s550 = smul.u32 16, %s19
      %p551 = scmp.lt.s32.totalorder %s18, 1
      %s552 = scalar_select %p551, %s18, 1
      %p553 = scmp.lt.s32.totalorder %s550, 15
      %s554 = scalar_select %p553, %s550, 15
      %s555 = smul.addr %s554, 2
      %s556 = smul.addr %s552, 32
      %s557 = sadd.s32 %s555, %s556
      %s558 = smul.addr %s557, 4
      %s559 = scalar_lea.vmem %s3, %s558
      // Predicated region
      $region33: #{up_conv_forward.3} parent=31 // pred_check
        %p560 = pneg %p116
      $region34: #{up_conv_forward.3} parent=31 // pred_check_branch
        %562 = sbr.rel (%p560) target = $region36
      $region35: #{up_conv_forward.3} parent=31 // pred_region
        %s563 = smul.u32 16, %s19
      $region36: #{up_conv_forward.3} parent=31 // pred_fallthru
        _
    $region32: #{up_conv_forward.3} parent=5 // pred_fallthru
      _
    %p564 = scmp.le.s32.totalorder 2, %s9
    // Predicated region
    $region37: #{up_conv_forward.3} parent=5 // pred_check
      %p565 = pneg %p564
    $region38: #{up_conv_forward.3} parent=5 // pred_check_branch
      %567 = sbr.rel (%p565) target = $region40
    $region39: #{up_conv_forward.3} parent=5 // pred_region
      %s568 = ssub.s32 %s9, 2
      // Predicated region
      $region41: #{up_conv_forward.3} parent=39 // pred_check
        %p569 = pneg %p122
      $region42: #{up_conv_forward.3} parent=39 // pred_check_branch
        %571 = sbr.rel (%p569) target = $region44
      $region43: #{up_conv_forward.3} parent=39 // pred_region
        %s572 = smul.u32 16, %s21
        %p573 = scmp.lt.s32.totalorder %s20, 1
        %s574 = scalar_select %p573, %s20, 1
        %p575 = scmp.lt.s32.totalorder %s572, 15
        %s576 = scalar_select %p575, %s572, 15
        %s577 = smul.addr %s576, 2
        %s578 = smul.addr %s574, 32
        %s579 = sadd.s32 %s577, %s578
        %s580 = smul.addr %s579, 4
        %s581 = scalar_lea.vmem %s3, %s580
      $region44: #{up_conv_forward.3} parent=39 // pred_fallthru
        _
    $region40: #{up_conv_forward.3} parent=5 // pred_fallthru
      _
  $region6: #{up_conv_forward.3} parent=0 // loop_footer
    %s13 = sadd.s32 1, %s9
  $region7: #{up_conv_forward.3} parent=0 // loop_footer_branch
    %8 = sbr.rel target = $region3
  $region8: #{up_conv_forward.3} parent=0 // loop_exit
    _

// kernel: up_conv_forward.2
$region0: #{up_conv_forward.2}
  #allocation0 [shape = 'u32[]', space=smem, size = 0x4, offset = 0x4, fixed_abs, tag = 'smem constant byte address 0x4 - core index']
  #allocation1 [shape = 'u32[144,128]{1,0:T(1,128)}', space=vmem, size = 0x12000, scoped, tag = 'internal scratch']
  %s0 = inlined_call_operand.vmem [shape: bf16[2,18,18,4], index: 0, kind: input, shape index: {}]
  %s1 = inlined_call_operand.vmem [shape: bf16[36,32], index: 1, kind: input, shape index: {}]
  %s2 = inlined_call_operand.vmem [shape: bf16[2,16,16,32], index: 2, kind: output, shape index: {0}]
  %s3 = inlined_call_operand.vmem [shape: f32[2,1,32], index: 3, kind: output, shape index: {1}]
  %s4 = inlined_call_operand.vmem [shape: f32[2,1,32], index: 4, kind: output, shape index: {2}]
  %5 = xla_tuple %s2, %s3, %s4
  %s6 = sld [smem:[#allocation0]]
  $region61: #{up_conv_forward.2} parent=0
    _
  %s8 = ssub.s32 1, %s6
  %s9 = scalar_select 0, %s8, %s6
  loop: start=0, step=1, limit=4
  $region2: #{up_conv_forward.2} parent=0 // loop_pre_header
    _
  $region3: #{up_conv_forward.2} parent=0 // loop_header
    %s11 = sphi 0, %s15
    %p12 = scmp.ge.s32.totalorder %s11, 4
    %s18 = sphi 0, %s30
    %s19 = sphi 0, %s26
    %s20 = sphi 0, %s18
    %s21 = sphi 0, %s19
    %s22 = sphi 0, %s20
    %s23 = sphi 0, %s21
    %s33 = sphi 0, %s35
    %s36 = sphi 0, %s33
    %s37 = sphi 0, %s36
    %s53 = sphi 0, %s37
    %s57 = sphi 0, %s57
    %s59 = sphi 0, %s57
    %s60 = sphi 0, %s59
    %s74 = sphi 0, %s60
    %s82 = sphi 0, %s84
    %s85 = sphi 0, %s82
    %s86 = sphi 0, %s85
    %s102 = sphi 0, %s86
    %s108 = sphi 0, %s110
    %s111 = sphi 0, %s108
    %s112 = sphi 0, %s111
    %s128 = sphi 0, %s112
    %s134 = sphi 0, %s136
    %s137 = sphi 0, %s134
    %s138 = sphi 0, %s137
    %s154 = sphi 0, %s138
  $region4: #{up_conv_forward.2} parent=0 // loop_header_branch
    %14 = sbr.rel (%p12) target = $region8
  $region5: #{up_conv_forward.2} parent=0 // loop_body
    %s16 = ssub.s32 %s11, 1
    %s17 = ssub.s32 %s11, 2
    %s24 = sadd.s32 1, %s19
    %p25 = scmp.ge.s32.totalorder %s24, 1
    %s26 = scalar_select %p25, 0, %s24
    %s27 = sadd.s32 1, %s18
    %s28 = scalar_select %p25, %s27, %s18
    %p29 = scmp.ge.s32.totalorder %s28, 2
    %s30 = scalar_select %p29, 0, %s28
    %s31 = ssub.s32 %s18, %s30
    %p32 = scmp.eq.s32.totalorder %s31, 0
    %s34 = sadd.s32 %s33, 1
    %s35 = scalar_select %p32, %s33, %s34
    %p38 = pneg %p32
    %p39 = scmp.eq.s32.totalorder %s11, 1
    %p40 = por %p38, %p39
    %p41 = scmp.ne.s32.totalorder %s33, %s36
    %p42 = scmp.eq.s32.totalorder %s11, 0
    %p43 = por %p41, %p42
    %p44 = scmp.ne.s32.totalorder %s33, %s36
    %p45 = scmp.eq.s32.totalorder %s16, 1
    %p46 = por %p44, %p45
    %p47 = scmp.ne.s32.totalorder %s36, %s37
    %p48 = scmp.eq.s32.totalorder %s16, 0
    %p49 = por %p47, %p48
    %p50 = scmp.ne.s32.totalorder %s36, %s37
    %p51 = scmp.eq.s32.totalorder %s17, 1
    %p52 = por %p50, %p51
    %p54 = scmp.ne.s32.totalorder %s37, %s53
    %p55 = scmp.eq.s32.totalorder %s17, 0
    %p56 = por %p54, %p55
    %s58 = sadd.s32 %s57, 1
    %p61 = scmp.eq.s32.totalorder %s11, 1
    %p62 = scmp.ne.s32.totalorder %s57, %s59
    %p63 = scmp.eq.s32.totalorder %s11, 0
    %p64 = por %p62, %p63
    %p65 = scmp.ne.s32.totalorder %s57, %s59
    %p66 = scmp.eq.s32.totalorder %s16, 1
    %p67 = por %p65, %p66
    %p68 = scmp.ne.s32.totalorder %s59, %s60
    %p69 = scmp.eq.s32.totalorder %s16, 0
    %p70 = por %p68, %p69
    %p71 = scmp.ne.s32.totalorder %s59, %s60
    %p72 = scmp.eq.s32.totalorder %s17, 1
    %p73 = por %p71, %p72
    %p75 = scmp.ne.s32.totalorder %s60, %s74
    %p76 = scmp.eq.s32.totalorder %s17, 0
    %p77 = por %p75, %p76
    %s78 = ssub.s32 %s18, %s30
    %s79 = ssub.s32 %s19, %s26
    %s80 = sor.u32 %s78, %s79
    %p81 = scmp.eq.s32.totalorder %s80, 0
    %s83 = sadd.s32 %s82, 1
    %s84 = scalar_select %p81, %s82, %s83
    %p87 = pneg %p81
    %p88 = scmp.eq.s32.totalorder %s11, 1
    %p89 = por %p87, %p88
    %p90 = scmp.ne.s32.totalorder %s82, %s85
    %p91 = scmp.eq.s32.totalorder %s11, 0
    %p92 = por %p90, %p91
    %p93 = scmp.ne.s32.totalorder %s82, %s85
    %p94 = scmp.eq.s32.totalorder %s16, 1
    %p95 = por %p93, %p94
    %p96 = scmp.ne.s32.totalorder %s85, %s86
    %p97 = scmp.eq.s32.totalorder %s16, 0
    %p98 = por %p96, %p97
    %p99 = scmp.ne.s32.totalorder %s85, %s86
    %p100 = scmp.eq.s32.totalorder %s17, 1
    %p101 = por %p99, %p100
    %p103 = scmp.ne.s32.totalorder %s86, %s102
    %p104 = scmp.eq.s32.totalorder %s17, 0
    %p105 = por %p103, %p104
    %s106 = ssub.s32 %s18, %s30
    %p107 = scmp.eq.s32.totalorder %s106, 0
    %s109 = sadd.s32 %s108, 1
    %s110 = scalar_select %p107, %s108, %s109
    %p113 = pneg %p107
    %p114 = scmp.eq.s32.totalorder %s11, 1
    %p115 = por %p113, %p114
    %p116 = scmp.ne.s32.totalorder %s108, %s111
    %p117 = scmp.eq.s32.totalorder %s11, 0
    %p118 = por %p116, %p117
    %p119 = scmp.ne.s32.totalorder %s108, %s111
    %p120 = scmp.eq.s32.totalorder %s16, 1
    %p121 = por %p119, %p120
    %p122 = scmp.ne.s32.totalorder %s111, %s112
    %p123 = scmp.eq.s32.totalorder %s16, 0
    %p124 = por %p122, %p123
    %p125 = scmp.ne.s32.totalorder %s111, %s112
    %p126 = scmp.eq.s32.totalorder %s17, 1
    %p127 = por %p125, %p126
    %p129 = scmp.ne.s32.totalorder %s112, %s128
    %p130 = scmp.eq.s32.totalorder %s17, 0
    %p131 = por %p129, %p130
    %s132 = ssub.s32 %s18, %s30
    %p133 = scmp.eq.s32.totalorder %s132, 0
    %s135 = sadd.s32 %s134, 1
    %s136 = scalar_select %p133, %s134, %s135
    %p139 = pneg %p133
    %p140 = scmp.eq.s32.totalorder %s11, 1
    %p141 = por %p139, %p140
    %p142 = scmp.ne.s32.totalorder %s134, %s137
    %p143 = scmp.eq.s32.totalorder %s11, 0
    %p144 = por %p142, %p143
    %p145 = scmp.ne.s32.totalorder %s134, %s137
    %p146 = scmp.eq.s32.totalorder %s16, 1
    %p147 = por %p145, %p146
    %p148 = scmp.ne.s32.totalorder %s137, %s138
    %p149 = scmp.eq.s32.totalorder %s16, 0
    %p150 = por %p148, %p149
    %p151 = scmp.ne.s32.totalorder %s137, %s138
    %p152 = scmp.eq.s32.totalorder %s17, 1
    %p153 = por %p151, %p152
    %p155 = scmp.ne.s32.totalorder %s138, %s154
    %p156 = scmp.eq.s32.totalorder %s17, 0
    %p157 = por %p155, %p156
    %p158 = scmp.le.s32.totalorder 1, %s11
    %p159 = scmp.lt.s32.totalorder %s11, 3
    %p160 = pnand %p158, %p159
    %p161 = pneg %p160
    // Predicated region
    $region9: #{up_conv_forward.2} parent=5 // pred_check
      _
    $region10: #{up_conv_forward.2} parent=5 // pred_check_branch
      %163 = sbr.rel (%p160) target = $region12
    $region11: #{up_conv_forward.2} parent=5 // pred_region
      %s164 = ssub.s32 %s11, 1
      // Predicated region
      $region13: #{up_conv_forward.2} parent=11 // pred_check
        %p165 = pneg %p70
      $region14: #{up_conv_forward.2} parent=11 // pred_check_branch
        %167 = sbr.rel (%p165) target = $region16
      $region15: #{up_conv_forward.2} parent=11 // pred_region
        _
      $region16: #{up_conv_forward.2} parent=11 // pred_fallthru
        _
    $region12: #{up_conv_forward.2} parent=5 // pred_fallthru
      _
    %p168 = scmp.lt.s32.totalorder %s11, 2
    // Predicated region
    $region17: #{up_conv_forward.2} parent=5 // pred_check
      %p169 = pneg %p168
    $region18: #{up_conv_forward.2} parent=5 // pred_check_branch
      %171 = sbr.rel (%p169) target = $region20
    $region19: #{up_conv_forward.2} parent=5 // pred_region
      // Predicated region
      $region21: #{up_conv_forward.2} parent=19 // pred_check
        %p172 = pneg %p43
      $region22: #{up_conv_forward.2} parent=19 // pred_check_branch
        %174 = sbr.rel (%p172) target = $region24
      $region23: #{up_conv_forward.2} parent=19 // pred_region
        %p175 = scmp.lt.s32.totalorder %s18, 1
        %s176 = scalar_select %p175, %s18, 1
        %s177 = smul.addr %s176, 54
        %s178 = smul.addr %s177, 4
        %s179 = scalar_lea.vmem %s0, %s178
      $region24: #{up_conv_forward.2} parent=19 // pred_fallthru
        _
    $region20: #{up_conv_forward.2} parent=5 // pred_fallthru
      _
    %p180 = scmp.le.s32.totalorder 1, %s11
    %p181 = scmp.lt.s32.totalorder %s11, 3
    %p182 = pnand %p180, %p181
    %p183 = pneg %p182
    // Predicated region
    $region25: #{up_conv_forward.2} parent=5 // pred_check
      _
    $region26: #{up_conv_forward.2} parent=5 // pred_check_branch
      %185 = sbr.rel (%p182) target = $region28
    $region27: #{up_conv_forward.2} parent=5 // pred_region
      %s186 = ssub.s32 %s11, 1
      %p187 = scmp.lt.s32.totalorder %s20, 1
      %s188 = scalar_select %p187, %s20, 1
      %s189 = smul.addr %s188, 54
      %s190 = smul.addr %s189, 4
      %s191 = scalar_lea.vmem %s0, %s190
      %p192 = pneg %p49
      %p193 = pneg %p46
      %p194 = pneg %p70
      %p195 = pneg %p67
      %p196 = pneg %p98
      %p197 = pneg %p95
      %s198 = smul.u32 16, %s21
      %p199 = scmp.lt.s32.totalorder %s20, 1
      %s200 = scalar_select %p199, %s20, 1
      %p201 = scmp.lt.s32.totalorder %s198, 15
      %s202 = scalar_select %p201, %s198, 15
      %s203 = smul.addr %s202, 2
      %s204 = smul.addr %s200, 32
      %s205 = sadd.s32 %s203, %s204
      %s206 = smul.addr %s205, 4
      %s207 = scalar_lea.vmem %s2, %s206
      %p208 = pneg %p124
      %p209 = pneg %p121
      %p210 = scmp.lt.s32.totalorder %s20, 1
      %s211 = scalar_select %p210, %s20, 1
      %s212 = scalar_lea.vmem %s3, %s211
      %p213 = pneg %p150
      %p214 = pneg %p147
      %p215 = scmp.lt.s32.totalorder %s20, 1
      %s216 = scalar_select %p215, %s20, 1
      %s217 = scalar_lea.vmem %s4, %s216
      %p218 = scmp.lt.s32.totalorder %s20, 1
      %s219 = scalar_select %p218, %s20, 1
      %s220 = smul.addr %s219, 54
      %s221 = smul.addr %s220, 4
      %s222 = scalar_lea.vmem %s0, %s221
      %s223 = smul.u32 16, %s21
      %p224 = scmp.lt.s32.totalorder %s20, 1
      %s225 = scalar_select %p224, %s20, 1
      %p226 = scmp.lt.s32.totalorder %s223, 15
      %s227 = scalar_select %p226, %s223, 15
      %s228 = smul.addr %s227, 2
      %s229 = smul.addr %s225, 32
      %s230 = sadd.s32 %s228, %s229
      %s231 = smul.addr %s230, 4
      %s232 = scalar_lea.vmem %s2, %s231
      %s233 = smul.u32 16, %s21
      %p234 = scmp.lt.s32.totalorder %s20, 1
      %s235 = scalar_select %p234, %s20, 1
      %s236 = scalar_lea.vmem %s3, %s235
      %p237 = scmp.lt.s32.totalorder %s20, 1
      %s238 = scalar_select %p237, %s20, 1
      %s239 = scalar_lea.vmem %s4, %s238
      %s241 = smul.u32 %s21, 16
      %s242 = smul.u32 %s241, 3
      %s243 = smul.addr %s242, 4
      %s244 = scalar_lea.vmem %s222, %s243
      %v245 = vld [vmem:[%s244] sm:$0xf]
      %v246 = vld [vmem:[%s244 + $0x4] sm:$0xf]
      %v247 = vld [vmem:[%s244 + $0xc] sm:$0xf]
      %v248 = vld [vmem:[%s244 + $0x10] sm:$0xf]
      %v249 = vld [vmem:[%s244 + $0x18] sm:$0xf]
      %v250 = vld [vmem:[%s244 + $0x1c] sm:$0xf]
      %v251 = vld [vmem:[%s244 + $0x24] sm:$0xf]
      %v252 = vld [vmem:[%s244 + $0x28] sm:$0xf]
      %v253 = vld [vmem:[%s244 + $0x30] sm:$0xf]
      %v254 = vld [vmem:[%s244 + $0x34] sm:$0xf]
      %v255 = vld [vmem:[%s244 + $0x3c] sm:$0xf]
      %v256 = vld [vmem:[%s244 + $0x40] sm:$0xf]
      %v257 = vld [vmem:[%s244 + $0x48] sm:$0xf]
      %v258 = vld [vmem:[%s244 + $0x4c] sm:$0xf]
      %v259 = vld [vmem:[%s244 + $0x54] sm:$0xf]
      %v260 = vld [vmem:[%s244 + $0x58] sm:$0xf]
      %v261 = vld [vmem:[%s244 + $0x60] sm:$0xf]
      %v262 = vld [vmem:[%s244 + $0x64] sm:$0xf]
      %v263 = vld [vmem:[%s244 + $0x6c] sm:$0xf]
      %v264 = vld [vmem:[%s244 + $0x70] sm:$0xf]
      %v265 = vld [vmem:[%s244 + $0x78] sm:$0xf]
      %v266 = vld [vmem:[%s244 + $0x7c] sm:$0xf]
      %v267 = vld [vmem:[%s244 + $0x84] sm:$0xf]
      %v268 = vld [vmem:[%s244 + $0x88] sm:$0xf]
      %v269 = vld [vmem:[%s244 + $0x90] sm:$0xf]
      %v270 = vld [vmem:[%s244 + $0x94] sm:$0xf]
      %v271 = vld [vmem:[%s244 + $0x9c] sm:$0xf]
      %v272 = vld [vmem:[%s244 + $0xa0] sm:$0xf]
      %v273 = vld [vmem:[%s244 + $0xa8] sm:$0xf]
      %v274 = vld [vmem:[%s244 + $0xac] sm:$0xf]
      %v275 = vld [vmem:[%s244 + $0xb4] sm:$0xf]
      %v276 = vld [vmem:[%s244 + $0xb8] sm:$0xf]
      %v277 = vld [vmem:[%s244 + $0x8] sm:$0x1]
      %v278 = vld [vmem:[%s244 + $0x14] sm:$0x1]
      %v279 = vld [vmem:[%s244 + $0x20] sm:$0x1]
      %v280 = vld [vmem:[%s244 + $0x2c] sm:$0x1]
      %v281 = vld [vmem:[%s244 + $0x38] sm:$0x1]
      %v282 = vld [vmem:[%s244 + $0x44] sm:$0x1]
      %v283 = vld [vmem:[%s244 + $0x50] sm:$0x1]
      %v284 = vld [vmem:[%s244 + $0x5c] sm:$0x1]
      %v285 = vld [vmem:[%s244 + $0x68] sm:$0x1]
      %v286 = vld [vmem:[%s244 + $0x74] sm:$0x1]
      %v287 = vld [vmem:[%s244 + $0x80] sm:$0x1]
      %v288 = vld [vmem:[%s244 + $0x8c] sm:$0x1]
      %v289 = vld [vmem:[%s244 + $0x98] sm:$0x1]
      %v290 = vld [vmem:[%s244 + $0xa4] sm:$0x1]
      %v291 = vld [vmem:[%s244 + $0xb0] sm:$0x1]
      %v292 = vld [vmem:[%s244 + $0xbc] sm:$0x1]
      %v293 = vld [vmem:[%s244] sm:$0xe]
      %v294 = vld [vmem:[%s244 + $0xc] sm:$0xe]
      %v295 = vld [vmem:[%s244 + $0x18] sm:$0xe]
      %v296 = vld [vmem:[%s244 + $0x24] sm:$0xe]
      %v297 = vld [vmem:[%s244 + $0x30] sm:$0xe]
      %v298 = vld [vmem:[%s244 + $0x3c] sm:$0xe]
      %v299 = vld [vmem:[%s244 + $0x48] sm:$0xe]
      %v300 = vld [vmem:[%s244 + $0x54] sm:$0xe]
      %v301 = vld [vmem:[%s244 + $0x60] sm:$0xe]
      %v302 = vld [vmem:[%s244 + $0x6c] sm:$0xe]
      %v303 = vld [vmem:[%s244 + $0x78] sm:$0xe]
      %v304 = vld [vmem:[%s244 + $0x84] sm:$0xe]
      %v305 = vld [vmem:[%s244 + $0x90] sm:$0xe]
      %v306 = vld [vmem:[%s244 + $0x9c] sm:$0xe]
      %v307 = vld [vmem:[%s244 + $0xa8] sm:$0xe]
      %v308 = vld [vmem:[%s244 + $0xb4] sm:$0xe]
      %s309 = sadd.s32 %s241, 1
      %s310 = smul.u32 %s309, 3
      %s311 = smul.addr %s310, 4
      %s312 = scalar_lea.vmem %s222, %s311
      %v313 = vld [vmem:[%s312] sm:$0xf]
      %v314 = vld [vmem:[%s312 + $0x4] sm:$0xf]
      %v315 = vld [vmem:[%s312 + $0xc] sm:$0xf]
      %v316 = vld [vmem:[%s312 + $0x10] sm:$0xf]
      %v317 = vld [vmem:[%s312 + $0x18] sm:$0xf]
      %v318 = vld [vmem:[%s312 + $0x1c] sm:$0xf]
      %v319 = vld [vmem:[%s312 + $0x24] sm:$0xf]
      %v320 = vld [vmem:[%s312 + $0x28] sm:$0xf]
      %v321 = vld [vmem:[%s312 + $0x30] sm:$0xf]
      %v322 = vld [vmem:[%s312 + $0x34] sm:$0xf]
      %v323 = vld [vmem:[%s312 + $0x3c] sm:$0xf]
      %v324 = vld [vmem:[%s312 + $0x40] sm:$0xf]
      %v325 = vld [vmem:[%s312 + $0x48] sm:$0xf]
      %v326 = vld [vmem:[%s312 + $0x4c] sm:$0xf]
      %v327 = vld [vmem:[%s312 + $0x54] sm:$0xf]
      %v328 = vld [vmem:[%s312 + $0x58] sm:$0xf]
      %v329 = vld [vmem:[%s312 + $0x60] sm:$0xf]
      %v330 = vld [vmem:[%s312 + $0x64] sm:$0xf]
      %v331 = vld [vmem:[%s312 + $0x6c] sm:$0xf]
      %v332 = vld [vmem:[%s312 + $0x70] sm:$0xf]
      %v333 = vld [vmem:[%s312 + $0x78] sm:$0xf]
      %v334 = vld [vmem:[%s312 + $0x7c] sm:$0xf]
      %v335 = vld [vmem:[%s312 + $0x84] sm:$0xf]
      %v336 = vld [vmem:[%s312 + $0x88] sm:$0xf]
      %v337 = vld [vmem:[%s312 + $0x90] sm:$0xf]
      %v338 = vld [vmem:[%s312 + $0x94] sm:$0xf]
      %v339 = vld [vmem:[%s312 + $0x9c] sm:$0xf]
      %v340 = vld [vmem:[%s312 + $0xa0] sm:$0xf]
      %v341 = vld [vmem:[%s312 + $0xa8] sm:$0xf]
      %v342 = vld [vmem:[%s312 + $0xac] sm:$0xf]
      %v343 = vld [vmem:[%s312 + $0xb4] sm:$0xf]
      %v344 = vld [vmem:[%s312 + $0xb8] sm:$0xf]
      %v345 = vld [vmem:[%s312 + $0x8] sm:$0x1]
      %v346 = vld [vmem:[%s312 + $0x14] sm:$0x1]
      %v347 = vld [vmem:[%s312 + $0x20] sm:$0x1]
      %v348 = vld [vmem:[%s312 + $0x2c] sm:$0x1]
      %v349 = vld [vmem:[%s312 + $0x38] sm:$0x1]
      %v350 = vld [vmem:[%s312 + $0x44] sm:$0x1]
      %v351 = vld [vmem:[%s312 + $0x50] sm:$0x1]
      %v352 = vld [vmem:[%s312 + $0x5c] sm:$0x1]
      %v353 = vld [vmem:[%s312 + $0x68] sm:$0x1]
      %v354 = vld [vmem:[%s312 + $0x74] sm:$0x1]
      %v355 = vld [vmem:[%s312 + $0x80] sm:$0x1]
      %v356 = vld [vmem:[%s312 + $0x8c] sm:$0x1]
      %v357 = vld [vmem:[%s312 + $0x98] sm:$0x1]
      %v358 = vld [vmem:[%s312 + $0xa4] sm:$0x1]
      %v359 = vld [vmem:[%s312 + $0xb0] sm:$0x1]
      %v360 = vld [vmem:[%s312 + $0xbc] sm:$0x1]
      %v361 = vld [vmem:[%s312] sm:$0xe]
      %v362 = vld [vmem:[%s312 + $0xc] sm:$0xe]
      %v363 = vld [vmem:[%s312 + $0x18] sm:$0xe]
      %v364 = vld [vmem:[%s312 + $0x24] sm:$0xe]
      %v365 = vld [vmem:[%s312 + $0x30] sm:$0xe]
      %v366 = vld [vmem:[%s312 + $0x3c] sm:$0xe]
      %v367 = vld [vmem:[%s312 + $0x48] sm:$0xe]
      %v368 = vld [vmem:[%s312 + $0x54] sm:$0xe]
      %v369 = vld [vmem:[%s312 + $0x60] sm:$0xe]
      %v370 = vld [vmem:[%s312 + $0x6c] sm:$0xe]
      %v371 = vld [vmem:[%s312 + $0x78] sm:$0xe]
      %v372 = vld [vmem:[%s312 + $0x84] sm:$0xe]
      %v373 = vld [vmem:[%s312 + $0x90] sm:$0xe]
      %v374 = vld [vmem:[%s312 + $0x9c] sm:$0xe]
      %v375 = vld [vmem:[%s312 + $0xa8] sm:$0xe]
      %v376 = vld [vmem:[%s312 + $0xb4] sm:$0xe]
      %s377 = sadd.s32 %s241, 2
      %s378 = smul.u32 %s377, 3
      %s379 = smul.addr %s378, 4
      %s380 = scalar_lea.vmem %s222, %s379
      %v381 = vld [vmem:[%s380] sm:$0xf]
      %v382 = vld [vmem:[%s380 + $0x4] sm:$0xf]
      %v383 = vld [vmem:[%s380 + $0xc] sm:$0xf]
      %v384 = vld [vmem:[%s380 + $0x10] sm:$0xf]
      %v385 = vld [vmem:[%s380 + $0x18] sm:$0xf]
      %v386 = vld [vmem:[%s380 + $0x1c] sm:$0xf]
      %v387 = vld [vmem:[%s380 + $0x24] sm:$0xf]
      %v388 = vld [vmem:[%s380 + $0x28] sm:$0xf]
      %v389 = vld [vmem:[%s380 + $0x30] sm:$0xf]
      %v390 = vld [vmem:[%s380 + $0x34] sm:$0xf]
      %v391 = vld [vmem:[%s380 + $0x3c] sm:$0xf]
      %v392 = vld [vmem:[%s380 + $0x40] sm:$0xf]
      %v393 = vld [vmem:[%s380 + $0x48] sm:$0xf]
      %v394 = vld [vmem:[%s380 + $0x4c] sm:$0xf]
      %v395 = vld [vmem:[%s380 + $0x54] sm:$0xf]
      %v396 = vld [vmem:[%s380 + $0x58] sm:$0xf]
      %v397 = vld [vmem:[%s380 + $0x60] sm:$0xf]
      %v398 = vld [vmem:[%s380 + $0x64] sm:$0xf]
      %v399 = vld [vmem:[%s380 + $0x6c] sm:$0xf]
      %v400 = vld [vmem:[%s380 + $0x70] sm:$0xf]
      %v401 = vld [vmem:[%s380 + $0x78] sm:$0xf]
      %v402 = vld [vmem:[%s380 + $0x7c] sm:$0xf]
      %v403 = vld [vmem:[%s380 + $0x84] sm:$0xf]
      %v404 = vld [vmem:[%s380 + $0x88] sm:$0xf]
      %v405 = vld [vmem:[%s380 + $0x90] sm:$0xf]
      %v406 = vld [vmem:[%s380 + $0x94] sm:$0xf]
      %v407 = vld [vmem:[%s380 + $0x9c] sm:$0xf]
      %v408 = vld [vmem:[%s380 + $0xa0] sm:$0xf]
      %v409 = vld [vmem:[%s380 + $0xa8] sm:$0xf]
      %v410 = vld [vmem:[%s380 + $0xac] sm:$0xf]
      %v411 = vld [vmem:[%s380 + $0xb4] sm:$0xf]
      %v412 = vld [vmem:[%s380 + $0xb8] sm:$0xf]
      %v413 = vld [vmem:[%s380 + $0x8] sm:$0x1]
      %v414 = vld [vmem:[%s380 + $0x14] sm:$0x1]
      %v415 = vld [vmem:[%s380 + $0x20] sm:$0x1]
      %v416 = vld [vmem:[%s380 + $0x2c] sm:$0x1]
      %v417 = vld [vmem:[%s380 + $0x38] sm:$0x1]
      %v418 = vld [vmem:[%s380 + $0x44] sm:$0x1]
      %v419 = vld [vmem:[%s380 + $0x50] sm:$0x1]
      %v420 = vld [vmem:[%s380 + $0x5c] sm:$0x1]
      %v421 = vld [vmem:[%s380 + $0x68] sm:$0x1]
      %v422 = vld [vmem:[%s380 + $0x74] sm:$0x1]
      %v423 = vld [vmem:[%s380 + $0x80] sm:$0x1]
      %v424 = vld [vmem:[%s380 + $0x8c] sm:$0x1]
      %v425 = vld [vmem:[%s380 + $0x98] sm:$0x1]
      %v426 = vld [vmem:[%s380 + $0xa4] sm:$0x1]
      %v427 = vld [vmem:[%s380 + $0xb0] sm:$0x1]
      %v428 = vld [vmem:[%s380 + $0xbc] sm:$0x1]
      %v429 = vld [vmem:[%s380] sm:$0xe]
      %v430 = vld [vmem:[%s380 + $0xc] sm:$0xe]
      %v431 = vld [vmem:[%s380 + $0x18] sm:$0xe]
      %v432 = vld [vmem:[%s380 + $0x24] sm:$0xe]
      %v433 = vld [vmem:[%s380 + $0x30] sm:$0xe]
      %v434 = vld [vmem:[%s380 + $0x3c] sm:$0xe]
      %v435 = vld [vmem:[%s380 + $0x48] sm:$0xe]
      %v436 = vld [vmem:[%s380 + $0x54] sm:$0xe]
      %v437 = vld [vmem:[%s380 + $0x60] sm:$0xe]
      %v438 = vld [vmem:[%s380 + $0x6c] sm:$0xe]
      %v439 = vld [vmem:[%s380 + $0x78] sm:$0xe]
      %v440 = vld [vmem:[%s380 + $0x84] sm:$0xe]
      %v441 = vld [vmem:[%s380 + $0x90] sm:$0xe]
      %v442 = vld [vmem:[%s380 + $0x9c] sm:$0xe]
      %v443 = vld [vmem:[%s380 + $0xa8] sm:$0xe]
      %v444 = vld [vmem:[%s380 + $0xb4] sm:$0xe]
      %v477 = vunpack.c.l.b16 %v245
      %v478 = vunpack.c.l.b16 %v246
      %v479 = vunpack.c.l.b16 %v247
      %v480 = vunpack.c.l.b16 %v248
      %v481 = vunpack.c.l.b16 %v249
      %v482 = vunpack.c.l.b16 %v250
      %v483 = vunpack.c.l.b16 %v251
      %v484 = vunpack.c.l.b16 %v252
      %v485 = vunpack.c.l.b16 %v253
      %v486 = vunpack.c.l.b16 %v254
      %v487 = vunpack.c.l.b16 %v255
      %v488 = vunpack.c.l.b16 %v256
      %v489 = vunpack.c.l.b16 %v257
      %v490 = vunpack.c.l.b16 %v258
      %v491 = vunpack.c.l.b16 %v259
      %v492 = vunpack.c.l.b16 %v260
      %v493 = vunpack.c.l.b16 %v261
      %v494 = vunpack.c.l.b16 %v262
      %v495 = vunpack.c.l.b16 %v263
      %v496 = vunpack.c.l.b16 %v264
      %v497 = vunpack.c.l.b16 %v265
      %v498 = vunpack.c.l.b16 %v266
      %v499 = vunpack.c.l.b16 %v267
      %v500 = vunpack.c.l.b16 %v268
      %v501 = vunpack.c.l.b16 %v269
      %v502 = vunpack.c.l.b16 %v270
      %v503 = vunpack.c.l.b16 %v271
      %v504 = vunpack.c.l.b16 %v272
      %v505 = vunpack.c.l.b16 %v273
      %v506 = vunpack.c.l.b16 %v274
      %v507 = vunpack.c.l.b16 %v275
      %v508 = vunpack.c.l.b16 %v276
      %v509 = vpack.c.b16 %v478, %v477
      %v510 = vpack.c.b16 %v480, %v479
      %v511 = vpack.c.b16 %v482, %v481
      %v512 = vpack.c.b16 %v484, %v483
      %v513 = vpack.c.b16 %v486, %v485
      %v514 = vpack.c.b16 %v488, %v487
      %v515 = vpack.c.b16 %v490, %v489
      %v516 = vpack.c.b16 %v492, %v491
      %v517 = vpack.c.b16 %v494, %v493
      %v518 = vpack.c.b16 %v496, %v495
      %v519 = vpack.c.b16 %v498, %v497
      %v520 = vpack.c.b16 %v500, %v499
      %v521 = vpack.c.b16 %v502, %v501
      %v522 = vpack.c.b16 %v504, %v503
      %v523 = vpack.c.b16 %v506, %v505
      %v524 = vpack.c.b16 %v508, %v507
      %v541 = vunpack.c.l.b16 %v277
      %v542 = vunpack.c.l.b16 %v278
      %v543 = vunpack.c.l.b16 %v279
      %v544 = vunpack.c.l.b16 %v280
      %v545 = vunpack.c.l.b16 %v281
      %v546 = vunpack.c.l.b16 %v282
      %v547 = vunpack.c.l.b16 %v283
      %v548 = vunpack.c.l.b16 %v284
      %v549 = vunpack.c.l.b16 %v285
      %v550 = vunpack.c.l.b16 %v286
      %v551 = vunpack.c.l.b16 %v287
      %v552 = vunpack.c.l.b16 %v288
      %v553 = vunpack.c.l.b16 %v289
      %v554 = vunpack.c.l.b16 %v290
      %v555 = vunpack.c.l.b16 %v291
      %v556 = vunpack.c.l.b16 %v292
      %v557 = vpack.c.b16 %v541, %v541
      %v558 = vpack.c.b16 %v542, %v542
      %v559 = vpack.c.b16 %v543, %v543
      %v560 = vpack.c.b16 %v544, %v544
      %v561 = vpack.c.b16 %v545, %v545
      %v562 = vpack.c.b16 %v546, %v546
      %v563 = vpack.c.b16 %v547, %v547
      %v564 = vpack.c.b16 %v548, %v548
      %v565 = vpack.c.b16 %v549, %v549
      %v566 = vpack.c.b16 %v550, %v550
      %v567 = vpack.c.b16 %v551, %v551
      %v568 = vpack.c.b16 %v552, %v552
      %v569 = vpack.c.b16 %v553, %v553
      %v570 = vpack.c.b16 %v554, %v554
      %v571 = vpack.c.b16 %v555, %v555
      %v572 = vpack.c.b16 %v556, %v556
      %vm573 = vsmask.f32 7424
      %v575 = vshrl.u32 %v509, 16
      %v577 = vshll.u32 %v509, 16
      %v579 = vrot.slane %v577, 1
      %v580 = vor.u32 %v575, %v579
      %v582 = vshll.u32 %v557, 16
      %v584 = vrot.slane %v582, 1
      %v585 = vsel %vm573, %v580, %v584
      %v587 = vshrl.u32 %v510, 16
      %v589 = vshll.u32 %v510, 16
      %v591 = vrot.slane %v589, 1
      %v592 = vor.u32 %v587, %v591
      %v594 = vshll.u32 %v558, 16
      %v596 = vrot.slane %v594, 1
      %v597 = vsel %vm573, %v592, %v596
      %v599 = vshrl.u32 %v511, 16
      %v601 = vshll.u32 %v511, 16
      %v603 = vrot.slane %v601, 1
      %v604 = vor.u32 %v599, %v603
      %v606 = vshll.u32 %v559, 16
      %v608 = vrot.slane %v606, 1
      %v609 = vsel %vm573, %v604, %v608
      %v611 = vshrl.u32 %v512, 16
      %v613 = vshll.u32 %v512, 16
      %v615 = vrot.slane %v613, 1
      %v616 = vor.u32 %v611, %v615
      %v618 = vshll.u32 %v560, 16
      %v620 = vrot.slane %v618, 1
      %v621 = vsel %vm573, %v616, %v620
      %v623 = vshrl.u32 %v513, 16
      %v625 = vshll.u32 %v513, 16
      %v627 = vrot.slane %v625, 1
      %v628 = vor.u32 %v623, %v627
      %v630 = vshll.u32 %v561, 16
      %v632 = vrot.slane %v630, 1
      %v633 = vsel %vm573, %v628, %v632
      %v635 = vshrl.u32 %v514, 16
      %v637 = vshll.u32 %v514, 16
      %v639 = vrot.slane %v637, 1
      %v640 = vor.u32 %v635, %v639
      %v642 = vshll.u32 %v562, 16
      %v644 = vrot.slane %v642, 1
      %v645 = vsel %vm573, %v640, %v644
      %v647 = vshrl.u32 %v515, 16
      %v649 = vshll.u32 %v515, 16
      %v651 = vrot.slane %v649, 1
      %v652 = vor.u32 %v647, %v651
      %v654 = vshll.u32 %v563, 16
      %v656 = vrot.slane %v654, 1
      %v657 = vsel %vm573, %v652, %v656
      %v659 = vshrl.u32 %v516, 16
      %v661 = vshll.u32 %v516, 16
      %v663 = vrot.slane %v661, 1
      %v664 = vor.u32 %v659, %v663
      %v666 = vshll.u32 %v564, 16
      %v668 = vrot.slane %v666, 1
      %v669 = vsel %vm573, %v664, %v668
      %v671 = vshrl.u32 %v517, 16
      %v673 = vshll.u32 %v517, 16
      %v675 = vrot.slane %v673, 1
      %v676 = vor.u32 %v671, %v675
      %v678 = vshll.u32 %v565, 16
      %v680 = vrot.slane %v678, 1
      %v681 = vsel %vm573, %v676, %v680
      %v683 = vshrl.u32 %v518, 16
      %v685 = vshll.u32 %v518, 16
      %v687 = vrot.slane %v685, 1
      %v688 = vor.u32 %v683, %v687
      %v690 = vshll.u32 %v566, 16
      %v692 = vrot.slane %v690, 1
      %v693 = vsel %vm573, %v688, %v692
      %v695 = vshrl.u32 %v519, 16
      %v697 = vshll.u32 %v519, 16
      %v699 = vrot.slane %v697, 1
      %v700 = vor.u32 %v695, %v699
      %v702 = vshll.u32 %v567, 16
      %v704 = vrot.slane %v702, 1
      %v705 = vsel %vm573, %v700, %v704
      %v707 = vshrl.u32 %v520, 16
      %v709 = vshll.u32 %v520, 16
      %v711 = vrot.slane %v709, 1
      %v712 = vor.u32 %v707, %v711
      %v714 = vshll.u32 %v568, 16
      %v716 = vrot.slane %v714, 1
      %v717 = vsel %vm573, %v712, %v716
      %v719 = vshrl.u32 %v521, 16
      %v721 = vshll.u32 %v521, 16
      %v723 = vrot.slane %v721, 1
      %v724 = vor.u32 %v719, %v723
      %v726 = vshll.u32 %v569, 16
      %v728 = vrot.slane %v726, 1
      %v729 = vsel %vm573, %v724, %v728
      %v731 = vshrl.u32 %v522, 16
      %v733 = vshll.u32 %v522, 16
      %v735 = vrot.slane %v733, 1
      %v736 = vor.u32 %v731, %v735
      %v738 = vshll.u32 %v570, 16
      %v740 = vrot.slane %v738, 1
      %v741 = vsel %vm573, %v736, %v740
      %v743 = vshrl.u32 %v523, 16
      %v745 = vshll.u32 %v523, 16
      %v747 = vrot.slane %v745, 1
      %v748 = vor.u32 %v743, %v747
      %v750 = vshll.u32 %v571, 16
      %v752 = vrot.slane %v750, 1
      %v753 = vsel %vm573, %v748, %v752
      %v755 = vshrl.u32 %v524, 16
      %v757 = vshll.u32 %v524, 16
      %v759 = vrot.slane %v757, 1
      %v760 = vor.u32 %v755, %v759
      %v762 = vshll.u32 %v572, 16
      %v764 = vrot.slane %v762, 1
      %v765 = vsel %vm573, %v760, %v764
      %766 = vrot.lane.b32.xlu0 %v585, 4
      %v767 = vpop.permute.xlu0 %766
      %768 = vrot.lane.b32.xlu0 %v597, 4
      %v769 = vpop.permute.xlu0 %768
      %770 = vrot.lane.b32.xlu0 %v609, 4
      %v771 = vpop.permute.xlu0 %770
      %772 = vrot.lane.b32.xlu0 %v621, 4
      %v773 = vpop.permute.xlu0 %772
      %774 = vrot.lane.b32.xlu0 %v633, 4
      %v775 = vpop.permute.xlu0 %774
      %776 = vrot.lane.b32.xlu0 %v645, 4
      %v777 = vpop.permute.xlu0 %776
      %778 = vrot.lane.b32.xlu0 %v657, 4
      %v779 = vpop.permute.xlu0 %778
      %780 = vrot.lane.b32.xlu0 %v669, 4
      %v781 = vpop.permute.xlu0 %780
      %782 = vrot.lane.b32.xlu0 %v681, 4
      %v783 = vpop.permute.xlu0 %782
      %784 = vrot.lane.b32.xlu0 %v693, 4
      %v785 = vpop.permute.xlu0 %784
      %786 = vrot.lane.b32.xlu0 %v705, 4
      %v787 = vpop.permute.xlu0 %786
      %788 = vrot.lane.b32.xlu0 %v717, 4
      %v789 = vpop.permute.xlu0 %788
      %790 = vrot.lane.b32.xlu0 %v729, 4
      %v791 = vpop.permute.xlu0 %790
      %792 = vrot.lane.b32.xlu0 %v741, 4
      %v793 = vpop.permute.xlu0 %792
      %794 = vrot.lane.b32.xlu0 %v753, 4
      %v795 = vpop.permute.xlu0 %794
      %796 = vrot.lane.b32.xlu0 %v765, 4
      %v797 = vpop.permute.xlu0 %796
      %v814 = vunpack.c.l.b16 %v293
      %v815 = vunpack.c.l.b16 %v294
      %v816 = vunpack.c.l.b16 %v295
      %v817 = vunpack.c.l.b16 %v296
      %v818 = vunpack.c.l.b16 %v297
      %v819 = vunpack.c.l.b16 %v298
      %v820 = vunpack.c.l.b16 %v299
      %v821 = vunpack.c.l.b16 %v300
      %v822 = vunpack.c.l.b16 %v301
      %v823 = vunpack.c.l.b16 %v302
      %v824 = vunpack.c.l.b16 %v303
      %v825 = vunpack.c.l.b16 %v304
      %v826 = vunpack.c.l.b16 %v305
      %v827 = vunpack.c.l.b16 %v306
      %v828 = vunpack.c.l.b16 %v307
      %v829 = vunpack.c.l.b16 %v308
      %v830 = vpack.c.b16 %v478, %v814
      %v831 = vpack.c.b16 %v480, %v815
      %v832 = vpack.c.b16 %v482, %v816
      %v833 = vpack.c.b16 %v484, %v817
      %v834 = vpack.c.b16 %v486, %v818
      %v835 = vpack.c.b16 %v488, %v819
      %v836 = vpack.c.b16 %v490, %v820
      %v837 = vpack.c.b16 %v492, %v821
      %v838 = vpack.c.b16 %v494, %v822
      %v839 = vpack.c.b16 %v496, %v823
      %v840 = vpack.c.b16 %v498, %v824
      %v841 = vpack.c.b16 %v500, %v825
      %v842 = vpack.c.b16 %v502, %v826
      %v843 = vpack.c.b16 %v504, %v827
      %v844 = vpack.c.b16 %v506, %v828
      %v845 = vpack.c.b16 %v508, %v829
      %vm846 = vcmask 1046528
      %v847 = vrot.slane %v830, 1
      %v848 = vrot.slane %v557, 1
      %v849 = vsel %vm846, %v847, %v848
      %v850 = vrot.slane %v831, 1
      %v851 = vrot.slane %v558, 1
      %v852 = vsel %vm846, %v850, %v851
      %v853 = vrot.slane %v832, 1
      %v854 = vrot.slane %v559, 1
      %v855 = vsel %vm846, %v853, %v854
      %v856 = vrot.slane %v833, 1
      %v857 = vrot.slane %v560, 1
      %v858 = vsel %vm846, %v856, %v857
      %v859 = vrot.slane %v834, 1
      %v860 = vrot.slane %v561, 1
      %v861 = vsel %vm846, %v859, %v860
      %v862 = vrot.slane %v835, 1
      %v863 = vrot.slane %v562, 1
      %v864 = vsel %vm846, %v862, %v863
      %v865 = vrot.slane %v836, 1
      %v866 = vrot.slane %v563, 1
      %v867 = vsel %vm846, %v865, %v866
      %v868 = vrot.slane %v837, 1
      %v869 = vrot.slane %v564, 1
      %v870 = vsel %vm846, %v868, %v869
      %v871 = vrot.slane %v838, 1
      %v872 = vrot.slane %v565, 1
      %v873 = vsel %vm846, %v871, %v872
      %v874 = vrot.slane %v839, 1
      %v875 = vrot.slane %v566, 1
      %v876 = vsel %vm846, %v874, %v875
      %v877 = vrot.slane %v840, 1
      %v878 = vrot.slane %v567, 1
      %v879 = vsel %vm846, %v877, %v878
      %v880 = vrot.slane %v841, 1
      %v881 = vrot.slane %v568, 1
      %v882 = vsel %vm846, %v880, %v881
      %v883 = vrot.slane %v842, 1
      %v884 = vrot.slane %v569, 1
      %v885 = vsel %vm846, %v883, %v884
      %v886 = vrot.slane %v843, 1
      %v887 = vrot.slane %v570, 1
      %v888 = vsel %vm846, %v886, %v887
      %v889 = vrot.slane %v844, 1
      %v890 = vrot.slane %v571, 1
      %v891 = vsel %vm846, %v889, %v890
      %v892 = vrot.slane %v845, 1
      %v893 = vrot.slane %v572, 1
      %v894 = vsel %vm846, %v892, %v893
      %895 = vrot.lane.b32.xlu0 %v849, 8
      %v896 = vpop.permute.xlu0 %895
      %897 = vrot.lane.b32.xlu0 %v852, 8
      %v898 = vpop.permute.xlu0 %897
      %899 = vrot.lane.b32.xlu0 %v855, 8
      %v900 = vpop.permute.xlu0 %899
      %901 = vrot.lane.b32.xlu0 %v858, 8
      %v902 = vpop.permute.xlu0 %901
      %903 = vrot.lane.b32.xlu0 %v861, 8
      %v904 = vpop.permute.xlu0 %903
      %905 = vrot.lane.b32.xlu0 %v864, 8
      %v906 = vpop.permute.xlu0 %905
      %907 = vrot.lane.b32.xlu0 %v867, 8
      %v908 = vpop.permute.xlu0 %907
      %909 = vrot.lane.b32.xlu0 %v870, 8
      %v910 = vpop.permute.xlu0 %909
      %911 = vrot.lane.b32.xlu0 %v873, 8
      %v912 = vpop.permute.xlu0 %911
      %913 = vrot.lane.b32.xlu0 %v876, 8
      %v914 = vpop.permute.xlu0 %913
      %915 = vrot.lane.b32.xlu0 %v879, 8
      %v916 = vpop.permute.xlu0 %915
      %917 = vrot.lane.b32.xlu0 %v882, 8
      %v918 = vpop.permute.xlu0 %917
      %919 = vrot.lane.b32.xlu0 %v885, 8
      %v920 = vpop.permute.xlu0 %919
      %921 = vrot.lane.b32.xlu0 %v888, 8
      %v922 = vpop.permute.xlu0 %921
      %923 = vrot.lane.b32.xlu0 %v891, 8
      %v924 = vpop.permute.xlu0 %923
      %925 = vrot.lane.b32.xlu0 %v894, 8
      %v926 = vpop.permute.xlu0 %925
      %v959 = vunpack.c.l.b16 %v313
      %v960 = vunpack.c.l.b16 %v314
      %v961 = vunpack.c.l.b16 %v315
      %v962 = vunpack.c.l.b16 %v316
      %v963 = vunpack.c.l.b16 %v317
      %v964 = vunpack.c.l.b16 %v318
      %v965 = vunpack.c.l.b16 %v319
      %v966 = vunpack.c.l.b16 %v320
      %v967 = vunpack.c.l.b16 %v321
      %v968 = vunpack.c.l.b16 %v322
      %v969 = vunpack.c.l.b16 %v323
      %v970 = vunpack.c.l.b16 %v324
      %v971 = vunpack.c.l.b16 %v325
      %v972 = vunpack.c.l.b16 %v326
      %v973 = vunpack.c.l.b16 %v327
      %v974 = vunpack.c.l.b16 %v328
      %v975 = vunpack.c.l.b16 %v329
      %v976 = vunpack.c.l.b16 %v330
      %v977 = vunpack.c.l.b16 %v331
      %v978 = vunpack.c.l.b16 %v332
      %v979 = vunpack.c.l.b16 %v333
      %v980 = vunpack.c.l.b16 %v334
      %v981 = vunpack.c.l.b16 %v335
      %v982 = vunpack.c.l.b16 %v336
      %v983 = vunpack.c.l.b16 %v337
      %v984 = vunpack.c.l.b16 %v338
      %v985 = vunpack.c.l.b16 %v339
      %v986 = vunpack.c.l.b16 %v340
      %v987 = vunpack.c.l.b16 %v341
      %v988 = vunpack.c.l.b16 %v342
      %v989 = vunpack.c.l.b16 %v343
      %v990 = vunpack.c.l.b16 %v344
      %v991 = vpack.c.b16 %v960, %v959
      %v992 = vpack.c.b16 %v962, %v961
      %v993 = vpack.c.b16 %v964, %v963
      %v994 = vpack.c.b16 %v966, %v965
      %v995 = vpack.c.b16 %v968, %v967
      %v996 = vpack.c.b16 %v970, %v969
      %v997 = vpack.c.b16 %v972, %v971
      %v998 = vpack.c.b16 %v974, %v973
      %v999 = vpack.c.b16 %v976, %v975
      %v1000 = vpack.c.b16 %v978, %v977
      %v1001 = vpack.c.b16 %v980, %v979
      %v1002 = vpack.c.b16 %v982, %v981
      %v1003 = vpack.c.b16 %v984, %v983
      %v1004 = vpack.c.b16 %v986, %v985
      %v1005 = vpack.c.b16 %v988, %v987
      %v1006 = vpack.c.b16 %v990, %v989
      %1007 = vrot.lane.b32.xlu0 %v991, 12
      %v1008 = vpop.permute.xlu0 %1007
      %1009 = vrot.lane.b32.xlu0 %v992, 12
      %v1010 = vpop.permute.xlu0 %1009
      %1011 = vrot.lane.b32.xlu0 %v993, 12
      %v1012 = vpop.permute.xlu0 %1011
      %1013 = vrot.lane.b32.xlu0 %v994, 12
      %v1014 = vpop.permute.xlu0 %1013
      %1015 = vrot.lane.b32.xlu0 %v995, 12
      %v1016 = vpop.permute.xlu0 %1015
      %1017 = vrot.lane.b32.xlu0 %v996, 12
      %v1018 = vpop.permute.xlu0 %1017
      %1019 = vrot.lane.b32.xlu0 %v997, 12
      %v1020 = vpop.permute.xlu0 %1019
      %1021 = vrot.lane.b32.xlu0 %v998, 12
      %v1022 = vpop.permute.xlu0 %1021
      %1023 = vrot.lane.b32.xlu0 %v999, 12
      %v1024 = vpop.permute.xlu0 %1023
      %1025 = vrot.lane.b32.xlu0 %v1000, 12
      %v1026 = vpop.permute.xlu0 %1025
      %1027 = vrot.lane.b32.xlu0 %v1001, 12
      %v1028 = vpop.permute.xlu0 %1027
      %1029 = vrot.lane.b32.xlu0 %v1002, 12
      %v1030 = vpop.permute.xlu0 %1029
      %1031 = vrot.lane.b32.xlu0 %v1003, 12
      %v1032 = vpop.permute.xlu0 %1031
      %1033 = vrot.lane.b32.xlu0 %v1004, 12
      %v1034 = vpop.permute.xlu0 %1033
      %1035 = vrot.lane.b32.xlu0 %v1005, 12
      %v1036 = vpop.permute.xlu0 %1035
      %1037 = vrot.lane.b32.xlu0 %v1006, 12
      %v1038 = vpop.permute.xlu0 %1037
      %v1055 = vunpack.c.l.b16 %v345
      %v1056 = vunpack.c.l.b16 %v346
      %v1057 = vunpack.c.l.b16 %v347
      %v1058 = vunpack.c.l.b16 %v348
      %v1059 = vunpack.c.l.b16 %v349
      %v1060 = vunpack.c.l.b16 %v350
      %v1061 = vunpack.c.l.b16 %v351
      %v1062 = vunpack.c.l.b16 %v352
      %v1063 = vunpack.c.l.b16 %v353
      %v1064 = vunpack.c.l.b16 %v354
      %v1065 = vunpack.c.l.b16 %v355
      %v1066 = vunpack.c.l.b16 %v356
      %v1067 = vunpack.c.l.b16 %v357
      %v1068 = vunpack.c.l.b16 %v358
      %v1069 = vunpack.c.l.b16 %v359
      %v1070 = vunpack.c.l.b16 %v360
      %v1071 = vpack.c.b16 %v1055, %v1055
      %v1072 = vpack.c.b16 %v1056, %v1056
      %v1073 = vpack.c.b16 %v1057, %v1057
      %v1074 = vpack.c.b16 %v1058, %v1058
      %v1075 = vpack.c.b16 %v1059, %v1059
      %v1076 = vpack.c.b16 %v1060, %v1060
      %v1077 = vpack.c.b16 %v1061, %v1061
      %v1078 = vpack.c.b16 %v1062, %v1062
      %v1079 = vpack.c.b16 %v1063, %v1063
      %v1080 = vpack.c.b16 %v1064, %v1064
      %v1081 = vpack.c.b16 %v1065, %v1065
      %v1082 = vpack.c.b16 %v1066, %v1066
      %v1083 = vpack.c.b16 %v1067, %v1067
      %v1084 = vpack.c.b16 %v1068, %v1068
      %v1085 = vpack.c.b16 %v1069, %v1069
      %v1086 = vpack.c.b16 %v1070, %v1070
      %v1088 = vshrl.u32 %v991, 16
      %v1090 = vshll.u32 %v991, 16
      %v1092 = vrot.slane %v1090, 1
      %v1093 = vor.u32 %v1088, %v1092
      %v1095 = vshll.u32 %v1071, 16
      %v1097 = vrot.slane %v1095, 1
      %v1098 = vsel %vm573, %v1093, %v1097
      %v1100 = vshrl.u32 %v992, 16
      %v1102 = vshll.u32 %v992, 16
      %v1104 = vrot.slane %v1102, 1
      %v1105 = vor.u32 %v1100, %v1104
      %v1107 = vshll.u32 %v1072, 16
      %v1109 = vrot.slane %v1107, 1
      %v1110 = vsel %vm573, %v1105, %v1109
      %v1112 = vshrl.u32 %v993, 16
      %v1114 = vshll.u32 %v993, 16
      %v1116 = vrot.slane %v1114, 1
      %v1117 = vor.u32 %v1112, %v1116
      %v1119 = vshll.u32 %v1073, 16
      %v1121 = vrot.slane %v1119, 1
      %v1122 = vsel %vm573, %v1117, %v1121
      %v1124 = vshrl.u32 %v994, 16
      %v1126 = vshll.u32 %v994, 16
      %v1128 = vrot.slane %v1126, 1
      %v1129 = vor.u32 %v1124, %v1128
      %v1131 = vshll.u32 %v1074, 16
      %v1133 = vrot.slane %v1131, 1
      %v1134 = vsel %vm573, %v1129, %v1133
      %v1136 = vshrl.u32 %v995, 16
      %v1138 = vshll.u32 %v995, 16
      %v1140 = vrot.slane %v1138, 1
      %v1141 = vor.u32 %v1136, %v1140
      %v1143 = vshll.u32 %v1075, 16
      %v1145 = vrot.slane %v1143, 1
      %v1146 = vsel %vm573, %v1141, %v1145
      %v1148 = vshrl.u32 %v996, 16
      %v1150 = vshll.u32 %v996, 16
      %v1152 = vrot.slane %v1150, 1
      %v1153 = vor.u32 %v1148, %v1152
      %v1155 = vshll.u32 %v1076, 16
      %v1157 = vrot.slane %v1155, 1
      %v1158 = vsel %vm573, %v1153, %v1157
      %v1160 = vshrl.u32 %v997, 16
      %v1162 = vshll.u32 %v997, 16
      %v1164 = vrot.slane %v1162, 1
      %v1165 = vor.u32 %v1160, %v1164
      %v1167 = vshll.u32 %v1077, 16
      %v1169 = vrot.slane %v1167, 1
      %v1170 = vsel %vm573, %v1165, %v1169
      %v1172 = vshrl.u32 %v998, 16
      %v1174 = vshll.u32 %v998, 16
      %v1176 = vrot.slane %v1174, 1
      %v1177 = vor.u32 %v1172, %v1176
      %v1179 = vshll.u32 %v1078, 16
      %v1181 = vrot.slane %v1179, 1
      %v1182 = vsel %vm573, %v1177, %v1181
      %v1184 = vshrl.u32 %v999, 16
      %v1186 = vshll.u32 %v999, 16
      %v1188 = vrot.slane %v1186, 1
      %v1189 = vor.u32 %v1184, %v1188
      %v1191 = vshll.u32 %v1079, 16
      %v1193 = vrot.slane %v1191, 1
      %v1194 = vsel %vm573, %v1189, %v1193
      %v1196 = vshrl.u32 %v1000, 16
      %v1198 = vshll.u32 %v1000, 16
      %v1200 = vrot.slane %v1198, 1
      %v1201 = vor.u32 %v1196, %v1200
      %v1203 = vshll.u32 %v1080, 16
      %v1205 = vrot.slane %v1203, 1
      %v1206 = vsel %vm573, %v1201, %v1205
      %v1208 = vshrl.u32 %v1001, 16
      %v1210 = vshll.u32 %v1001, 16
      %v1212 = vrot.slane %v1210, 1
      %v1213 = vor.u32 %v1208, %v1212
      %v1215 = vshll.u32 %v1081, 16
      %v1217 = vrot.slane %v1215, 1
      %v1218 = vsel %vm573, %v1213, %v1217
      %v1220 = vshrl.u32 %v1002, 16
      %v1222 = vshll.u32 %v1002, 16
      %v1224 = vrot.slane %v1222, 1
      %v1225 = vor.u32 %v1220, %v1224
      %v1227 = vshll.u32 %v1082, 16
      %v1229 = vrot.slane %v1227, 1
      %v1230 = vsel %vm573, %v1225, %v1229
      %v1232 = vshrl.u32 %v1003, 16
      %v1234 = vshll.u32 %v1003, 16
      %v1236 = vrot.slane %v1234, 1
      %v1237 = vor.u32 %v1232, %v1236
      %v1239 = vshll.u32 %v1083, 16
      %v1241 = vrot.slane %v1239, 1
      %v1242 = vsel %vm573, %v1237, %v1241
      %v1244 = vshrl.u32 %v1004, 16
      %v1246 = vshll.u32 %v1004, 16
      %v1248 = vrot.slane %v1246, 1
      %v1249 = vor.u32 %v1244, %v1248
      %v1251 = vshll.u32 %v1084, 16
      %v1253 = vrot.slane %v1251, 1
      %v1254 = vsel %vm573, %v1249, %v1253
      %v1256 = vshrl.u32 %v1005, 16
      %v1258 = vshll.u32 %v1005, 16
      %v1260 = vrot.slane %v1258, 1
      %v1261 = vor.u32 %v1256, %v1260
      %v1263 = vshll.u32 %v1085, 16
      %v1265 = vrot.slane %v1263, 1
      %v1266 = vsel %vm573, %v1261, %v1265
      %v1268 = vshrl.u32 %v1006, 16
      %v1270 = vshll.u32 %v1006, 16
      %v1272 = vrot.slane %v1270, 1
      %v1273 = vor.u32 %v1268, %v1272
      %v1275 = vshll.u32 %v1086, 16
      %v1277 = vrot.slane %v1275, 1
      %v1278 = vsel %vm573, %v1273, %v1277
      %1279 = vrot.lane.b32.xlu0 %v1098, 16
      %v1280 = vpop.permute.xlu0 %1279
      %1281 = vrot.lane.b32.xlu0 %v1110, 16
      %v1282 = vpop.permute.xlu0 %1281
      %1283 = vrot.lane.b32.xlu0 %v1122, 16
      %v1284 = vpop.permute.xlu0 %1283
      %1285 = vrot.lane.b32.xlu0 %v1134, 16
      %v1286 = vpop.permute.xlu0 %1285
      %1287 = vrot.lane.b32.xlu0 %v1146, 16
      %v1288 = vpop.permute.xlu0 %1287
      %1289 = vrot.lane.b32.xlu0 %v1158, 16
      %v1290 = vpop.permute.xlu0 %1289
      %1291 = vrot.lane.b32.xlu0 %v1170, 16
      %v1292 = vpop.permute.xlu0 %1291
      %1293 = vrot.lane.b32.xlu0 %v1182, 16
      %v1294 = vpop.permute.xlu0 %1293
      %1295 = vrot.lane.b32.xlu0 %v1194, 16
      %v1296 = vpop.permute.xlu0 %1295
      %1297 = vrot.lane.b32.xlu0 %v1206, 16
      %v1298 = vpop.permute.xlu0 %1297
      %1299 = vrot.lane.b32.xlu0 %v1218, 16
      %v1300 = vpop.permute.xlu0 %1299
      %1301 = vrot.lane.b32.xlu0 %v1230, 16
      %v1302 = vpop.permute.xlu0 %1301
      %1303 = vrot.lane.b32.xlu0 %v1242, 16
      %v1304 = vpop.permute.xlu0 %1303
      %1305 = vrot.lane.b32.xlu0 %v1254, 16
      %v1306 = vpop.permute.xlu0 %1305
      %1307 = vrot.lane.b32.xlu0 %v1266, 16
      %v1308 = vpop.permute.xlu0 %1307
      %1309 = vrot.lane.b32.xlu0 %v1278, 16
      %v1310 = vpop.permute.xlu0 %1309
      %v1327 = vunpack.c.l.b16 %v361
      %v1328 = vunpack.c.l.b16 %v362
      %v1329 = vunpack.c.l.b16 %v363
      %v1330 = vunpack.c.l.b16 %v364
      %v1331 = vunpack.c.l.b16 %v365
      %v1332 = vunpack.c.l.b16 %v366
      %v1333 = vunpack.c.l.b16 %v367
      %v1334 = vunpack.c.l.b16 %v368
      %v1335 = vunpack.c.l.b16 %v369
      %v1336 = vunpack.c.l.b16 %v370
      %v1337 = vunpack.c.l.b16 %v371
      %v1338 = vunpack.c.l.b16 %v372
      %v1339 = vunpack.c.l.b16 %v373
      %v1340 = vunpack.c.l.b16 %v374
      %v1341 = vunpack.c.l.b16 %v375
      %v1342 = vunpack.c.l.b16 %v376
      %v1343 = vpack.c.b16 %v960, %v1327
      %v1344 = vpack.c.b16 %v962, %v1328
      %v1345 = vpack.c.b16 %v964, %v1329
      %v1346 = vpack.c.b16 %v966, %v1330
      %v1347 = vpack.c.b16 %v968, %v1331
      %v1348 = vpack.c.b16 %v970, %v1332
      %v1349 = vpack.c.b16 %v972, %v1333
      %v1350 = vpack.c.b16 %v974, %v1334
      %v1351 = vpack.c.b16 %v976, %v1335
      %v1352 = vpack.c.b16 %v978, %v1336
      %v1353 = vpack.c.b16 %v980, %v1337
      %v1354 = vpack.c.b16 %v982, %v1338
      %v1355 = vpack.c.b16 %v984, %v1339
      %v1356 = vpack.c.b16 %v986, %v1340
      %v1357 = vpack.c.b16 %v988, %v1341
      %v1358 = vpack.c.b16 %v990, %v1342
      %v1359 = vrot.slane %v1343, 1
      %v1360 = vrot.slane %v1071, 1
      %v1361 = vsel %vm846, %v1359, %v1360
      %v1362 = vrot.slane %v1344, 1
      %v1363 = vrot.slane %v1072, 1
      %v1364 = vsel %vm846, %v1362, %v1363
      %v1365 = vrot.slane %v1345, 1
      %v1366 = vrot.slane %v1073, 1
      %v1367 = vsel %vm846, %v1365, %v1366
      %v1368 = vrot.slane %v1346, 1
      %v1369 = vrot.slane %v1074, 1
      %v1370 = vsel %vm846, %v1368, %v1369
      %v1371 = vrot.slane %v1347, 1
      %v1372 = vrot.slane %v1075, 1
      %v1373 = vsel %vm846, %v1371, %v1372
      %v1374 = vrot.slane %v1348, 1
      %v1375 = vrot.slane %v1076, 1
      %v1376 = vsel %vm846, %v1374, %v1375
      %v1377 = vrot.slane %v1349, 1
      %v1378 = vrot.slane %v1077, 1
      %v1379 = vsel %vm846, %v1377, %v1378
      %v1380 = vrot.slane %v1350, 1
      %v1381 = vrot.slane %v1078, 1
      %v1382 = vsel %vm846, %v1380, %v1381
      %v1383 = vrot.slane %v1351, 1
      %v1384 = vrot.slane %v1079, 1
      %v1385 = vsel %vm846, %v1383, %v1384
      %v1386 = vrot.slane %v1352, 1
      %v1387 = vrot.slane %v1080, 1
      %v1388 = vsel %vm846, %v1386, %v1387
      %v1389 = vrot.slane %v1353, 1
      %v1390 = vrot.slane %v1081, 1
      %v1391 = vsel %vm846, %v1389, %v1390
      %v1392 = vrot.slane %v1354, 1
      %v1393 = vrot.slane %v1082, 1
      %v1394 = vsel %vm846, %v1392, %v1393
      %v1395 = vrot.slane %v1355, 1
      %v1396 = vrot.slane %v1083, 1
      %v1397 = vsel %vm846, %v1395, %v1396
      %v1398 = vrot.slane %v1356, 1
      %v1399 = vrot.slane %v1084, 1
      %v1400 = vsel %vm846, %v1398, %v1399
      %v1401 = vrot.slane %v1357, 1
      %v1402 = vrot.slane %v1085, 1
      %v1403 = vsel %vm846, %v1401, %v1402
      %v1404 = vrot.slane %v1358, 1
      %v1405 = vrot.slane %v1086, 1
      %v1406 = vsel %vm846, %v1404, %v1405
      %1407 = vrot.lane.b32.xlu0 %v1361, 20
      %v1408 = vpop.permute.xlu0 %1407
      %1409 = vrot.lane.b32.xlu0 %v1364, 20
      %v1410 = vpop.permute.xlu0 %1409
      %1411 = vrot.lane.b32.xlu0 %v1367, 20
      %v1412 = vpop.permute.xlu0 %1411
      %1413 = vrot.lane.b32.xlu0 %v1370, 20
      %v1414 = vpop.permute.xlu0 %1413
      %1415 = vrot.lane.b32.xlu0 %v1373, 20
      %v1416 = vpop.permute.xlu0 %1415
      %1417 = vrot.lane.b32.xlu0 %v1376, 20
      %v1418 = vpop.permute.xlu0 %1417
      %1419 = vrot.lane.b32.xlu0 %v1379, 20
      %v1420 = vpop.permute.xlu0 %1419
      %1421 = vrot.lane.b32.xlu0 %v1382, 20
      %v1422 = vpop.permute.xlu0 %1421
      %1423 = vrot.lane.b32.xlu0 %v1385, 20
      %v1424 = vpop.permute.xlu0 %1423
      %1425 = vrot.lane.b32.xlu0 %v1388, 20
      %v1426 = vpop.permute.xlu0 %1425
      %1427 = vrot.lane.b32.xlu0 %v1391, 20
      %v1428 = vpop.permute.xlu0 %1427
      %1429 = vrot.lane.b32.xlu0 %v1394, 20
      %v1430 = vpop.permute.xlu0 %1429
      %1431 = vrot.lane.b32.xlu0 %v1397, 20
      %v1432 = vpop.permute.xlu0 %1431
      %1433 = vrot.lane.b32.xlu0 %v1400, 20
      %v1434 = vpop.permute.xlu0 %1433
      %1435 = vrot.lane.b32.xlu0 %v1403, 20
      %v1436 = vpop.permute.xlu0 %1435
      %1437 = vrot.lane.b32.xlu0 %v1406, 20
      %v1438 = vpop.permute.xlu0 %1437
      %v1471 = vunpack.c.l.b16 %v381
      %v1472 = vunpack.c.l.b16 %v382
      %v1473 = vunpack.c.l.b16 %v383
      %v1474 = vunpack.c.l.b16 %v384
      %v1475 = vunpack.c.l.b16 %v385
      %v1476 = vunpack.c.l.b16 %v386
      %v1477 = vunpack.c.l.b16 %v387
      %v1478 = vunpack.c.l.b16 %v388
      %v1479 = vunpack.c.l.b16 %v389
      %v1480 = vunpack.c.l.b16 %v390
      %v1481 = vunpack.c.l.b16 %v391
      %v1482 = vunpack.c.l.b16 %v392
      %v1483 = vunpack.c.l.b16 %v393
      %v1484 = vunpack.c.l.b16 %v394
      %v1485 = vunpack.c.l.b16 %v395
      %v1486 = vunpack.c.l.b16 %v396
      %v1487 = vunpack.c.l.b16 %v397
      %v1488 = vunpack.c.l.b16 %v398
      %v1489 = vunpack.c.l.b16 %v399
      %v1490 = vunpack.c.l.b16 %v400
      %v1491 = vunpack.c.l.b16 %v401
      %v1492 = vunpack.c.l.b16 %v402
      %v1493 = vunpack.c.l.b16 %v403
      %v1494 = vunpack.c.l.b16 %v404
      %v1495 = vunpack.c.l.b16 %v405
      %v1496 = vunpack.c.l.b16 %v406
      %v1497 = vunpack.c.l.b16 %v407
      %v1498 = vunpack.c.l.b16 %v408
      %v1499 = vunpack.c.l.b16 %v409
      %v1500 = vunpack.c.l.b16 %v410
      %v1501 = vunpack.c.l.b16 %v411
      %v1502 = vunpack.c.l.b16 %v412
      %v1503 = vpack.c.b16 %v1472, %v1471
      %v1504 = vpack.c.b16 %v1474, %v1473
      %v1505 = vpack.c.b16 %v1476, %v1475
      %v1506 = vpack.c.b16 %v1478, %v1477
      %v1507 = vpack.c.b16 %v1480, %v1479
      %v1508 = vpack.c.b16 %v1482, %v1481
      %v1509 = vpack.c.b16 %v1484, %v1483
      %v1510 = vpack.c.b16 %v1486, %v1485
      %v1511 = vpack.c.b16 %v1488, %v1487
      %v1512 = vpack.c.b16 %v1490, %v1489
      %v1513 = vpack.c.b16 %v1492, %v1491
      %v1514 = vpack.c.b16 %v1494, %v1493
      %v1515 = vpack.c.b16 %v1496, %v1495
      %v1516 = vpack.c.b16 %v1498, %v1497
      %v1517 = vpack.c.b16 %v1500, %v1499
      %v1518 = vpack.c.b16 %v1502, %v1501
      %1519 = vrot.lane.b32.xlu0 %v1503, 24
      %v1520 = vpop.permute.xlu0 %1519
      %1521 = vrot.lane.b32.xlu0 %v1504, 24
      %v1522 = vpop.permute.xlu0 %1521
      %1523 = vrot.lane.b32.xlu0 %v1505, 24
      %v1524 = vpop.permute.xlu0 %1523
      %1525 = vrot.lane.b32.xlu0 %v1506, 24
      %v1526 = vpop.permute.xlu0 %1525
      %1527 = vrot.lane.b32.xlu0 %v1507, 24
      %v1528 = vpop.permute.xlu0 %1527
      %1529 = vrot.lane.b32.xlu0 %v1508, 24
      %v1530 = vpop.permute.xlu0 %1529
      %1531 = vrot.lane.b32.xlu0 %v1509, 24
      %v1532 = vpop.permute.xlu0 %1531
      %1533 = vrot.lane.b32.xlu0 %v1510, 24
      %v1534 = vpop.permute.xlu0 %1533
      %1535 = vrot.lane.b32.xlu0 %v1511, 24
      %v1536 = vpop.permute.xlu0 %1535
      %1537 = vrot.lane.b32.xlu0 %v1512, 24
      %v1538 = vpop.permute.xlu0 %1537
      %1539 = vrot.lane.b32.xlu0 %v1513, 24
      %v1540 = vpop.permute.xlu0 %1539
      %1541 = vrot.lane.b32.xlu0 %v1514, 24
      %v1542 = vpop.permute.xlu0 %1541
      %1543 = vrot.lane.b32.xlu0 %v1515, 24
      %v1544 = vpop.permute.xlu0 %1543
      %1545 = vrot.lane.b32.xlu0 %v1516, 24
      %v1546 = vpop.permute.xlu0 %1545
      %1547 = vrot.lane.b32.xlu0 %v1517, 24
      %v1548 = vpop.permute.xlu0 %1547
      %1549 = vrot.lane.b32.xlu0 %v1518, 24
      %v1550 = vpop.permute.xlu0 %1549
      %v1567 = vunpack.c.l.b16 %v413
      %v1568 = vunpack.c.l.b16 %v414
      %v1569 = vunpack.c.l.b16 %v415
      %v1570 = vunpack.c.l.b16 %v416
      %v1571 = vunpack.c.l.b16 %v417
      %v1572 = vunpack.c.l.b16 %v418
      %v1573 = vunpack.c.l.b16 %v419
      %v1574 = vunpack.c.l.b16 %v420
      %v1575 = vunpack.c.l.b16 %v421
      %v1576 = vunpack.c.l.b16 %v422
      %v1577 = vunpack.c.l.b16 %v423
      %v1578 = vunpack.c.l.b16 %v424
      %v1579 = vunpack.c.l.b16 %v425
      %v1580 = vunpack.c.l.b16 %v426
      %v1581 = vunpack.c.l.b16 %v427
      %v1582 = vunpack.c.l.b16 %v428
      %v1583 = vpack.c.b16 %v1567, %v1567
      %v1584 = vpack.c.b16 %v1568, %v1568
      %v1585 = vpack.c.b16 %v1569, %v1569
      %v1586 = vpack.c.b16 %v1570, %v1570
      %v1587 = vpack.c.b16 %v1571, %v1571
      %v1588 = vpack.c.b16 %v1572, %v1572
      %v1589 = vpack.c.b16 %v1573, %v1573
      %v1590 = vpack.c.b16 %v1574, %v1574
      %v1591 = vpack.c.b16 %v1575, %v1575
      %v1592 = vpack.c.b16 %v1576, %v1576
      %v1593 = vpack.c.b16 %v1577, %v1577
      %v1594 = vpack.c.b16 %v1578, %v1578
      %v1595 = vpack.c.b16 %v1579, %v1579
      %v1596 = vpack.c.b16 %v1580, %v1580
      %v1597 = vpack.c.b16 %v1581, %v1581
      %v1598 = vpack.c.b16 %v1582, %v1582
      %v1600 = vshrl.u32 %v1503, 16
      %v1602 = vshll.u32 %v1503, 16
      %v1604 = vrot.slane %v1602, 1
      %v1605 = vor.u32 %v1600, %v1604
      %v1607 = vshll.u32 %v1583, 16
      %v1609 = vrot.slane %v1607, 1
      %v1610 = vsel %vm573, %v1605, %v1609
      %v1612 = vshrl.u32 %v1504, 16
      %v1614 = vshll.u32 %v1504, 16
      %v1616 = vrot.slane %v1614, 1
      %v1617 = vor.u32 %v1612, %v1616
      %v1619 = vshll.u32 %v1584, 16
      %v1621 = vrot.slane %v1619, 1
      %v1622 = vsel %vm573, %v1617, %v1621
      %v1624 = vshrl.u32 %v1505, 16
      %v1626 = vshll.u32 %v1505, 16
      %v1628 = vrot.slane %v1626, 1
      %v1629 = vor.u32 %v1624, %v1628
      %v1631 = vshll.u32 %v1585, 16
      %v1633 = vrot.slane %v1631, 1
      %v1634 = vsel %vm573, %v1629, %v1633
      %v1636 = vshrl.u32 %v1506, 16
      %v1638 = vshll.u32 %v1506, 16
      %v1640 = vrot.slane %v1638, 1
      %v1641 = vor.u32 %v1636, %v1640
      %v1643 = vshll.u32 %v1586, 16
      %v1645 = vrot.slane %v1643, 1
      %v1646 = vsel %vm573, %v1641, %v1645
      %v1648 = vshrl.u32 %v1507, 16
      %v1650 = vshll.u32 %v1507, 16
      %v1652 = vrot.slane %v1650, 1
      %v1653 = vor.u32 %v1648, %v1652
      %v1655 = vshll.u32 %v1587, 16
      %v1657 = vrot.slane %v1655, 1
      %v1658 = vsel %vm573, %v1653, %v1657
      %v1660 = vshrl.u32 %v1508, 16
      %v1662 = vshll.u32 %v1508, 16
      %v1664 = vrot.slane %v1662, 1
      %v1665 = vor.u32 %v1660, %v1664
      %v1667 = vshll.u32 %v1588, 16
      %v1669 = vrot.slane %v1667, 1
      %v1670 = vsel %vm573, %v1665, %v1669
      %v1672 = vshrl.u32 %v1509, 16
      %v1674 = vshll.u32 %v1509, 16
      %v1676 = vrot.slane %v1674, 1
      %v1677 = vor.u32 %v1672, %v1676
      %v1679 = vshll.u32 %v1589, 16
      %v1681 = vrot.slane %v1679, 1
      %v1682 = vsel %vm573, %v1677, %v1681
      %v1684 = vshrl.u32 %v1510, 16
      %v1686 = vshll.u32 %v1510, 16
      %v1688 = vrot.slane %v1686, 1
      %v1689 = vor.u32 %v1684, %v1688
      %v1691 = vshll.u32 %v1590, 16
      %v1693 = vrot.slane %v1691, 1
      %v1694 = vsel %vm573, %v1689, %v1693
      %v1696 = vshrl.u32 %v1511, 16
      %v1698 = vshll.u32 %v1511, 16
      %v1700 = vrot.slane %v1698, 1
      %v1701 = vor.u32 %v1696, %v1700
      %v1703 = vshll.u32 %v1591, 16
      %v1705 = vrot.slane %v1703, 1
      %v1706 = vsel %vm573, %v1701, %v1705
      %v1708 = vshrl.u32 %v1512, 16
      %v1710 = vshll.u32 %v1512, 16
      %v1712 = vrot.slane %v1710, 1
      %v1713 = vor.u32 %v1708, %v1712
      %v1715 = vshll.u32 %v1592, 16
      %v1717 = vrot.slane %v1715, 1
      %v1718 = vsel %vm573, %v1713, %v1717
      %v1720 = vshrl.u32 %v1513, 16
      %v1722 = vshll.u32 %v1513, 16
      %v1724 = vrot.slane %v1722, 1
      %v1725 = vor.u32 %v1720, %v1724
      %v1727 = vshll.u32 %v1593, 16
      %v1729 = vrot.slane %v1727, 1
      %v1730 = vsel %vm573, %v1725, %v1729
      %v1732 = vshrl.u32 %v1514, 16
      %v1734 = vshll.u32 %v1514, 16
      %v1736 = vrot.slane %v1734, 1
      %v1737 = vor.u32 %v1732, %v1736
      %v1739 = vshll.u32 %v1594, 16
      %v1741 = vrot.slane %v1739, 1
      %v1742 = vsel %vm573, %v1737, %v1741
      %v1744 = vshrl.u32 %v1515, 16
      %v1746 = vshll.u32 %v1515, 16
      %v1748 = vrot.slane %v1746, 1
      %v1749 = vor.u32 %v1744, %v1748
      %v1751 = vshll.u32 %v1595, 16
      %v1753 = vrot.slane %v1751, 1
      %v1754 = vsel %vm573, %v1749, %v1753
      %v1756 = vshrl.u32 %v1516, 16
      %v1758 = vshll.u32 %v1516, 16
      %v1760 = vrot.slane %v1758, 1
      %v1761 = vor.u32 %v1756, %v1760
      %v1763 = vshll.u32 %v1596, 16
      %v1765 = vrot.slane %v1763, 1
      %v1766 = vsel %vm573, %v1761, %v1765
      %v1768 = vshrl.u32 %v1517, 16
      %v1770 = vshll.u32 %v1517, 16
      %v1772 = vrot.slane %v1770, 1
      %v1773 = vor.u32 %v1768, %v1772
      %v1775 = vshll.u32 %v1597, 16
      %v1777 = vrot.slane %v1775, 1
      %v1778 = vsel %vm573, %v1773, %v1777
      %v1780 = vshrl.u32 %v1518, 16
      %v1782 = vshll.u32 %v1518, 16
      %v1784 = vrot.slane %v1782, 1
      %v1785 = vor.u32 %v1780, %v1784
      %v1787 = vshll.u32 %v1598, 16
      %v1789 = vrot.slane %v1787, 1
      %v1790 = vsel %vm573, %v1785, %v1789
      %1791 = vrot.lane.b32.xlu0 %v1610, 28
      %v1792 = vpop.permute.xlu0 %1791
      %1793 = vrot.lane.b32.xlu0 %v1622, 28
      %v1794 = vpop.permute.xlu0 %1793
      %1795 = vrot.lane.b32.xlu0 %v1634, 28
      %v1796 = vpop.permute.xlu0 %1795
      %1797 = vrot.lane.b32.xlu0 %v1646, 28
      %v1798 = vpop.permute.xlu0 %1797
      %1799 = vrot.lane.b32.xlu0 %v1658, 28
      %v1800 = vpop.permute.xlu0 %1799
      %1801 = vrot.lane.b32.xlu0 %v1670, 28
      %v1802 = vpop.permute.xlu0 %1801
      %1803 = vrot.lane.b32.xlu0 %v1682, 28
      %v1804 = vpop.permute.xlu0 %1803
      %1805 = vrot.lane.b32.xlu0 %v1694, 28
      %v1806 = vpop.permute.xlu0 %1805
      %1807 = vrot.lane.b32.xlu0 %v1706, 28
      %v1808 = vpop.permute.xlu0 %1807
      %1809 = vrot.lane.b32.xlu0 %v1718, 28
      %v1810 = vpop.permute.xlu0 %1809
      %1811 = vrot.lane.b32.xlu0 %v1730, 28
      %v1812 = vpop.permute.xlu0 %1811
      %1813 = vrot.lane.b32.xlu0 %v1742, 28
      %v1814 = vpop.permute.xlu0 %1813
      %1815 = vrot.lane.b32.xlu0 %v1754, 28
      %v1816 = vpop.permute.xlu0 %1815
      %1817 = vrot.lane.b32.xlu0 %v1766, 28
      %v1818 = vpop.permute.xlu0 %1817
      %1819 = vrot.lane.b32.xlu0 %v1778, 28
      %v1820 = vpop.permute.xlu0 %1819
      %1821 = vrot.lane.b32.xlu0 %v1790, 28
      %v1822 = vpop.permute.xlu0 %1821
      %v1839 = vunpack.c.l.b16 %v429
      %v1840 = vunpack.c.l.b16 %v430
      %v1841 = vunpack.c.l.b16 %v431
      %v1842 = vunpack.c.l.b16 %v432
      %v1843 = vunpack.c.l.b16 %v433
      %v1844 = vunpack.c.l.b16 %v434
      %v1845 = vunpack.c.l.b16 %v435
      %v1846 = vunpack.c.l.b16 %v436
      %v1847 = vunpack.c.l.b16 %v437
      %v1848 = vunpack.c.l.b16 %v438
      %v1849 = vunpack.c.l.b16 %v439
      %v1850 = vunpack.c.l.b16 %v440
      %v1851 = vunpack.c.l.b16 %v441
      %v1852 = vunpack.c.l.b16 %v442
      %v1853 = vunpack.c.l.b16 %v443
      %v1854 = vunpack.c.l.b16 %v444
      %v1855 = vpack.c.b16 %v1472, %v1839
      %v1856 = vpack.c.b16 %v1474, %v1840
      %v1857 = vpack.c.b16 %v1476, %v1841
      %v1858 = vpack.c.b16 %v1478, %v1842
      %v1859 = vpack.c.b16 %v1480, %v1843
      %v1860 = vpack.c.b16 %v1482, %v1844
      %v1861 = vpack.c.b16 %v1484, %v1845
      %v1862 = vpack.c.b16 %v1486, %v1846
      %v1863 = vpack.c.b16 %v1488, %v1847
      %v1864 = vpack.c.b16 %v1490, %v1848
      %v1865 = vpack.c.b16 %v1492, %v1849
      %v1866 = vpack.c.b16 %v1494, %v1850
      %v1867 = vpack.c.b16 %v1496, %v1851
      %v1868 = vpack.c.b16 %v1498, %v1852
      %v1869 = vpack.c.b16 %v1500, %v1853
      %v1870 = vpack.c.b16 %v1502, %v1854
      %v1871 = vrot.slane %v1855, 1
      %v1872 = vrot.slane %v1583, 1
      %v1873 = vsel %vm846, %v1871, %v1872
      %v1874 = vrot.slane %v1856, 1
      %v1875 = vrot.slane %v1584, 1
      %v1876 = vsel %vm846, %v1874, %v1875
      %v1877 = vrot.slane %v1857, 1
      %v1878 = vrot.slane %v1585, 1
      %v1879 = vsel %vm846, %v1877, %v1878
      %v1880 = vrot.slane %v1858, 1
      %v1881 = vrot.slane %v1586, 1
      %v1882 = vsel %vm846, %v1880, %v1881
      %v1883 = vrot.slane %v1859, 1
      %v1884 = vrot.slane %v1587, 1
      %v1885 = vsel %vm846, %v1883, %v1884
      %v1886 = vrot.slane %v1860, 1
      %v1887 = vrot.slane %v1588, 1
      %v1888 = vsel %vm846, %v1886, %v1887
      %v1889 = vrot.slane %v1861, 1
      %v1890 = vrot.slane %v1589, 1
      %v1891 = vsel %vm846, %v1889, %v1890
      %v1892 = vrot.slane %v1862, 1
      %v1893 = vrot.slane %v1590, 1
      %v1894 = vsel %vm846, %v1892, %v1893
      %v1895 = vrot.slane %v1863, 1
      %v1896 = vrot.slane %v1591, 1
      %v1897 = vsel %vm846, %v1895, %v1896
      %v1898 = vrot.slane %v1864, 1
      %v1899 = vrot.slane %v1592, 1
      %v1900 = vsel %vm846, %v1898, %v1899
      %v1901 = vrot.slane %v1865, 1
      %v1902 = vrot.slane %v1593, 1
      %v1903 = vsel %vm846, %v1901, %v1902
      %v1904 = vrot.slane %v1866, 1
      %v1905 = vrot.slane %v1594, 1
      %v1906 = vsel %vm846, %v1904, %v1905
      %v1907 = vrot.slane %v1867, 1
      %v1908 = vrot.slane %v1595, 1
      %v1909 = vsel %vm846, %v1907, %v1908
      %v1910 = vrot.slane %v1868, 1
      %v1911 = vrot.slane %v1596, 1
      %v1912 = vsel %vm846, %v1910, %v1911
      %v1913 = vrot.slane %v1869, 1
      %v1914 = vrot.slane %v1597, 1
      %v1915 = vsel %vm846, %v1913, %v1914
      %v1916 = vrot.slane %v1870, 1
      %v1917 = vrot.slane %v1598, 1
      %v1918 = vsel %vm846, %v1916, %v1917
      %1919 = vrot.lane.b32.xlu0 %v1873, 32
      %v1920 = vpop.permute.xlu0 %1919
      %1921 = vrot.lane.b32.xlu0 %v1876, 32
      %v1922 = vpop.permute.xlu0 %1921
      %1923 = vrot.lane.b32.xlu0 %v1879, 32
      %v1924 = vpop.permute.xlu0 %1923
      %1925 = vrot.lane.b32.xlu0 %v1882, 32
      %v1926 = vpop.permute.xlu0 %1925
      %1927 = vrot.lane.b32.xlu0 %v1885, 32
      %v1928 = vpop.permute.xlu0 %1927
      %1929 = vrot.lane.b32.xlu0 %v1888, 32
      %v1930 = vpop.permute.xlu0 %1929
      %1931 = vrot.lane.b32.xlu0 %v1891, 32
      %v1932 = vpop.permute.xlu0 %1931
      %1933 = vrot.lane.b32.xlu0 %v1894, 32
      %v1934 = vpop.permute.xlu0 %1933
      %1935 = vrot.lane.b32.xlu0 %v1897, 32
      %v1936 = vpop.permute.xlu0 %1935
      %1937 = vrot.lane.b32.xlu0 %v1900, 32
      %v1938 = vpop.permute.xlu0 %1937
      %1939 = vrot.lane.b32.xlu0 %v1903, 32
      %v1940 = vpop.permute.xlu0 %1939
      %1941 = vrot.lane.b32.xlu0 %v1906, 32
      %v1942 = vpop.permute.xlu0 %1941
      %1943 = vrot.lane.b32.xlu0 %v1909, 32
      %v1944 = vpop.permute.xlu0 %1943
      %1945 = vrot.lane.b32.xlu0 %v1912, 32
      %v1946 = vpop.permute.xlu0 %1945
      %1947 = vrot.lane.b32.xlu0 %v1915, 32
      %v1948 = vpop.permute.xlu0 %1947
      %1949 = vrot.lane.b32.xlu0 %v1918, 32
      %v1950 = vpop.permute.xlu0 %1949
      %vm1951 = vcmask 31744
      %v1953 = vsel %vm1951, %v509, %v767
      %v1955 = vsel %vm1951, %v510, %v769
      %v1957 = vsel %vm1951, %v511, %v771
      %v1959 = vsel %vm1951, %v512, %v773
      %v1961 = vsel %vm1951, %v513, %v775
      %v1963 = vsel %vm1951, %v514, %v777
      %v1965 = vsel %vm1951, %v515, %v779
      %v1967 = vsel %vm1951, %v516, %v781
      %v1969 = vsel %vm1951, %v517, %v783
      %v1971 = vsel %vm1951, %v518, %v785
      %v1973 = vsel %vm1951, %v519, %v787
      %v1975 = vsel %vm1951, %v520, %v789
      %v1977 = vsel %vm1951, %v521, %v791
      %v1979 = vsel %vm1951, %v522, %v793
      %v1981 = vsel %vm1951, %v523, %v795
      %v1983 = vsel %vm1951, %v524, %v797
      %vm1984 = vcmask 64512
      %v1986 = vsel %vm1984, %v1953, %v896
      %v1988 = vsel %vm1984, %v1955, %v898
      %v1990 = vsel %vm1984, %v1957, %v900
      %v1992 = vsel %vm1984, %v1959, %v902
      %v1994 = vsel %vm1984, %v1961, %v904
      %v1996 = vsel %vm1984, %v1963, %v906
      %v1998 = vsel %vm1984, %v1965, %v908
      %v2000 = vsel %vm1984, %v1967, %v910
      %v2002 = vsel %vm1984, %v1969, %v912
      %v2004 = vsel %vm1984, %v1971, %v914
      %v2006 = vsel %vm1984, %v1973, %v916
      %v2008 = vsel %vm1984, %v1975, %v918
      %v2010 = vsel %vm1984, %v1977, %v920
      %v2012 = vsel %vm1984, %v1979, %v922
      %v2014 = vsel %vm1984, %v1981, %v924
      %v2016 = vsel %vm1984, %v1983, %v926
      %vm2017 = vcmask 97280
      %v2019 = vsel %vm2017, %v1986, %v1008
      %v2021 = vsel %vm2017, %v1988, %v1010
      %v2023 = vsel %vm2017, %v1990, %v1012
      %v2025 = vsel %vm2017, %v1992, %v1014
      %v2027 = vsel %vm2017, %v1994, %v1016
      %v2029 = vsel %vm2017, %v1996, %v1018
      %v2031 = vsel %vm2017, %v1998, %v1020
      %v2033 = vsel %vm2017, %v2000, %v1022
      %v2035 = vsel %vm2017, %v2002, %v1024
      %v2037 = vsel %vm2017, %v2004, %v1026
      %v2039 = vsel %vm2017, %v2006, %v1028
      %v2041 = vsel %vm2017, %v2008, %v1030
      %v2043 = vsel %vm2017, %v2010, %v1032
      %v2045 = vsel %vm2017, %v2012, %v1034
      %v2047 = vsel %vm2017, %v2014, %v1036
      %v2049 = vsel %vm2017, %v2016, %v1038
      %vm2050 = vcmask 130048
      %v2052 = vsel %vm2050, %v2019, %v1280
      %v2054 = vsel %vm2050, %v2021, %v1282
      %v2056 = vsel %vm2050, %v2023, %v1284
      %v2058 = vsel %vm2050, %v2025, %v1286
      %v2060 = vsel %vm2050, %v2027, %v1288
      %v2062 = vsel %vm2050, %v2029, %v1290
      %v2064 = vsel %vm2050, %v2031, %v1292
      %v2066 = vsel %vm2050, %v2033, %v1294
      %v2068 = vsel %vm2050, %v2035, %v1296
      %v2070 = vsel %vm2050, %v2037, %v1298
      %v2072 = vsel %vm2050, %v2039, %v1300
      %v2074 = vsel %vm2050, %v2041, %v1302
      %v2076 = vsel %vm2050, %v2043, %v1304
      %v2078 = vsel %vm2050, %v2045, %v1306
      %v2080 = vsel %vm2050, %v2047, %v1308
      %v2082 = vsel %vm2050, %v2049, %v1310
      %vm2083 = vcmask 162816
      %v2085 = vsel %vm2083, %v2052, %v1408
      %v2087 = vsel %vm2083, %v2054, %v1410
      %v2089 = vsel %vm2083, %v2056, %v1412
      %v2091 = vsel %vm2083, %v2058, %v1414
      %v2093 = vsel %vm2083, %v2060, %v1416
      %v2095 = vsel %vm2083, %v2062, %v1418
      %v2097 = vsel %vm2083, %v2064, %v1420
      %v2099 = vsel %vm2083, %v2066, %v1422
      %v2101 = vsel %vm2083, %v2068, %v1424
      %v2103 = vsel %vm2083, %v2070, %v1426
      %v2105 = vsel %vm2083, %v2072, %v1428
      %v2107 = vsel %vm2083, %v2074, %v1430
      %v2109 = vsel %vm2083, %v2076, %v1432
      %v2111 = vsel %vm2083, %v2078, %v1434
      %v2113 = vsel %vm2083, %v2080, %v1436
      %v2115 = vsel %vm2083, %v2082, %v1438
      %vm2116 = vcmask 195584
      %v2118 = vsel %vm2116, %v2085, %v1520
      %v2120 = vsel %vm2116, %v2087, %v1522
      %v2122 = vsel %vm2116, %v2089, %v1524
      %v2124 = vsel %vm2116, %v2091, %v1526
      %v2126 = vsel %vm2116, %v2093, %v1528
      %v2128 = vsel %vm2116, %v2095, %v1530
      %v2130 = vsel %vm2116, %v2097, %v1532
      %v2132 = vsel %vm2116, %v2099, %v1534
      %v2134 = vsel %vm2116, %v2101, %v1536
      %v2136 = vsel %vm2116, %v2103, %v1538
      %v2138 = vsel %vm2116, %v2105, %v1540
      %v2140 = vsel %vm2116, %v2107, %v1542
      %v2142 = vsel %vm2116, %v2109, %v1544
      %v2144 = vsel %vm2116, %v2111, %v1546
      %v2146 = vsel %vm2116, %v2113, %v1548
      %v2148 = vsel %vm2116, %v2115, %v1550
      %vm2149 = vcmask 228352
      %v2151 = vsel %vm2149, %v2118, %v1792
      %v2153 = vsel %vm2149, %v2120, %v1794
      %v2155 = vsel %vm2149, %v2122, %v1796
      %v2157 = vsel %vm2149, %v2124, %v1798
      %v2159 = vsel %vm2149, %v2126, %v1800
      %v2161 = vsel %vm2149, %v2128, %v1802
      %v2163 = vsel %vm2149, %v2130, %v1804
      %v2165 = vsel %vm2149, %v2132, %v1806
      %v2167 = vsel %vm2149, %v2134, %v1808
      %v2169 = vsel %vm2149, %v2136, %v1810
      %v2171 = vsel %vm2149, %v2138, %v1812
      %v2173 = vsel %vm2149, %v2140, %v1814
      %v2175 = vsel %vm2149, %v2142, %v1816
      %v2177 = vsel %vm2149, %v2144, %v1818
      %v2179 = vsel %vm2149, %v2146, %v1820
      %v2181 = vsel %vm2149, %v2148, %v1822
      %vm2182 = vcmask 261120
      %v2184 = vsel %vm2182, %v2151, %v1920
      %v2186 = vsel %vm2182, %v2153, %v1922
      %v2188 = vsel %vm2182, %v2155, %v1924
      %v2190 = vsel %vm2182, %v2157, %v1926
      %v2192 = vsel %vm2182, %v2159, %v1928
      %v2194 = vsel %vm2182, %v2161, %v1930
      %v2196 = vsel %vm2182, %v2163, %v1932
      %v2198 = vsel %vm2182, %v2165, %v1934
      %v2200 = vsel %vm2182, %v2167, %v1936
      %v2202 = vsel %vm2182, %v2169, %v1938
      %v2204 = vsel %vm2182, %v2171, %v1940
      %v2206 = vsel %vm2182, %v2173, %v1942
      %v2208 = vsel %vm2182, %v2175, %v1944
      %v2210 = vsel %vm2182, %v2177, %v1946
      %v2212 = vsel %vm2182, %v2179, %v1948
      %v2214 = vsel %vm2182, %v2181, %v1950
      %v2215 = vld [vmem:[%s1] sm:$0xf]
      %v2216 = vld [vmem:[%s1 + $0x4] sm:$0xf]
      %v2217 = vld [vmem:[%s1 + $0x8] sm:$0xf]
      %v2218 = vld [vmem:[%s1 + $0xc] sm:$0xf]
      %v2219 = vld [vmem:[%s1 + $0x10] sm:$0x3]
      %v2225 = vunpack.c.l.b16 %v2215
      %v2226 = vunpack.c.l.b16 %v2216
      %v2227 = vunpack.c.l.b16 %v2217
      %v2228 = vunpack.c.l.b16 %v2218
      %v2229 = vunpack.c.l.b16 %v2219
      %v2230 = vpack.c.b16 %v2226, %v2225
      %v2231 = vpack.c.b16 %v2228, %v2227
      %v2232 = vpack.c.b16 %v2229, %v2229
      %vm2235 = vcmask 293888
      %v2236 = vsel %vm2235, %v2184, 0
      %v2238 = vsel %vm2235, %v2186, 0
      %v2240 = vsel %vm2235, %v2188, 0
      %v2242 = vsel %vm2235, %v2190, 0
      %v2244 = vsel %vm2235, %v2192, 0
      %v2246 = vsel %vm2235, %v2194, 0
      %v2248 = vsel %vm2235, %v2196, 0
      %v2250 = vsel %vm2235, %v2198, 0
      %v2252 = vsel %vm2235, %v2200, 0
      %v2254 = vsel %vm2235, %v2202, 0
      %v2256 = vsel %vm2235, %v2204, 0
      %v2258 = vsel %vm2235, %v2206, 0
      %v2260 = vsel %vm2235, %v2208, 0
      %v2262 = vsel %vm2235, %v2210, 0
      %v2264 = vsel %vm2235, %v2212, 0
      %v2266 = vsel %vm2235, %v2214, 0
      %vm2268 = vcmask 1041408
      %v2270 = vsel %vm2268, %v2232, 0
      %2272 = vmatprep.subr.bf16.mxu0 0
      %2273 = vmatpush1.bf16.msra.mxu0 0
      %2274 = vmatprep.subr.bf16.mxu0 0
      %2275 = vmatpush1.bf16.msra.mxu0 0
      %2276 = vmatprep.subr.bf16.mxu0 0
      %2277 = vmatpush1.bf16.msra.mxu0 0
      %2278 = vmatprep.subr.bf16.mxu0 0
      %2279 = vmatpush1.bf16.msra.mxu0 0
      %2280 = vmatprep.subr.bf16.mxu0 0
      %2281 = vmatpush1.bf16.msra.mxu0 0
      %2282 = vmatprep.subr.bf16.mxu0 0
      %2283 = vmatpush1.bf16.msra.mxu0 %v2270
      %2284 = vmatprep.subr.bf16.mxu0 0
      %2285 = vmatpush1.bf16.msra.mxu0 %v2231
      %2286 = vmatprep.subr.bf16.mxu0 0
      %2287 = vmatpush1.bf16.msra.mxu0 %v2230
      %2288 = vmatprep.subr.bf16.mxu0 0
      %2289 = vmatpush2.bf16.msra.mxu0 0
      %2290 = vmatprep.subr.bf16.mxu0 0
      %2291 = vmatpush2.bf16.msra.mxu0 0
      %2292 = vmatprep.subr.bf16.mxu0 0
      %2293 = vmatpush2.bf16.msra.mxu0 0
      %2294 = vmatprep.subr.bf16.mxu0 0
      %2295 = vmatpush2.bf16.msra.mxu0 0
      %2296 = vmatprep.subr.bf16.mxu0 0
      %2297 = vmatpush2.bf16.msra.mxu0 0
      %2298 = vmatprep.subr.bf16.mxu0 0
      %2299 = vmatpush2.bf16.msra.mxu0 0
      %2300 = vmatprep.subr.bf16.mxu0 0
      %2301 = vmatpush2.bf16.msra.mxu0 0
      %2302 = vmatprep.subr.bf16.mxu0 0
      %2303 = vmatpush2.bf16.msra.mxu0 0
      %2304 = vmatprep.mubr.bf16.mxu0 0
      %2305 = vmatmul.mubr.bf16.gmra.mxu0 %v2236
      %v2306 = vpop.f32.mrf.mxu0
      %v2307 = vadd.f32 0.0, %v2306
      %v2308 = vpop.f32.mrf.mxu0
      %v2309 = vpop.f32.mrf.mxu0
      %v2310 = vadd.f32 0.0, %v2309
      %v2311 = vpop.f32.mrf.mxu0
      %2312 = vmatprep.mubr.bf16.mxu0 0
      %2313 = vmatmul.mubr.bf16.gmra.mxu0 %v2238
      %v2314 = vpop.f32.mrf.mxu0
      %v2315 = vadd.f32 0.0, %v2314
      %v2316 = vpop.f32.mrf.mxu0
      %v2317 = vpop.f32.mrf.mxu0
      %v2318 = vadd.f32 0.0, %v2317
      %v2319 = vpop.f32.mrf.mxu0
      %2320 = vmatprep.mubr.bf16.mxu0 0
      %2321 = vmatmul.mubr.bf16.gmra.mxu0 %v2240
      %v2322 = vpop.f32.mrf.mxu0
      %v2323 = vadd.f32 0.0, %v2322
      %v2324 = vpop.f32.mrf.mxu0
      %v2325 = vpop.f32.mrf.mxu0
      %v2326 = vadd.f32 0.0, %v2325
      %v2327 = vpop.f32.mrf.mxu0
      %2328 = vmatprep.mubr.bf16.mxu0 0
      %2329 = vmatmul.mubr.bf16.gmra.mxu0 %v2242
      %v2330 = vpop.f32.mrf.mxu0
      %v2331 = vadd.f32 0.0, %v2330
      %v2332 = vpop.f32.mrf.mxu0
      %v2333 = vpop.f32.mrf.mxu0
      %v2334 = vadd.f32 0.0, %v2333
      %v2335 = vpop.f32.mrf.mxu0
      %2336 = vmatprep.mubr.bf16.mxu0 0
      %2337 = vmatmul.mubr.bf16.gmra.mxu0 %v2244
      %v2338 = vpop.f32.mrf.mxu0
      %v2339 = vadd.f32 0.0, %v2338
      %v2340 = vpop.f32.mrf.mxu0
      %v2341 = vpop.f32.mrf.mxu0
      %v2342 = vadd.f32 0.0, %v2341
      %v2343 = vpop.f32.mrf.mxu0
      %2344 = vmatprep.mubr.bf16.mxu0 0
      %2345 = vmatmul.mubr.bf16.gmra.mxu0 %v2246
      %v2346 = vpop.f32.mrf.mxu0
      %v2347 = vadd.f32 0.0, %v2346
      %v2348 = vpop.f32.mrf.mxu0
      %v2349 = vpop.f32.mrf.mxu0
      %v2350 = vadd.f32 0.0, %v2349
      %v2351 = vpop.f32.mrf.mxu0
      %2352 = vmatprep.mubr.bf16.mxu0 0
      %2353 = vmatmul.mubr.bf16.gmra.mxu0 %v2248
      %v2354 = vpop.f32.mrf.mxu0
      %v2355 = vadd.f32 0.0, %v2354
      %v2356 = vpop.f32.mrf.mxu0
      %v2357 = vpop.f32.mrf.mxu0
      %v2358 = vadd.f32 0.0, %v2357
      %v2359 = vpop.f32.mrf.mxu0
      %2360 = vmatprep.mubr.bf16.mxu0 0
      %2361 = vmatmul.mubr.bf16.gmra.mxu0 %v2250
      %v2362 = vpop.f32.mrf.mxu0
      %v2363 = vadd.f32 0.0, %v2362
      %v2364 = vpop.f32.mrf.mxu0
      %v2365 = vpop.f32.mrf.mxu0
      %v2366 = vadd.f32 0.0, %v2365
      %v2367 = vpop.f32.mrf.mxu0
      %2368 = vmatprep.mubr.bf16.mxu0 0
      %2369 = vmatmul.mubr.bf16.gmra.mxu0 %v2252
      %v2370 = vpop.f32.mrf.mxu0
      %v2371 = vadd.f32 0.0, %v2370
      %v2372 = vpop.f32.mrf.mxu0
      %v2373 = vpop.f32.mrf.mxu0
      %v2374 = vadd.f32 0.0, %v2373
      %v2375 = vpop.f32.mrf.mxu0
      %2376 = vmatprep.mubr.bf16.mxu0 0
      %2377 = vmatmul.mubr.bf16.gmra.mxu0 %v2254
      %v2378 = vpop.f32.mrf.mxu0
      %v2379 = vadd.f32 0.0, %v2378
      %v2380 = vpop.f32.mrf.mxu0
      %v2381 = vpop.f32.mrf.mxu0
      %v2382 = vadd.f32 0.0, %v2381
      %v2383 = vpop.f32.mrf.mxu0
      %2384 = vmatprep.mubr.bf16.mxu0 0
      %2385 = vmatmul.mubr.bf16.gmra.mxu0 %v2256
      %v2386 = vpop.f32.mrf.mxu0
      %v2387 = vadd.f32 0.0, %v2386
      %v2388 = vpop.f32.mrf.mxu0
      %v2389 = vpop.f32.mrf.mxu0
      %v2390 = vadd.f32 0.0, %v2389
      %v2391 = vpop.f32.mrf.mxu0
      %2392 = vmatprep.mubr.bf16.mxu0 0
      %2393 = vmatmul.mubr.bf16.gmra.mxu0 %v2258
      %v2394 = vpop.f32.mrf.mxu0
      %v2395 = vadd.f32 0.0, %v2394
      %v2396 = vpop.f32.mrf.mxu0
      %v2397 = vpop.f32.mrf.mxu0
      %v2398 = vadd.f32 0.0, %v2397
      %v2399 = vpop.f32.mrf.mxu0
      %2400 = vmatprep.mubr.bf16.mxu0 0
      %2401 = vmatmul.mubr.bf16.gmra.mxu0 %v2260
      %v2402 = vpop.f32.mrf.mxu0
      %v2403 = vadd.f32 0.0, %v2402
      %v2404 = vpop.f32.mrf.mxu0
      %v2405 = vpop.f32.mrf.mxu0
      %v2406 = vadd.f32 0.0, %v2405
      %v2407 = vpop.f32.mrf.mxu0
      %2408 = vmatprep.mubr.bf16.mxu0 0
      %2409 = vmatmul.mubr.bf16.gmra.mxu0 %v2262
      %v2410 = vpop.f32.mrf.mxu0
      %v2411 = vadd.f32 0.0, %v2410
      %v2412 = vpop.f32.mrf.mxu0
      %v2413 = vpop.f32.mrf.mxu0
      %v2414 = vadd.f32 0.0, %v2413
      %v2415 = vpop.f32.mrf.mxu0
      %2416 = vmatprep.mubr.bf16.mxu0 0
      %2417 = vmatmul.mubr.bf16.gmra.mxu0 %v2264
      %v2418 = vpop.f32.mrf.mxu0
      %v2419 = vadd.f32 0.0, %v2418
      %v2420 = vpop.f32.mrf.mxu0
      %v2421 = vpop.f32.mrf.mxu0
      %v2422 = vadd.f32 0.0, %v2421
      %v2423 = vpop.f32.mrf.mxu0
      %2424 = vmatprep.mubr.bf16.mxu0 0
      %2425 = vmatmul.mubr.bf16.gmra.mxu0 %v2266
      %v2426 = vpop.f32.mrf.mxu0
      %v2427 = vadd.f32 0.0, %v2426
      %v2428 = vpop.f32.mrf.mxu0
      %v2429 = vpop.f32.mrf.mxu0
      %v2430 = vadd.f32 0.0, %v2429
      %v2431 = vpop.f32.mrf.mxu0
      %2432 = vdwg.mxu0
      %v2433 = vpack.c.bf16 %v2310, %v2307
      %v2434 = vpack.c.bf16 %v2318, %v2315
      %v2435 = vpack.c.bf16 %v2326, %v2323
      %v2436 = vpack.c.bf16 %v2334, %v2331
      %v2437 = vpack.c.bf16 %v2342, %v2339
      %v2438 = vpack.c.bf16 %v2350, %v2347
      %v2439 = vpack.c.bf16 %v2358, %v2355
      %v2440 = vpack.c.bf16 %v2366, %v2363
      %v2441 = vpack.c.bf16 %v2374, %v2371
      %v2442 = vpack.c.bf16 %v2382, %v2379
      %v2443 = vpack.c.bf16 %v2390, %v2387
      %v2444 = vpack.c.bf16 %v2398, %v2395
      %v2445 = vpack.c.bf16 %v2406, %v2403
      %v2446 = vpack.c.bf16 %v2414, %v2411
      %v2447 = vpack.c.bf16 %v2422, %v2419
      %v2448 = vpack.c.bf16 %v2430, %v2427
      %v2465 = vunpack.c.l.b16 %v2433
      %v2466 = vunpack.c.h.b16 %v2433
      %v2467 = vunpack.c.l.b16 %v2434
      %v2468 = vunpack.c.h.b16 %v2434
      %v2469 = vunpack.c.l.b16 %v2435
      %v2470 = vunpack.c.h.b16 %v2435
      %v2471 = vunpack.c.l.b16 %v2436
      %v2472 = vunpack.c.h.b16 %v2436
      %v2473 = vunpack.c.l.b16 %v2437
      %v2474 = vunpack.c.h.b16 %v2437
      %v2475 = vunpack.c.l.b16 %v2438
      %v2476 = vunpack.c.h.b16 %v2438
      %v2477 = vunpack.c.l.b16 %v2439
      %v2478 = vunpack.c.h.b16 %v2439
      %v2479 = vunpack.c.l.b16 %v2440
      %v2480 = vunpack.c.h.b16 %v2440
      %v2481 = vunpack.c.l.b16 %v2441
      %v2482 = vunpack.c.h.b16 %v2441
      %v2483 = vunpack.c.l.b16 %v2442
      %v2484 = vunpack.c.h.b16 %v2442
      %v2485 = vunpack.c.l.b16 %v2443
      %v2486 = vunpack.c.h.b16 %v2443
      %v2487 = vunpack.c.l.b16 %v2444
      %v2488 = vunpack.c.h.b16 %v2444
      %v2489 = vunpack.c.l.b16 %v2445
      %v2490 = vunpack.c.h.b16 %v2445
      %v2491 = vunpack.c.l.b16 %v2446
      %v2492 = vunpack.c.h.b16 %v2446
      %v2493 = vunpack.c.l.b16 %v2447
      %v2494 = vunpack.c.h.b16 %v2447
      %v2495 = vunpack.c.l.b16 %v2448
      %v2496 = vunpack.c.h.b16 %v2448
      %v2497 = vpack.c.b16 %v2465, %v2465
      %v2498 = vpack.c.b16 %v2466, %v2466
      %v2499 = vpack.c.b16 %v2467, %v2467
      %v2500 = vpack.c.b16 %v2468, %v2468
      %v2501 = vpack.c.b16 %v2469, %v2469
      %v2502 = vpack.c.b16 %v2470, %v2470
      %v2503 = vpack.c.b16 %v2471, %v2471
      %v2504 = vpack.c.b16 %v2472, %v2472
      %v2505 = vpack.c.b16 %v2473, %v2473
      %v2506 = vpack.c.b16 %v2474, %v2474
      %v2507 = vpack.c.b16 %v2475, %v2475
      %v2508 = vpack.c.b16 %v2476, %v2476
      %v2509 = vpack.c.b16 %v2477, %v2477
      %v2510 = vpack.c.b16 %v2478, %v2478
      %v2511 = vpack.c.b16 %v2479, %v2479
      %v2512 = vpack.c.b16 %v2480, %v2480
      %v2513 = vpack.c.b16 %v2481, %v2481
      %v2514 = vpack.c.b16 %v2482, %v2482
      %v2515 = vpack.c.b16 %v2483, %v2483
      %v2516 = vpack.c.b16 %v2484, %v2484
      %v2517 = vpack.c.b16 %v2485, %v2485
      %v2518 = vpack.c.b16 %v2486, %v2486
      %v2519 = vpack.c.b16 %v2487, %v2487
      %v2520 = vpack.c.b16 %v2488, %v2488
      %v2521 = vpack.c.b16 %v2489, %v2489
      %v2522 = vpack.c.b16 %v2490, %v2490
      %v2523 = vpack.c.b16 %v2491, %v2491
      %v2524 = vpack.c.b16 %v2492, %v2492
      %v2525 = vpack.c.b16 %v2493, %v2493
      %v2526 = vpack.c.b16 %v2494, %v2494
      %v2527 = vpack.c.b16 %v2495, %v2495
      %v2528 = vpack.c.b16 %v2496, %v2496
      %vm2561 = vcmask 257024
      %2562 = vst.msk [vmem:[%s232] sm:$0xf] %vm2561, %v2497
      %2563 = vst.msk [vmem:[%s232 + $0x4] sm:$0xf] %vm2561, %v2498
      %2564 = vst.msk [vmem:[%s232 + $0x8] sm:$0xf] %vm2561, %v2499
      %2565 = vst.msk [vmem:[%s232 + $0xc] sm:$0xf] %vm2561, %v2500
      %2566 = vst.msk [vmem:[%s232 + $0x10] sm:$0xf] %vm2561, %v2501
      %2567 = vst.msk [vmem:[%s232 + $0x14] sm:$0xf] %vm2561, %v2502
      %2568 = vst.msk [vmem:[%s232 + $0x18] sm:$0xf] %vm2561, %v2503
      %2569 = vst.msk [vmem:[%s232 + $0x1c] sm:$0xf] %vm2561, %v2504
      %2570 = vst.msk [vmem:[%s232 + $0x20] sm:$0xf] %vm2561, %v2505
      %2571 = vst.msk [vmem:[%s232 + $0x24] sm:$0xf] %vm2561, %v2506
      %2572 = vst.msk [vmem:[%s232 + $0x28] sm:$0xf] %vm2561, %v2507
      %2573 = vst.msk [vmem:[%s232 + $0x2c] sm:$0xf] %vm2561, %v2508
      %2574 = vst.msk [vmem:[%s232 + $0x30] sm:$0xf] %vm2561, %v2509
      %2575 = vst.msk [vmem:[%s232 + $0x34] sm:$0xf] %vm2561, %v2510
      %2576 = vst.msk [vmem:[%s232 + $0x38] sm:$0xf] %vm2561, %v2511
      %2577 = vst.msk [vmem:[%s232 + $0x3c] sm:$0xf] %vm2561, %v2512
      %2578 = vst.msk [vmem:[%s232 + $0x40] sm:$0xf] %vm2561, %v2513
      %2579 = vst.msk [vmem:[%s232 + $0x44] sm:$0xf] %vm2561, %v2514
      %2580 = vst.msk [vmem:[%s232 + $0x48] sm:$0xf] %vm2561, %v2515
      %2581 = vst.msk [vmem:[%s232 + $0x4c] sm:$0xf] %vm2561, %v2516
      %2582 = vst.msk [vmem:[%s232 + $0x50] sm:$0xf] %vm2561, %v2517
      %2583 = vst.msk [vmem:[%s232 + $0x54] sm:$0xf] %vm2561, %v2518
      %2584 = vst.msk [vmem:[%s232 + $0x58] sm:$0xf] %vm2561, %v2519
      %2585 = vst.msk [vmem:[%s232 + $0x5c] sm:$0xf] %vm2561, %v2520
      %2586 = vst.msk [vmem:[%s232 + $0x60] sm:$0xf] %vm2561, %v2521
      %2587 = vst.msk [vmem:[%s232 + $0x64] sm:$0xf] %vm2561, %v2522
      %2588 = vst.msk [vmem:[%s232 + $0x68] sm:$0xf] %vm2561, %v2523
      %2589 = vst.msk [vmem:[%s232 + $0x6c] sm:$0xf] %vm2561, %v2524
      %2590 = vst.msk [vmem:[%s232 + $0x70] sm:$0xf] %vm2561, %v2525
      %2591 = vst.msk [vmem:[%s232 + $0x74] sm:$0xf] %vm2561, %v2526
      %2592 = vst.msk [vmem:[%s232 + $0x78] sm:$0xf] %vm2561, %v2527
      %2593 = vst.msk [vmem:[%s232 + $0x7c] sm:$0xf] %vm2561, %v2528
      %p2594 = scmp.eq.s32.totalorder %s21, 0
      // Predicated region
      $region29: #{up_conv_forward.2} parent=27 // pred_check
        %p2595 = pneg %p2594
      $region30: #{up_conv_forward.2} parent=27 // pred_check_branch
        %2597 = sbr.rel (%p2595) target = $region32
      $region31: #{up_conv_forward.2} parent=27 // pred_region
        %vm2598 = vcmask 253952
        %2599 = vst.msk [vmem:[%s236] sm:$0x1] %vm2598, 0.0
        %2600 = vst.msk [vmem:[%s239] sm:$0x1] %vm2598, 0.0
      $region32: #{up_conv_forward.2} parent=27 // pred_fallthru
        _
      %v2601 = vld [vmem:[%s236] sm:$0x1]
      %v2602 = vsel %vm2182, %v2307, 0.0
      %v2603 = vsel %vm2182, %v2310, 0.0
      %v2604 = vadd.f32 %v2602, %v2603
      %v2605 = vsel %vm2182, %v2315, 0.0
      %v2606 = vadd.f32 %v2604, %v2605
      %v2607 = vsel %vm2182, %v2318, 0.0
      %v2608 = vadd.f32 %v2606, %v2607
      %v2609 = vsel %vm2182, %v2323, 0.0
      %v2610 = vadd.f32 %v2608, %v2609
      %v2611 = vsel %vm2182, %v2326, 0.0
      %v2612 = vadd.f32 %v2610, %v2611
      %v2613 = vsel %vm2182, %v2331, 0.0
      %v2614 = vadd.f32 %v2612, %v2613
      %v2615 = vsel %vm2182, %v2334, 0.0
      %v2616 = vadd.f32 %v2614, %v2615
      %v2617 = vsel %vm2182, %v2339, 0.0
      %v2618 = vadd.f32 %v2616, %v2617
      %v2619 = vsel %vm2182, %v2342, 0.0
      %v2620 = vadd.f32 %v2618, %v2619
      %v2621 = vsel %vm2182, %v2347, 0.0
      %v2622 = vadd.f32 %v2620, %v2621
      %v2623 = vsel %vm2182, %v2350, 0.0
      %v2624 = vadd.f32 %v2622, %v2623
      %v2625 = vsel %vm2182, %v2355, 0.0
      %v2626 = vadd.f32 %v2624, %v2625
      %v2627 = vsel %vm2182, %v2358, 0.0
      %v2628 = vadd.f32 %v2626, %v2627
      %v2629 = vsel %vm2182, %v2363, 0.0
      %v2630 = vadd.f32 %v2628, %v2629
      %v2631 = vsel %vm2182, %v2366, 0.0
      %v2632 = vadd.f32 %v2630, %v2631
      %v2633 = vsel %vm2182, %v2371, 0.0
      %v2634 = vadd.f32 %v2632, %v2633
      %v2635 = vsel %vm2182, %v2374, 0.0
      %v2636 = vadd.f32 %v2634, %v2635
      %v2637 = vsel %vm2182, %v2379, 0.0
      %v2638 = vadd.f32 %v2636, %v2637
      %v2639 = vsel %vm2182, %v2382, 0.0
      %v2640 = vadd.f32 %v2638, %v2639
      %v2641 = vsel %vm2182, %v2387, 0.0
      %v2642 = vadd.f32 %v2640, %v2641
      %v2643 = vsel %vm2182, %v2390, 0.0
      %v2644 = vadd.f32 %v2642, %v2643
      %v2645 = vsel %vm2182, %v2395, 0.0
      %v2646 = vadd.f32 %v2644, %v2645
      %v2647 = vsel %vm2182, %v2398, 0.0
      %v2648 = vadd.f32 %v2646, %v2647
      %v2649 = vsel %vm2182, %v2403, 0.0
      %v2650 = vadd.f32 %v2648, %v2649
      %v2651 = vsel %vm2182, %v2406, 0.0
      %v2652 = vadd.f32 %v2650, %v2651
      %v2653 = vsel %vm2182, %v2411, 0.0
      %v2654 = vadd.f32 %v2652, %v2653
      %v2655 = vsel %vm2182, %v2414, 0.0
      %v2656 = vadd.f32 %v2654, %v2655
      %v2657 = vsel %vm2182, %v2419, 0.0
      %v2658 = vadd.f32 %v2656, %v2657
      %v2659 = vsel %vm2182, %v2422, 0.0
      %v2660 = vadd.f32 %v2658, %v2659
      %v2661 = vsel %vm2182, %v2427, 0.0
      %v2662 = vadd.f32 %v2660, %v2661
      %v2663 = vsel %vm2182, %v2430, 0.0
      %v2664 = vadd.f32 %v2662, %v2663
      %v2665 = vrot.slane %v2664, 4
      %v2666 = vadd.f32 %v2664, %v2665
      %v2667 = vrot.slane %v2666, 2
      %v2668 = vadd.f32 %v2666, %v2667
      %v2669 = vrot.slane %v2668, 1
      %v2670 = vadd.f32 %v2668, %v2669
      %v2671 = vadd.f32 %v2601, %v2670
      %vm2672 = vcmask 253952
      %2673 = vst.msk [vmem:[%s236] sm:$0x1] %vm2672, %v2671
      %v2674 = vld [vmem:[%s239] sm:$0x1]
      %v2675 = vmul.f32 %v2307, %v2307
      %v2676 = vmul.f32 %v2310, %v2310
      %v2677 = vmul.f32 %v2315, %v2315
      %v2678 = vmul.f32 %v2318, %v2318
      %v2679 = vmul.f32 %v2323, %v2323
      %v2680 = vmul.f32 %v2326, %v2326
      %v2681 = vmul.f32 %v2331, %v2331
      %v2682 = vmul.f32 %v2334, %v2334
      %v2683 = vmul.f32 %v2339, %v2339
      %v2684 = vmul.f32 %v2342, %v2342
      %v2685 = vmul.f32 %v2347, %v2347
      %v2686 = vmul.f32 %v2350, %v2350
      %v2687 = vmul.f32 %v2355, %v2355
      %v2688 = vmul.f32 %v2358, %v2358
      %v2689 = vmul.f32 %v2363, %v2363
      %v2690 = vmul.f32 %v2366, %v2366
      %v2691 = vmul.f32 %v2371, %v2371
      %v2692 = vmul.f32 %v2374, %v2374
      %v2693 = vmul.f32 %v2379, %v2379
      %v2694 = vmul.f32 %v2382, %v2382
      %v2695 = vmul.f32 %v2387, %v2387
      %v2696 = vmul.f32 %v2390, %v2390
      %v2697 = vmul.f32 %v2395, %v2395
      %v2698 = vmul.f32 %v2398, %v2398
      %v2699 = vmul.f32 %v2403, %v2403
      %v2700 = vmul.f32 %v2406, %v2406
      %v2701 = vmul.f32 %v2411, %v2411
      %v2702 = vmul.f32 %v2414, %v2414
      %v2703 = vmul.f32 %v2419, %v2419
      %v2704 = vmul.f32 %v2422, %v2422
      %v2705 = vmul.f32 %v2427, %v2427
      %v2706 = vmul.f32 %v2430, %v2430
      %v2707 = vsel %vm2182, %v2675, 0.0
      %v2708 = vsel %vm2182, %v2676, 0.0
      %v2709 = vadd.f32 %v2707, %v2708
      %v2710 = vsel %vm2182, %v2677, 0.0
      %v2711 = vadd.f32 %v2709, %v2710
      %v2712 = vsel %vm2182, %v2678, 0.0
      %v2713 = vadd.f32 %v2711, %v2712
      %v2714 = vsel %vm2182, %v2679, 0.0
      %v2715 = vadd.f32 %v2713, %v2714
      %v2716 = vsel %vm2182, %v2680, 0.0
      %v2717 = vadd.f32 %v2715, %v2716
      %v2718 = vsel %vm2182, %v2681, 0.0
      %v2719 = vadd.f32 %v2717, %v2718
      %v2720 = vsel %vm2182, %v2682, 0.0
      %v2721 = vadd.f32 %v2719, %v2720
      %v2722 = vsel %vm2182, %v2683, 0.0
      %v2723 = vadd.f32 %v2721, %v2722
      %v2724 = vsel %vm2182, %v2684, 0.0
      %v2725 = vadd.f32 %v2723, %v2724
      %v2726 = vsel %vm2182, %v2685, 0.0
      %v2727 = vadd.f32 %v2725, %v2726
      %v2728 = vsel %vm2182, %v2686, 0.0
      %v2729 = vadd.f32 %v2727, %v2728
      %v2730 = vsel %vm2182, %v2687, 0.0
      %v2731 = vadd.f32 %v2729, %v2730
      %v2732 = vsel %vm2182, %v2688, 0.0
      %v2733 = vadd.f32 %v2731, %v2732
      %v2734 = vsel %vm2182, %v2689, 0.0
      %v2735 = vadd.f32 %v2733, %v2734
      %v2736 = vsel %vm2182, %v2690, 0.0
      %v2737 = vadd.f32 %v2735, %v2736
      %v2738 = vsel %vm2182, %v2691, 0.0
      %v2739 = vadd.f32 %v2737, %v2738
      %v2740 = vsel %vm2182, %v2692, 0.0
      %v2741 = vadd.f32 %v2739, %v2740
      %v2742 = vsel %vm2182, %v2693, 0.0
      %v2743 = vadd.f32 %v2741, %v2742
      %v2744 = vsel %vm2182, %v2694, 0.0
      %v2745 = vadd.f32 %v2743, %v2744
      %v2746 = vsel %vm2182, %v2695, 0.0
      %v2747 = vadd.f32 %v2745, %v2746
      %v2748 = vsel %vm2182, %v2696, 0.0
      %v2749 = vadd.f32 %v2747, %v2748
      %v2750 = vsel %vm2182, %v2697, 0.0
      %v2751 = vadd.f32 %v2749, %v2750
      %v2752 = vsel %vm2182, %v2698, 0.0
      %v2753 = vadd.f32 %v2751, %v2752
      %v2754 = vsel %vm2182, %v2699, 0.0
      %v2755 = vadd.f32 %v2753, %v2754
      %v2756 = vsel %vm2182, %v2700, 0.0
      %v2757 = vadd.f32 %v2755, %v2756
      %v2758 = vsel %vm2182, %v2701, 0.0
      %v2759 = vadd.f32 %v2757, %v2758
      %v2760 = vsel %vm2182, %v2702, 0.0
      %v2761 = vadd.f32 %v2759, %v2760
      %v2762 = vsel %vm2182, %v2703, 0.0
      %v2763 = vadd.f32 %v2761, %v2762
      %v2764 = vsel %vm2182, %v2704, 0.0
      %v2765 = vadd.f32 %v2763, %v2764
      %v2766 = vsel %vm2182, %v2705, 0.0
      %v2767 = vadd.f32 %v2765, %v2766
      %v2768 = vsel %vm2182, %v2706, 0.0
      %v2769 = vadd.f32 %v2767, %v2768
      %v2770 = vrot.slane %v2769, 4
      %v2771 = vadd.f32 %v2769, %v2770
      %v2772 = vrot.slane %v2771, 2
      %v2773 = vadd.f32 %v2771, %v2772
      %v2774 = vrot.slane %v2773, 1
      %v2775 = vadd.f32 %v2773, %v2774
      %v2776 = vadd.f32 %v2674, %v2775
      %2777 = vst.msk [vmem:[%s239] sm:$0x1] %vm2672, %v2776
      %s2778 = smul.u32 16, %s21
      %p2779 = scmp.lt.s32.totalorder %s20, 1
      %s2780 = scalar_select %p2779, %s20, 1
      %p2781 = scmp.lt.s32.totalorder %s2778, 15
      %s2782 = scalar_select %p2781, %s2778, 15
      %s2783 = smul.addr %s2782, 2
      %s2784 = smul.addr %s2780, 32
      %s2785 = sadd.s32 %s2783, %s2784
      %s2786 = smul.addr %s2785, 4
      %s2787 = scalar_lea.vmem %s2, %s2786
      %p2788 = scmp.lt.s32.totalorder %s20, 1
      %s2789 = scalar_select %p2788, %s20, 1
      %s2790 = scalar_lea.vmem %s3, %s2789
      %p2791 = scmp.lt.s32.totalorder %s20, 1
      %s2792 = scalar_select %p2791, %s20, 1
      %s2793 = scalar_lea.vmem %s4, %s2792
      // Predicated region
      $region33: #{up_conv_forward.2} parent=27 // pred_check
        %p2794 = pneg %p95
      $region34: #{up_conv_forward.2} parent=27 // pred_check_branch
        %2796 = sbr.rel (%p2794) target = $region36
      $region35: #{up_conv_forward.2} parent=27 // pred_region
        %s2797 = smul.u32 16, %s21
      $region36: #{up_conv_forward.2} parent=27 // pred_fallthru
        _
      // Predicated region
      $region37: #{up_conv_forward.2} parent=27 // pred_check
        %p2798 = pneg %p121
      $region38: #{up_conv_forward.2} parent=27 // pred_check_branch
        %2800 = sbr.rel (%p2798) target = $region40
      $region39: #{up_conv_forward.2} parent=27 // pred_region
        _
      $region40: #{up_conv_forward.2} parent=27 // pred_fallthru
        _
      // Predicated region
      $region41: #{up_conv_forward.2} parent=27 // pred_check
        %p2801 = pneg %p147
      $region42: #{up_conv_forward.2} parent=27 // pred_check_branch
        %2803 = sbr.rel (%p2801) target = $region44
      $region43: #{up_conv_forward.2} parent=27 // pred_region
        _
      $region44: #{up_conv_forward.2} parent=27 // pred_fallthru
        _
    $region28: #{up_conv_forward.2} parent=5 // pred_fallthru
      _
    %p2804 = scmp.le.s32.totalorder 2, %s11
    // Predicated region
    $region45: #{up_conv_forward.2} parent=5 // pred_check
      %p2805 = pneg %p2804
    $region46: #{up_conv_forward.2} parent=5 // pred_check_branch
      %2807 = sbr.rel (%p2805) target = $region48
    $region47: #{up_conv_forward.2} parent=5 // pred_region
      %s2808 = ssub.s32 %s11, 2
      // Predicated region
      $region49: #{up_conv_forward.2} parent=47 // pred_check
        %p2809 = pneg %p101
      $region50: #{up_conv_forward.2} parent=47 // pred_check_branch
        %2811 = sbr.rel (%p2809) target = $region52
      $region51: #{up_conv_forward.2} parent=47 // pred_region
        %s2812 = smul.u32 16, %s23
        %p2813 = scmp.lt.s32.totalorder %s22, 1
        %s2814 = scalar_select %p2813, %s22, 1
        %p2815 = scmp.lt.s32.totalorder %s2812, 15
        %s2816 = scalar_select %p2815, %s2812, 15
        %s2817 = smul.addr %s2816, 2
        %s2818 = smul.addr %s2814, 32
        %s2819 = sadd.s32 %s2817, %s2818
        %s2820 = smul.addr %s2819, 4
        %s2821 = scalar_lea.vmem %s2, %s2820
      $region52: #{up_conv_forward.2} parent=47 // pred_fallthru
        _
      // Predicated region
      $region53: #{up_conv_forward.2} parent=47 // pred_check
        %p2822 = pneg %p127
      $region54: #{up_conv_forward.2} parent=47 // pred_check_branch
        %2824 = sbr.rel (%p2822) target = $region56
      $region55: #{up_conv_forward.2} parent=47 // pred_region
        %p2825 = scmp.lt.s32.totalorder %s22, 1
        %s2826 = scalar_select %p2825, %s22, 1
        %s2827 = scalar_lea.vmem %s3, %s2826
      $region56: #{up_conv_forward.2} parent=47 // pred_fallthru
        _
      // Predicated region
      $region57: #{up_conv_forward.2} parent=47 // pred_check
        %p2828 = pneg %p153
      $region58: #{up_conv_forward.2} parent=47 // pred_check_branch
        %2830 = sbr.rel (%p2828) target = $region60
      $region59: #{up_conv_forward.2} parent=47 // pred_region
        %p2831 = scmp.lt.s32.totalorder %s22, 1
        %s2832 = scalar_select %p2831, %s22, 1
        %s2833 = scalar_lea.vmem %s4, %s2832
      $region60: #{up_conv_forward.2} parent=47 // pred_fallthru
        _
    $region48: #{up_conv_forward.2} parent=5 // pred_fallthru
      _
  $region6: #{up_conv_forward.2} parent=0 // loop_footer
    %s15 = sadd.s32 1, %s11
  $region7: #{up_conv_forward.2} parent=0 // loop_footer_branch
    %10 = sbr.rel target = $region3
  $region8: #{up_conv_forward.2} parent=0 // loop_exit
    _

</llo_original>
